<compile_context>
chip_gen: v6e
topology: v6e:2x2x1
jax: 0.10.0
libtpu: 0.0.40
codegen_flags: <defaults>
</compile_context>

<pallas_src>
import functools

import jax
import jax.numpy as jnp
from jax.experimental import pallas as pl
from jax.experimental.pallas import tpu as pltpu


HEAD_N = 128  # merged policy+value head, zero-padded to a full lane width

# (kernel, stride) for the three conv layers of the AtariPPO trunk
_CONV_KS = ((8, 4), (4, 2), (3, 1))


def _conv_out(n, k, s):
    return (n - k) // s + 1


def _trunk_geometry(h, w):
    dims = []
    for k, s in _CONV_KS:
        h, w = _conv_out(h, k, s), _conv_out(w, k, s)
        dims.append((h, w))
    return dims  # [(oh1, ow1), (oh2, ow2), (oh3, ow3)]


# ----------------------------------------------------------------------------
# One-time parameter repacking (PyTorch layout -> kernel layout).
# ----------------------------------------------------------------------------
def prepare_params(raw, input_hw):
    (_, _), (_, _), (oh3, ow3) = _trunk_geometry(*input_hw)

    def hwio(w_oihw):
        # OIHW -> (kh*kw*cin, cout), bf16 for the MXU.
        o, i, kh, kw = w_oihw.shape
        return (jnp.transpose(w_oihw, (2, 3, 1, 0))
                .reshape(kh * kw * i, o).astype(jnp.bfloat16))

    c3 = raw["c3w"].shape[0]
    # PyTorch flattens conv3 output as (c, i3, j3); the kernel produces features
    # in (i3, j3, c) order -> permute fc weight columns once here.
    fcw = raw["fcw"].reshape(-1, c3, oh3, ow3)
    fcw = jnp.transpose(fcw, (2, 3, 1, 0)).reshape(oh3 * ow3 * c3, -1)

    # Merge the tiny policy (6) and value (1) heads into one lane-dense matmul.
    head_w = jnp.concatenate([raw["pw"].T, raw["vw"].T], axis=1)
    head_b = jnp.concatenate([raw["pb"], raw["vb"]])
    head_w = jnp.pad(head_w, ((0, 0), (0, HEAD_N - head_w.shape[1])))
    head_b = jnp.pad(head_b, (0, HEAD_N - head_b.shape[0]))

    return {
        "w1": hwio(raw["c1w"]), "b1": raw["c1b"].reshape(1, -1),
        "w2": hwio(raw["c2w"]), "b2": raw["c2b"].reshape(1, -1),
        "w3": hwio(raw["c3w"]), "b3": raw["c3b"].reshape(1, -1),
        "fcw": fcw.astype(jnp.bfloat16), "fcb": raw["fcb"].reshape(1, -1),
        "hw": head_w.astype(jnp.bfloat16), "hb": head_b.reshape(1, -1),
    }


# ----------------------------------------------------------------------------
# conv1 im2col in the wrapper: one strided slice per kernel offset, fused by
# XLA into a single gather of the (tiny) input frame.  Rows ordered (b, i, j),
# features ordered (kh, kw, c) to match the HWIO-repacked conv1 weight.
# ----------------------------------------------------------------------------
def _extract_patches(x_nchw, k, s):
    b, c, h, w = x_nchw.shape
    oh, ow = _conv_out(h, k, s), _conv_out(w, k, s)
    xt = jnp.transpose(x_nchw, (0, 2, 3, 1))  # NHWC once, on the raw input
    pieces = [xt[:, di:di + (oh - 1) * s + 1:s, dj:dj + (ow - 1) * s + 1:s, :]
              for di in range(k) for dj in range(k)]
    cols = jnp.concatenate(pieces, axis=-1)   # (B, oh, ow, k*k*C)
    return cols.reshape(b * oh * ow, k * k * c)


# ----------------------------------------------------------------------------
# The fused kernel: whole network for one batch block, everything in VMEM.
# ----------------------------------------------------------------------------
def _fused_ppo_kernel(cols_ref, w1_ref, b1_ref, w2_ref, b2_ref, w3_ref, b3_ref,
                      fcw_ref, fcb_ref, hw_ref, hb_ref, out_ref, *,
                      bb, oh1, ow1, k2, s2, oh2, ow2, k3, s3, oh3, ow3):
    def mm(x, w_bf16):                         # bf16 MXU matmul, f32 accumulate
        return jnp.dot(x.astype(jnp.bfloat16), w_bf16,
                       preferred_element_type=jnp.float32)

    # ---- conv1: x/255 fused with the im2col matmul -------------------------
    cols = cols_ref[...] * (1.0 / 255.0)
    a1 = jnp.maximum(mm(cols, w1_ref[...]) + b1_ref[...], 0.0)   # (bb*oh1*ow1, 32)
    a1 = a1.reshape(bb, oh1, ow1, a1.shape[-1])                  # channels-last

    # Pre-slice the per-pixel channel vectors once; reused by all conv2 windows.
    a1v = [[a1[:, i, j, :] for j in range(ow1)] for i in range(oh1)]

    # ---- conv2: in-VMEM patch gather (lane concat) + matmul per position ---
    w2, b2 = w2_ref[...], b2_ref[...]
    y2 = {}
    for i2 in range(oh2):
        for j2 in range(ow2):
            patch = jnp.concatenate(
                [a1v[i2 * s2 + di][j2 * s2 + dj]
                 for di in range(k2) for dj in range(k2)], axis=-1)
            y2[(i2, j2)] = jnp.maximum(mm(patch, w2) + b2, 0.0)  # (bb, 64)

    # ---- conv3 --------------------------------------------------------------
    w3, b3 = w3_ref[...], b3_ref[...]
    y3 = []
    for i3 in range(oh3):
        for j3 in range(ow3):
            patch = jnp.concatenate(
                [y2[(i3 * s3 + di, j3 * s3 + dj)]
                 for di in range(k3) for dj in range(k3)], axis=-1)
            y3.append(jnp.maximum(mm(patch, w3) + b3, 0.0))      # (bb, 32)

    flat = jnp.concatenate(y3, axis=-1)        # (bb, conv_out_dim), (i3,j3,c) order

    # ---- fc + merged policy/value heads ------------------------------------
    h = jnp.maximum(mm(flat, fcw_ref[...]) + fcb_ref[...], 0.0)  # (bb, 512)
    out_ref[...] = (mm(h, hw_ref[...]) + hb_ref[...]).astype(out_ref.dtype)


def _pick_block_b(batch):
    for bb in (32, 16, 8):
        if batch % bb == 0:
            return bb
    return batch


# ----------------------------------------------------------------------------
# Forward wrapper (single pallas_call).
# ----------------------------------------------------------------------------
def atari_ppo_forward(x, p, n_out):
    batch, _, height, width = x.shape
    (oh1, ow1), (oh2, ow2), (oh3, ow3) = _trunk_geometry(height, width)

    cols = _extract_patches(x.astype(jnp.float32), *_CONV_KS[0])
    k1 = cols.shape[1]

    bb = _pick_block_b(batch)
    grid = (batch // bb,)
    rows_blk = bb * oh1 * ow1

    kern = functools.partial(
        _fused_ppo_kernel, bb=bb, oh1=oh1, ow1=ow1,
        k2=_CONV_KS[1][0], s2=_CONV_KS[1][1], oh2=oh2, ow2=ow2,
        k3=_CONV_KS[2][0], s3=_CONV_KS[2][1], oh3=oh3, ow3=ow3)

    args = (cols, p["w1"], p["b1"], p["w2"], p["b2"], p["w3"], p["b3"],
            p["fcw"], p["fcb"], p["hw"], p["hb"])
    in_specs = ([pl.BlockSpec((rows_blk, k1), lambda g: (g, 0))] +
                [pl.BlockSpec(a.shape, lambda g: (0, 0)) for a in args[1:]])
    out_specs = pl.BlockSpec((bb, HEAD_N), lambda g: (g, 0))

    flops = 2 * batch * (
        oh1 * ow1 * k1 * p["w1"].shape[1]
        + oh2 * ow2 * p["w2"].shape[0] * p["w2"].shape[1]
        + oh3 * ow3 * p["w3"].shape[0] * p["w3"].shape[1]
        + p["fcw"].shape[0] * p["fcw"].shape[1]
        + p["hw"].shape[0] * p["hw"].shape[1])
    bytes_accessed = (sum(int(a.size) * a.dtype.itemsize for a in args)
                      + batch * HEAD_N * 4)

    out = pl.pallas_call(
        kern,
        out_shape=jax.ShapeDtypeStruct((batch, HEAD_N), jnp.float32),
        grid=grid,
        in_specs=in_specs,
        out_specs=out_specs,
        # NOTE: VMEM use per step is <2 MiB here; for big batches on v7x raise
        # vmem_limit_bytes and/or shrink the batch block.
        compiler_params=pltpu.CompilerParams(
            dimension_semantics=("parallel",)),
        cost_estimate=pl.CostEstimate(
            flops=flops, transcendentals=0, bytes_accessed=bytes_accessed),
    )(*args)

    return out[:, :n_out], out[:, n_out:n_out + 1]


# ----------------------------------------------------------------------------
# Pure-JAX f32 reference (correctness check only).
# ----------------------------------------------------------------------------
def reference_forward(x, raw):
    x = x.astype(jnp.float32) / 255.0
    dn = ("NCHW", "OIHW", "NCHW")
    x = jax.nn.relu(jax.lax.conv_general_dilated(
        x, raw["c1w"], (4, 4), "VALID", dimension_numbers=dn) +
        raw["c1b"][None, :, None, None])
    x = jax.nn.relu(jax.lax.conv_general_dilated(
        x, raw["c2w"], (2, 2), "VALID", dimension_numbers=dn) +
        raw["c2b"][None, :, None, None])
    x = jax.nn.relu(jax.lax.conv_general_dilated(
        x, raw["c3w"], (1, 1), "VALID", dimension_numbers=dn) +
        raw["c3b"][None, :, None, None])
    flat = x.reshape(x.shape[0], -1)
    h = jax.nn.relu(flat @ raw["fcw"].T + raw["fcb"])
    return h @ raw["pw"].T + raw["pb"], h @ raw["vw"].T + raw["vb"]


def _init(key, shape, fan_in):
    bound = 1.0 / jnp.sqrt(jnp.float32(fan_in))
    return jax.random.uniform(key, shape, jnp.float32, -bound, bound)


if __name__ == "__main__":
    # Small shapes consistent with the module:
    #   36x36 input -> conv1(8,s4): 8x8 -> conv2(4,s2): 3x3 -> conv3(3,s1): 1x1
    #   conv_output_dim = 32 * 1 * 1 = 32
    # NOTE: B=2 leaves the MXU mostly idle by construction; batch more frames
    # per call for real throughput (the batch-block grid already scales).
    B, C, H, W = 2, 4, 36, 36
    n_outputs = 6
    (_, _), (_, _), (oh3, ow3) = _trunk_geometry(H, W)
    conv_out_dim = 32 * oh3 * ow3

    keys = jax.random.split(jax.random.PRNGKey(0), 13)
    raw = {
        "c1w": _init(keys[0], (32, C, 8, 8), C * 8 * 8),
        "c1b": _init(keys[1], (32,), C * 8 * 8),
        "c2w": _init(keys[2], (64, 32, 4, 4), 32 * 4 * 4),
        "c2b": _init(keys[3], (64,), 32 * 4 * 4),
        "c3w": _init(keys[4], (32, 64, 3, 3), 64 * 3 * 3),
        "c3b": _init(keys[5], (32,), 64 * 3 * 3),
        "fcw": _init(keys[6], (512, conv_out_dim), conv_out_dim),
        "fcb": _init(keys[7], (512,), conv_out_dim),
        "pw": _init(keys[8], (n_outputs, 512), 512),
        "pb": _init(keys[9], (n_outputs,), 512),
        "vw": _init(keys[10], (1, 512), 512),
        "vb": _init(keys[11], (1,), 512),
    }
    prepped = prepare_params(raw, (H, W))

    x = jax.random.uniform(keys[12], (B, C, H, W), jnp.float32, 0.0, 255.0)

    fwd = jax.jit(atari_ppo_forward, static_argnames=("n_out",))
    policy, value = fwd(x, prepped, n_out=n_outputs)
    jax.block_until_ready((policy, value))
    assert policy.shape == (B, n_outputs) and value.shape == (B, 1)

    ref_policy, ref_value = reference_forward(x, raw)
    assert jnp.allclose(policy, ref_policy, rtol=2e-2, atol=2e-2), (
        float(jnp.max(jnp.abs(policy - ref_policy))))
    assert jnp.allclose(value, ref_value, rtol=2e-2, atol=2e-2), (
        float(jnp.max(jnp.abs(value - ref_value))))

    # TODO(synk): sample_actions / evaluate_actions / optimizer step (softmax
    # sampling + PPO training machinery) are outside the forward pass and are
    # not implemented as kernels.
    print("KERNEL_OK")
</pallas_src>

<mosaic_0001>
module attributes {stable_mosaic.version = 11 : i64} {
  func.func @_fused_ppo_kernel(%arg0: i32, %arg1: memref<128x256xf32, #tpu.memory_space<vmem>>, %arg2: memref<256x32xbf16, #tpu.memory_space<vmem>>, %arg3: memref<1x32xf32, #tpu.memory_space<vmem>>, %arg4: memref<512x64xbf16, #tpu.memory_space<vmem>>, %arg5: memref<1x64xf32, #tpu.memory_space<vmem>>, %arg6: memref<576x32xbf16, #tpu.memory_space<vmem>>, %arg7: memref<1x32xf32, #tpu.memory_space<vmem>>, %arg8: memref<32x512xbf16, #tpu.memory_space<vmem>>, %arg9: memref<1x512xf32, #tpu.memory_space<vmem>>, %arg10: memref<512x128xbf16, #tpu.memory_space<vmem>>, %arg11: memref<1x128xf32, #tpu.memory_space<vmem>>, %arg12: memref<2x128xf32, #tpu.memory_space<vmem>>) attributes {dimension_semantics = [#tpu.dimension_semantics<parallel>], iteration_bounds = array<i64: 1>, scalar_prefetch = 0 : i64, scratch_operands = 0 : i64, tpu.core_type = #tpu.core_type<tc>, window_params = [{transform_indices = @transform_0, window_bounds = array<i64: 128, 256>}, {pipeline_mode = #tpu.pipeline_mode<synchronous>, transform_indices = @transform_1, window_bounds = array<i64: 256, 32>}, {pipeline_mode = #tpu.pipeline_mode<synchronous>, transform_indices = @transform_2, window_bounds = array<i64: 1, 32>}, {pipeline_mode = #tpu.pipeline_mode<synchronous>, transform_indices = @transform_3, window_bounds = array<i64: 512, 64>}, {pipeline_mode = #tpu.pipeline_mode<synchronous>, transform_indices = @transform_4, window_bounds = array<i64: 1, 64>}, {pipeline_mode = #tpu.pipeline_mode<synchronous>, transform_indices = @transform_5, window_bounds = array<i64: 576, 32>}, {pipeline_mode = #tpu.pipeline_mode<synchronous>, transform_indices = @transform_6, window_bounds = array<i64: 1, 32>}, {pipeline_mode = #tpu.pipeline_mode<synchronous>, transform_indices = @transform_7, window_bounds = array<i64: 32, 512>}, {pipeline_mode = #tpu.pipeline_mode<synchronous>, transform_indices = @transform_8, window_bounds = array<i64: 1, 512>}, {pipeline_mode = #tpu.pipeline_mode<synchronous>, transform_indices = @transform_9, window_bounds = array<i64: 512, 128>}, {pipeline_mode = #tpu.pipeline_mode<synchronous>, transform_indices = @transform_10, window_bounds = array<i64: 1, 128>}, {transform_indices = @transform_11, window_bounds = array<i64: 2, 128>}]} {
    %c0 = arith.constant 0 : index
    %c0_0 = arith.constant 0 : index
    %0 = vector.load %arg1[%c0, %c0_0] : memref<128x256xf32, #tpu.memory_space<vmem>>, vector<128x256xf32>
    %cst = arith.constant 0.00392156886 : f32
    %1 = vector.broadcast %cst : f32 to vector<128x256xf32>
    %2 = arith.mulf %0, %1 : vector<128x256xf32>
    %c0_1 = arith.constant 0 : index
    %c0_2 = arith.constant 0 : index
    %3 = vector.load %arg2[%c0_1, %c0_2] : memref<256x32xbf16, #tpu.memory_space<vmem>>, vector<256x32xbf16>
    %4 = arith.truncf %2 : vector<128x256xf32> to vector<128x256xbf16>
    %cst_3 = arith.constant dense<0.000000e+00> : vector<128x32xf32>
    %5 = tpu.matmul %4, %3, %cst_3 {dimension_numbers = #tpu.dot_dimension_numbers<[1], [0], [0], [1], [0, 0, 1, 1], [], []>} : vector<128x256xbf16>, vector<256x32xbf16>, vector<128x32xf32> -> vector<128x32xf32>
    %c0_4 = arith.constant 0 : index
    %c0_5 = arith.constant 0 : index
    %6 = vector.load %arg3[%c0_4, %c0_5] : memref<1x32xf32, #tpu.memory_space<vmem>>, vector<1x32xf32>
    %7 = vector.broadcast %6 : vector<1x32xf32> to vector<128x32xf32>
    %8 = arith.addf %5, %7 : vector<128x32xf32>
    %cst_6 = arith.constant 0.000000e+00 : f32
    %9 = vector.broadcast %cst_6 : f32 to vector<128x32xf32>
    %10 = arith.maximumf %8, %9 : vector<128x32xf32>
    %11 = vector.shape_cast %10 : vector<128x32xf32> to vector<2x8x8x32xf32>
    %12 = vector.extract_strided_slice %11 {offsets = [0, 0, 0, 0], sizes = [2, 1, 1, 32], strides = [1, 1, 1, 1]} : vector<2x8x8x32xf32> to vector<2x1x1x32xf32>
    %13 = vector.shape_cast %12 : vector<2x1x1x32xf32> to vector<2x32xf32>
    %14 = vector.extract_strided_slice %11 {offsets = [0, 0, 1, 0], sizes = [2, 1, 1, 32], strides = [1, 1, 1, 1]} : vector<2x8x8x32xf32> to vector<2x1x1x32xf32>
    %15 = vector.shape_cast %14 : vector<2x1x1x32xf32> to vector<2x32xf32>
    %16 = vector.extract_strided_slice %11 {offsets = [0, 0, 2, 0], sizes = [2, 1, 1, 32], strides = [1, 1, 1, 1]} : vector<2x8x8x32xf32> to vector<2x1x1x32xf32>
    %17 = vector.shape_cast %16 : vector<2x1x1x32xf32> to vector<2x32xf32>
    %18 = vector.extract_strided_slice %11 {offsets = [0, 0, 3, 0], sizes = [2, 1, 1, 32], strides = [1, 1, 1, 1]} : vector<2x8x8x32xf32> to vector<2x1x1x32xf32>
    %19 = vector.shape_cast %18 : vector<2x1x1x32xf32> to vector<2x32xf32>
    %20 = vector.extract_strided_slice %11 {offsets = [0, 0, 4, 0], sizes = [2, 1, 1, 32], strides = [1, 1, 1, 1]} : vector<2x8x8x32xf32> to vector<2x1x1x32xf32>
    %21 = vector.shape_cast %20 : vector<2x1x1x32xf32> to vector<2x32xf32>
    %22 = vector.extract_strided_slice %11 {offsets = [0, 0, 5, 0], sizes = [2, 1, 1, 32], strides = [1, 1, 1, 1]} : vector<2x8x8x32xf32> to vector<2x1x1x32xf32>
    %23 = vector.shape_cast %22 : vector<2x1x1x32xf32> to vector<2x32xf32>
    %24 = vector.extract_strided_slice %11 {offsets = [0, 0, 6, 0], sizes = [2, 1, 1, 32], strides = [1, 1, 1, 1]} : vector<2x8x8x32xf32> to vector<2x1x1x32xf32>
    %25 = vector.shape_cast %24 : vector<2x1x1x32xf32> to vector<2x32xf32>
    %26 = vector.extract_strided_slice %11 {offsets = [0, 0, 7, 0], sizes = [2, 1, 1, 32], strides = [1, 1, 1, 1]} : vector<2x8x8x32xf32> to vector<2x1x1x32xf32>
    %27 = vector.shape_cast %26 : vector<2x1x1x32xf32> to vector<2x32xf32>
    %28 = vector.extract_strided_slice %11 {offsets = [0, 1, 0, 0], sizes = [2, 1, 1, 32], strides = [1, 1, 1, 1]} : vector<2x8x8x32xf32> to vector<2x1x1x32xf32>
    %29 = vector.shape_cast %28 : vector<2x1x1x32xf32> to vector<2x32xf32>
    %30 = vector.extract_strided_slice %11 {offsets = [0, 1, 1, 0], sizes = [2, 1, 1, 32], strides = [1, 1, 1, 1]} : vector<2x8x8x32xf32> to vector<2x1x1x32xf32>
    %31 = vector.shape_cast %30 : vector<2x1x1x32xf32> to vector<2x32xf32>
    %32 = vector.extract_strided_slice %11 {offsets = [0, 1, 2, 0], sizes = [2, 1, 1, 32], strides = [1, 1, 1, 1]} : vector<2x8x8x32xf32> to vector<2x1x1x32xf32>
    %33 = vector.shape_cast %32 : vector<2x1x1x32xf32> to vector<2x32xf32>
    %34 = vector.extract_strided_slice %11 {offsets = [0, 1, 3, 0], sizes = [2, 1, 1, 32], strides = [1, 1, 1, 1]} : vector<2x8x8x32xf32> to vector<2x1x1x32xf32>
    %35 = vector.shape_cast %34 : vector<2x1x1x32xf32> to vector<2x32xf32>
    %36 = vector.extract_strided_slice %11 {offsets = [0, 1, 4, 0], sizes = [2, 1, 1, 32], strides = [1, 1, 1, 1]} : vector<2x8x8x32xf32> to vector<2x1x1x32xf32>
    %37 = vector.shape_cast %36 : vector<2x1x1x32xf32> to vector<2x32xf32>
    %38 = vector.extract_strided_slice %11 {offsets = [0, 1, 5, 0], sizes = [2, 1, 1, 32], strides = [1, 1, 1, 1]} : vector<2x8x8x32xf32> to vector<2x1x1x32xf32>
    %39 = vector.shape_cast %38 : vector<2x1x1x32xf32> to vector<2x32xf32>
    %40 = vector.extract_strided_slice %11 {offsets = [0, 1, 6, 0], sizes = [2, 1, 1, 32], strides = [1, 1, 1, 1]} : vector<2x8x8x32xf32> to vector<2x1x1x32xf32>
    %41 = vector.shape_cast %40 : vector<2x1x1x32xf32> to vector<2x32xf32>
    %42 = vector.extract_strided_slice %11 {offsets = [0, 1, 7, 0], sizes = [2, 1, 1, 32], strides = [1, 1, 1, 1]} : vector<2x8x8x32xf32> to vector<2x1x1x32xf32>
    %43 = vector.shape_cast %42 : vector<2x1x1x32xf32> to vector<2x32xf32>
    %44 = vector.extract_strided_slice %11 {offsets = [0, 2, 0, 0], sizes = [2, 1, 1, 32], strides = [1, 1, 1, 1]} : vector<2x8x8x32xf32> to vector<2x1x1x32xf32>
    %45 = vector.shape_cast %44 : vector<2x1x1x32xf32> to vector<2x32xf32>
    %46 = vector.extract_strided_slice %11 {offsets = [0, 2, 1, 0], sizes = [2, 1, 1, 32], strides = [1, 1, 1, 1]} : vector<2x8x8x32xf32> to vector<2x1x1x32xf32>
    %47 = vector.shape_cast %46 : vector<2x1x1x32xf32> to vector<2x32xf32>
    %48 = vector.extract_strided_slice %11 {offsets = [0, 2, 2, 0], sizes = [2, 1, 1, 32], strides = [1, 1, 1, 1]} : vector<2x8x8x32xf32> to vector<2x1x1x32xf32>
    %49 = vector.shape_cast %48 : vector<2x1x1x32xf32> to vector<2x32xf32>
    %50 = vector.extract_strided_slice %11 {offsets = [0, 2, 3, 0], sizes = [2, 1, 1, 32], strides = [1, 1, 1, 1]} : vector<2x8x8x32xf32> to vector<2x1x1x32xf32>
    %51 = vector.shape_cast %50 : vector<2x1x1x32xf32> to vector<2x32xf32>
    %52 = vector.extract_strided_slice %11 {offsets = [0, 2, 4, 0], sizes = [2, 1, 1, 32], strides = [1, 1, 1, 1]} : vector<2x8x8x32xf32> to vector<2x1x1x32xf32>
    %53 = vector.shape_cast %52 : vector<2x1x1x32xf32> to vector<2x32xf32>
    %54 = vector.extract_strided_slice %11 {offsets = [0, 2, 5, 0], sizes = [2, 1, 1, 32], strides = [1, 1, 1, 1]} : vector<2x8x8x32xf32> to vector<2x1x1x32xf32>
    %55 = vector.shape_cast %54 : vector<2x1x1x32xf32> to vector<2x32xf32>
    %56 = vector.extract_strided_slice %11 {offsets = [0, 2, 6, 0], sizes = [2, 1, 1, 32], strides = [1, 1, 1, 1]} : vector<2x8x8x32xf32> to vector<2x1x1x32xf32>
    %57 = vector.shape_cast %56 : vector<2x1x1x32xf32> to vector<2x32xf32>
    %58 = vector.extract_strided_slice %11 {offsets = [0, 2, 7, 0], sizes = [2, 1, 1, 32], strides = [1, 1, 1, 1]} : vector<2x8x8x32xf32> to vector<2x1x1x32xf32>
    %59 = vector.shape_cast %58 : vector<2x1x1x32xf32> to vector<2x32xf32>
    %60 = vector.extract_strided_slice %11 {offsets = [0, 3, 0, 0], sizes = [2, 1, 1, 32], strides = [1, 1, 1, 1]} : vector<2x8x8x32xf32> to vector<2x1x1x32xf32>
    %61 = vector.shape_cast %60 : vector<2x1x1x32xf32> to vector<2x32xf32>
    %62 = vector.extract_strided_slice %11 {offsets = [0, 3, 1, 0], sizes = [2, 1, 1, 32], strides = [1, 1, 1, 1]} : vector<2x8x8x32xf32> to vector<2x1x1x32xf32>
    %63 = vector.shape_cast %62 : vector<2x1x1x32xf32> to vector<2x32xf32>
    %64 = vector.extract_strided_slice %11 {offsets = [0, 3, 2, 0], sizes = [2, 1, 1, 32], strides = [1, 1, 1, 1]} : vector<2x8x8x32xf32> to vector<2x1x1x32xf32>
    %65 = vector.shape_cast %64 : vector<2x1x1x32xf32> to vector<2x32xf32>
    %66 = vector.extract_strided_slice %11 {offsets = [0, 3, 3, 0], sizes = [2, 1, 1, 32], strides = [1, 1, 1, 1]} : vector<2x8x8x32xf32> to vector<2x1x1x32xf32>
    %67 = vector.shape_cast %66 : vector<2x1x1x32xf32> to vector<2x32xf32>
    %68 = vector.extract_strided_slice %11 {offsets = [0, 3, 4, 0], sizes = [2, 1, 1, 32], strides = [1, 1, 1, 1]} : vector<2x8x8x32xf32> to vector<2x1x1x32xf32>
    %69 = vector.shape_cast %68 : vector<2x1x1x32xf32> to vector<2x32xf32>
    %70 = vector.extract_strided_slice %11 {offsets = [0, 3, 5, 0], sizes = [2, 1, 1, 32], strides = [1, 1, 1, 1]} : vector<2x8x8x32xf32> to vector<2x1x1x32xf32>
    %71 = vector.shape_cast %70 : vector<2x1x1x32xf32> to vector<2x32xf32>
    %72 = vector.extract_strided_slice %11 {offsets = [0, 3, 6, 0], sizes = [2, 1, 1, 32], strides = [1, 1, 1, 1]} : vector<2x8x8x32xf32> to vector<2x1x1x32xf32>
    %73 = vector.shape_cast %72 : vector<2x1x1x32xf32> to vector<2x32xf32>
    %74 = vector.extract_strided_slice %11 {offsets = [0, 3, 7, 0], sizes = [2, 1, 1, 32], strides = [1, 1, 1, 1]} : vector<2x8x8x32xf32> to vector<2x1x1x32xf32>
    %75 = vector.shape_cast %74 : vector<2x1x1x32xf32> to vector<2x32xf32>
    %76 = vector.extract_strided_slice %11 {offsets = [0, 4, 0, 0], sizes = [2, 1, 1, 32], strides = [1, 1, 1, 1]} : vector<2x8x8x32xf32> to vector<2x1x1x32xf32>
    %77 = vector.shape_cast %76 : vector<2x1x1x32xf32> to vector<2x32xf32>
    %78 = vector.extract_strided_slice %11 {offsets = [0, 4, 1, 0], sizes = [2, 1, 1, 32], strides = [1, 1, 1, 1]} : vector<2x8x8x32xf32> to vector<2x1x1x32xf32>
    %79 = vector.shape_cast %78 : vector<2x1x1x32xf32> to vector<2x32xf32>
    %80 = vector.extract_strided_slice %11 {offsets = [0, 4, 2, 0], sizes = [2, 1, 1, 32], strides = [1, 1, 1, 1]} : vector<2x8x8x32xf32> to vector<2x1x1x32xf32>
    %81 = vector.shape_cast %80 : vector<2x1x1x32xf32> to vector<2x32xf32>
    %82 = vector.extract_strided_slice %11 {offsets = [0, 4, 3, 0], sizes = [2, 1, 1, 32], strides = [1, 1, 1, 1]} : vector<2x8x8x32xf32> to vector<2x1x1x32xf32>
    %83 = vector.shape_cast %82 : vector<2x1x1x32xf32> to vector<2x32xf32>
    %84 = vector.extract_strided_slice %11 {offsets = [0, 4, 4, 0], sizes = [2, 1, 1, 32], strides = [1, 1, 1, 1]} : vector<2x8x8x32xf32> to vector<2x1x1x32xf32>
    %85 = vector.shape_cast %84 : vector<2x1x1x32xf32> to vector<2x32xf32>
    %86 = vector.extract_strided_slice %11 {offsets = [0, 4, 5, 0], sizes = [2, 1, 1, 32], strides = [1, 1, 1, 1]} : vector<2x8x8x32xf32> to vector<2x1x1x32xf32>
    %87 = vector.shape_cast %86 : vector<2x1x1x32xf32> to vector<2x32xf32>
    %88 = vector.extract_strided_slice %11 {offsets = [0, 4, 6, 0], sizes = [2, 1, 1, 32], strides = [1, 1, 1, 1]} : vector<2x8x8x32xf32> to vector<2x1x1x32xf32>
    %89 = vector.shape_cast %88 : vector<2x1x1x32xf32> to vector<2x32xf32>
    %90 = vector.extract_strided_slice %11 {offsets = [0, 4, 7, 0], sizes = [2, 1, 1, 32], strides = [1, 1, 1, 1]} : vector<2x8x8x32xf32> to vector<2x1x1x32xf32>
    %91 = vector.shape_cast %90 : vector<2x1x1x32xf32> to vector<2x32xf32>
    %92 = vector.extract_strided_slice %11 {offsets = [0, 5, 0, 0], sizes = [2, 1, 1, 32], strides = [1, 1, 1, 1]} : vector<2x8x8x32xf32> to vector<2x1x1x32xf32>
    %93 = vector.shape_cast %92 : vector<2x1x1x32xf32> to vector<2x32xf32>
    %94 = vector.extract_strided_slice %11 {offsets = [0, 5, 1, 0], sizes = [2, 1, 1, 32], strides = [1, 1, 1, 1]} : vector<2x8x8x32xf32> to vector<2x1x1x32xf32>
    %95 = vector.shape_cast %94 : vector<2x1x1x32xf32> to vector<2x32xf32>
    %96 = vector.extract_strided_slice %11 {offsets = [0, 5, 2, 0], sizes = [2, 1, 1, 32], strides = [1, 1, 1, 1]} : vector<2x8x8x32xf32> to vector<2x1x1x32xf32>
    %97 = vector.shape_cast %96 : vector<2x1x1x32xf32> to vector<2x32xf32>
    %98 = vector.extract_strided_slice %11 {offsets = [0, 5, 3, 0], sizes = [2, 1, 1, 32], strides = [1, 1, 1, 1]} : vector<2x8x8x32xf32> to vector<2x1x1x32xf32>
    %99 = vector.shape_cast %98 : vector<2x1x1x32xf32> to vector<2x32xf32>
    %100 = vector.extract_strided_slice %11 {offsets = [0, 5, 4, 0], sizes = [2, 1, 1, 32], strides = [1, 1, 1, 1]} : vector<2x8x8x32xf32> to vector<2x1x1x32xf32>
    %101 = vector.shape_cast %100 : vector<2x1x1x32xf32> to vector<2x32xf32>
    %102 = vector.extract_strided_slice %11 {offsets = [0, 5, 5, 0], sizes = [2, 1, 1, 32], strides = [1, 1, 1, 1]} : vector<2x8x8x32xf32> to vector<2x1x1x32xf32>
    %103 = vector.shape_cast %102 : vector<2x1x1x32xf32> to vector<2x32xf32>
    %104 = vector.extract_strided_slice %11 {offsets = [0, 5, 6, 0], sizes = [2, 1, 1, 32], strides = [1, 1, 1, 1]} : vector<2x8x8x32xf32> to vector<2x1x1x32xf32>
    %105 = vector.shape_cast %104 : vector<2x1x1x32xf32> to vector<2x32xf32>
    %106 = vector.extract_strided_slice %11 {offsets = [0, 5, 7, 0], sizes = [2, 1, 1, 32], strides = [1, 1, 1, 1]} : vector<2x8x8x32xf32> to vector<2x1x1x32xf32>
    %107 = vector.shape_cast %106 : vector<2x1x1x32xf32> to vector<2x32xf32>
    %108 = vector.extract_strided_slice %11 {offsets = [0, 6, 0, 0], sizes = [2, 1, 1, 32], strides = [1, 1, 1, 1]} : vector<2x8x8x32xf32> to vector<2x1x1x32xf32>
    %109 = vector.shape_cast %108 : vector<2x1x1x32xf32> to vector<2x32xf32>
    %110 = vector.extract_strided_slice %11 {offsets = [0, 6, 1, 0], sizes = [2, 1, 1, 32], strides = [1, 1, 1, 1]} : vector<2x8x8x32xf32> to vector<2x1x1x32xf32>
    %111 = vector.shape_cast %110 : vector<2x1x1x32xf32> to vector<2x32xf32>
    %112 = vector.extract_strided_slice %11 {offsets = [0, 6, 2, 0], sizes = [2, 1, 1, 32], strides = [1, 1, 1, 1]} : vector<2x8x8x32xf32> to vector<2x1x1x32xf32>
    %113 = vector.shape_cast %112 : vector<2x1x1x32xf32> to vector<2x32xf32>
    %114 = vector.extract_strided_slice %11 {offsets = [0, 6, 3, 0], sizes = [2, 1, 1, 32], strides = [1, 1, 1, 1]} : vector<2x8x8x32xf32> to vector<2x1x1x32xf32>
    %115 = vector.shape_cast %114 : vector<2x1x1x32xf32> to vector<2x32xf32>
    %116 = vector.extract_strided_slice %11 {offsets = [0, 6, 4, 0], sizes = [2, 1, 1, 32], strides = [1, 1, 1, 1]} : vector<2x8x8x32xf32> to vector<2x1x1x32xf32>
    %117 = vector.shape_cast %116 : vector<2x1x1x32xf32> to vector<2x32xf32>
    %118 = vector.extract_strided_slice %11 {offsets = [0, 6, 5, 0], sizes = [2, 1, 1, 32], strides = [1, 1, 1, 1]} : vector<2x8x8x32xf32> to vector<2x1x1x32xf32>
    %119 = vector.shape_cast %118 : vector<2x1x1x32xf32> to vector<2x32xf32>
    %120 = vector.extract_strided_slice %11 {offsets = [0, 6, 6, 0], sizes = [2, 1, 1, 32], strides = [1, 1, 1, 1]} : vector<2x8x8x32xf32> to vector<2x1x1x32xf32>
    %121 = vector.shape_cast %120 : vector<2x1x1x32xf32> to vector<2x32xf32>
    %122 = vector.extract_strided_slice %11 {offsets = [0, 6, 7, 0], sizes = [2, 1, 1, 32], strides = [1, 1, 1, 1]} : vector<2x8x8x32xf32> to vector<2x1x1x32xf32>
    %123 = vector.shape_cast %122 : vector<2x1x1x32xf32> to vector<2x32xf32>
    %124 = vector.extract_strided_slice %11 {offsets = [0, 7, 0, 0], sizes = [2, 1, 1, 32], strides = [1, 1, 1, 1]} : vector<2x8x8x32xf32> to vector<2x1x1x32xf32>
    %125 = vector.shape_cast %124 : vector<2x1x1x32xf32> to vector<2x32xf32>
    %126 = vector.extract_strided_slice %11 {offsets = [0, 7, 1, 0], sizes = [2, 1, 1, 32], strides = [1, 1, 1, 1]} : vector<2x8x8x32xf32> to vector<2x1x1x32xf32>
    %127 = vector.shape_cast %126 : vector<2x1x1x32xf32> to vector<2x32xf32>
    %128 = vector.extract_strided_slice %11 {offsets = [0, 7, 2, 0], sizes = [2, 1, 1, 32], strides = [1, 1, 1, 1]} : vector<2x8x8x32xf32> to vector<2x1x1x32xf32>
    %129 = vector.shape_cast %128 : vector<2x1x1x32xf32> to vector<2x32xf32>
    %130 = vector.extract_strided_slice %11 {offsets = [0, 7, 3, 0], sizes = [2, 1, 1, 32], strides = [1, 1, 1, 1]} : vector<2x8x8x32xf32> to vector<2x1x1x32xf32>
    %131 = vector.shape_cast %130 : vector<2x1x1x32xf32> to vector<2x32xf32>
    %132 = vector.extract_strided_slice %11 {offsets = [0, 7, 4, 0], sizes = [2, 1, 1, 32], strides = [1, 1, 1, 1]} : vector<2x8x8x32xf32> to vector<2x1x1x32xf32>
    %133 = vector.shape_cast %132 : vector<2x1x1x32xf32> to vector<2x32xf32>
    %134 = vector.extract_strided_slice %11 {offsets = [0, 7, 5, 0], sizes = [2, 1, 1, 32], strides = [1, 1, 1, 1]} : vector<2x8x8x32xf32> to vector<2x1x1x32xf32>
    %135 = vector.shape_cast %134 : vector<2x1x1x32xf32> to vector<2x32xf32>
    %136 = vector.extract_strided_slice %11 {offsets = [0, 7, 6, 0], sizes = [2, 1, 1, 32], strides = [1, 1, 1, 1]} : vector<2x8x8x32xf32> to vector<2x1x1x32xf32>
    %137 = vector.shape_cast %136 : vector<2x1x1x32xf32> to vector<2x32xf32>
    %138 = vector.extract_strided_slice %11 {offsets = [0, 7, 7, 0], sizes = [2, 1, 1, 32], strides = [1, 1, 1, 1]} : vector<2x8x8x32xf32> to vector<2x1x1x32xf32>
    %139 = vector.shape_cast %138 : vector<2x1x1x32xf32> to vector<2x32xf32>
    %c0_7 = arith.constant 0 : index
    %c0_8 = arith.constant 0 : index
    %140 = vector.load %arg4[%c0_7, %c0_8] : memref<512x64xbf16, #tpu.memory_space<vmem>>, vector<512x64xbf16>
    %c0_9 = arith.constant 0 : index
    %c0_10 = arith.constant 0 : index
    %141 = vector.load %arg5[%c0_9, %c0_10] : memref<1x64xf32, #tpu.memory_space<vmem>>, vector<1x64xf32>
    %142 = tpu.concatenate %13, %15, %17, %19, %29, %31, %33, %35, %45, %47, %49, %51, %61, %63, %65, %67 in 1 : vector<2x32xf32>, vector<2x32xf32>, vector<2x32xf32>, vector<2x32xf32>, vector<2x32xf32>, vector<2x32xf32>, vector<2x32xf32>, vector<2x32xf32>, vector<2x32xf32>, vector<2x32xf32>, vector<2x32xf32>, vector<2x32xf32>, vector<2x32xf32>, vector<2x32xf32>, vector<2x32xf32>, vector<2x32xf32> -> vector<2x512xf32>
    %143 = arith.truncf %142 : vector<2x512xf32> to vector<2x512xbf16>
    %cst_11 = arith.constant dense<0.000000e+00> : vector<2x64xf32>
    %144 = tpu.matmul %143, %140, %cst_11 {dimension_numbers = #tpu.dot_dimension_numbers<[1], [0], [0], [1], [0, 0, 1, 1], [], []>} : vector<2x512xbf16>, vector<512x64xbf16>, vector<2x64xf32> -> vector<2x64xf32>
    %145 = vector.broadcast %141 : vector<1x64xf32> to vector<2x64xf32>
    %146 = arith.addf %144, %145 : vector<2x64xf32>
    %cst_12 = arith.constant 0.000000e+00 : f32
    %147 = vector.broadcast %cst_12 : f32 to vector<2x64xf32>
    %148 = arith.maximumf %146, %147 : vector<2x64xf32>
    %149 = tpu.concatenate %17, %19, %21, %23, %33, %35, %37, %39, %49, %51, %53, %55, %65, %67, %69, %71 in 1 : vector<2x32xf32>, vector<2x32xf32>, vector<2x32xf32>, vector<2x32xf32>, vector<2x32xf32>, vector<2x32xf32>, vector<2x32xf32>, vector<2x32xf32>, vector<2x32xf32>, vector<2x32xf32>, vector<2x32xf32>, vector<2x32xf32>, vector<2x32xf32>, vector<2x32xf32>, vector<2x32xf32>, vector<2x32xf32> -> vector<2x512xf32>
    %150 = arith.truncf %149 : vector<2x512xf32> to vector<2x512xbf16>
    %cst_13 = arith.constant dense<0.000000e+00> : vector<2x64xf32>
    %151 = tpu.matmul %150, %140, %cst_13 {dimension_numbers = #tpu.dot_dimension_numbers<[1], [0], [0], [1], [0, 0, 1, 1], [], []>} : vector<2x512xbf16>, vector<512x64xbf16>, vector<2x64xf32> -> vector<2x64xf32>
    %152 = vector.broadcast %141 : vector<1x64xf32> to vector<2x64xf32>
    %153 = arith.addf %151, %152 : vector<2x64xf32>
    %cst_14 = arith.constant 0.000000e+00 : f32
    %154 = vector.broadcast %cst_14 : f32 to vector<2x64xf32>
    %155 = arith.maximumf %153, %154 : vector<2x64xf32>
    %156 = tpu.concatenate %21, %23, %25, %27, %37, %39, %41, %43, %53, %55, %57, %59, %69, %71, %73, %75 in 1 : vector<2x32xf32>, vector<2x32xf32>, vector<2x32xf32>, vector<2x32xf32>, vector<2x32xf32>, vector<2x32xf32>, vector<2x32xf32>, vector<2x32xf32>, vector<2x32xf32>, vector<2x32xf32>, vector<2x32xf32>, vector<2x32xf32>, vector<2x32xf32>, vector<2x32xf32>, vector<2x32xf32>, vector<2x32xf32> -> vector<2x512xf32>
    %157 = arith.truncf %156 : vector<2x512xf32> to vector<2x512xbf16>
    %cst_15 = arith.constant dense<0.000000e+00> : vector<2x64xf32>
    %158 = tpu.matmul %157, %140, %cst_15 {dimension_numbers = #tpu.dot_dimension_numbers<[1], [0], [0], [1], [0, 0, 1, 1], [], []>} : vector<2x512xbf16>, vector<512x64xbf16>, vector<2x64xf32> -> vector<2x64xf32>
    %159 = vector.broadcast %141 : vector<1x64xf32> to vector<2x64xf32>
    %160 = arith.addf %158, %159 : vector<2x64xf32>
    %cst_16 = arith.constant 0.000000e+00 : f32
    %161 = vector.broadcast %cst_16 : f32 to vector<2x64xf32>
    %162 = arith.maximumf %160, %161 : vector<2x64xf32>
    %163 = tpu.concatenate %45, %47, %49, %51, %61, %63, %65, %67, %77, %79, %81, %83, %93, %95, %97, %99 in 1 : vector<2x32xf32>, vector<2x32xf32>, vector<2x32xf32>, vector<2x32xf32>, vector<2x32xf32>, vector<2x32xf32>, vector<2x32xf32>, vector<2x32xf32>, vector<2x32xf32>, vector<2x32xf32>, vector<2x32xf32>, vector<2x32xf32>, vector<2x32xf32>, vector<2x32xf32>, vector<2x32xf32>, vector<2x32xf32> -> vector<2x512xf32>
    %164 = arith.truncf %163 : vector<2x512xf32> to vector<2x512xbf16>
    %cst_17 = arith.constant dense<0.000000e+00> : vector<2x64xf32>
    %165 = tpu.matmul %164, %140, %cst_17 {dimension_numbers = #tpu.dot_dimension_numbers<[1], [0], [0], [1], [0, 0, 1, 1], [], []>} : vector<2x512xbf16>, vector<512x64xbf16>, vector<2x64xf32> -> vector<2x64xf32>
    %166 = vector.broadcast %141 : vector<1x64xf32> to vector<2x64xf32>
    %167 = arith.addf %165, %166 : vector<2x64xf32>
    %cst_18 = arith.constant 0.000000e+00 : f32
    %168 = vector.broadcast %cst_18 : f32 to vector<2x64xf32>
    %169 = arith.maximumf %167, %168 : vector<2x64xf32>
    %170 = tpu.concatenate %49, %51, %53, %55, %65, %67, %69, %71, %81, %83, %85, %87, %97, %99, %101, %103 in 1 : vector<2x32xf32>, vector<2x32xf32>, vector<2x32xf32>, vector<2x32xf32>, vector<2x32xf32>, vector<2x32xf32>, vector<2x32xf32>, vector<2x32xf32>, vector<2x32xf32>, vector<2x32xf32>, vector<2x32xf32>, vector<2x32xf32>, vector<2x32xf32>, vector<2x32xf32>, vector<2x32xf32>, vector<2x32xf32> -> vector<2x512xf32>
    %171 = arith.truncf %170 : vector<2x512xf32> to vector<2x512xbf16>
    %cst_19 = arith.constant dense<0.000000e+00> : vector<2x64xf32>
    %172 = tpu.matmul %171, %140, %cst_19 {dimension_numbers = #tpu.dot_dimension_numbers<[1], [0], [0], [1], [0, 0, 1, 1], [], []>} : vector<2x512xbf16>, vector<512x64xbf16>, vector<2x64xf32> -> vector<2x64xf32>
    %173 = vector.broadcast %141 : vector<1x64xf32> to vector<2x64xf32>
    %174 = arith.addf %172, %173 : vector<2x64xf32>
    %cst_20 = arith.constant 0.000000e+00 : f32
    %175 = vector.broadcast %cst_20 : f32 to vector<2x64xf32>
    %176 = arith.maximumf %174, %175 : vector<2x64xf32>
    %177 = tpu.concatenate %53, %55, %57, %59, %69, %71, %73, %75, %85, %87, %89, %91, %101, %103, %105, %107 in 1 : vector<2x32xf32>, vector<2x32xf32>, vector<2x32xf32>, vector<2x32xf32>, vector<2x32xf32>, vector<2x32xf32>, vector<2x32xf32>, vector<2x32xf32>, vector<2x32xf32>, vector<2x32xf32>, vector<2x32xf32>, vector<2x32xf32>, vector<2x32xf32>, vector<2x32xf32>, vector<2x32xf32>, vector<2x32xf32> -> vector<2x512xf32>
    %178 = arith.truncf %177 : vector<2x512xf32> to vector<2x512xbf16>
    %cst_21 = arith.constant dense<0.000000e+00> : vector<2x64xf32>
    %179 = tpu.matmul %178, %140, %cst_21 {dimension_numbers = #tpu.dot_dimension_numbers<[1], [0], [0], [1], [0, 0, 1, 1], [], []>} : vector<2x512xbf16>, vector<512x64xbf16>, vector<2x64xf32> -> vector<2x64xf32>
    %180 = vector.broadcast %141 : vector<1x64xf32> to vector<2x64xf32>
    %181 = arith.addf %179, %180 : vector<2x64xf32>
    %cst_22 = arith.constant 0.000000e+00 : f32
    %182 = vector.broadcast %cst_22 : f32 to vector<2x64xf32>
    %183 = arith.maximumf %181, %182 : vector<2x64xf32>
    %184 = tpu.concatenate %77, %79, %81, %83, %93, %95, %97, %99, %109, %111, %113, %115, %125, %127, %129, %131 in 1 : vector<2x32xf32>, vector<2x32xf32>, vector<2x32xf32>, vector<2x32xf32>, vector<2x32xf32>, vector<2x32xf32>, vector<2x32xf32>, vector<2x32xf32>, vector<2x32xf32>, vector<2x32xf32>, vector<2x32xf32>, vector<2x32xf32>, vector<2x32xf32>, vector<2x32xf32>, vector<2x32xf32>, vector<2x32xf32> -> vector<2x512xf32>
    %185 = arith.truncf %184 : vector<2x512xf32> to vector<2x512xbf16>
    %cst_23 = arith.constant dense<0.000000e+00> : vector<2x64xf32>
    %186 = tpu.matmul %185, %140, %cst_23 {dimension_numbers = #tpu.dot_dimension_numbers<[1], [0], [0], [1], [0, 0, 1, 1], [], []>} : vector<2x512xbf16>, vector<512x64xbf16>, vector<2x64xf32> -> vector<2x64xf32>
    %187 = vector.broadcast %141 : vector<1x64xf32> to vector<2x64xf32>
    %188 = arith.addf %186, %187 : vector<2x64xf32>
    %cst_24 = arith.constant 0.000000e+00 : f32
    %189 = vector.broadcast %cst_24 : f32 to vector<2x64xf32>
    %190 = arith.maximumf %188, %189 : vector<2x64xf32>
    %191 = tpu.concatenate %81, %83, %85, %87, %97, %99, %101, %103, %113, %115, %117, %119, %129, %131, %133, %135 in 1 : vector<2x32xf32>, vector<2x32xf32>, vector<2x32xf32>, vector<2x32xf32>, vector<2x32xf32>, vector<2x32xf32>, vector<2x32xf32>, vector<2x32xf32>, vector<2x32xf32>, vector<2x32xf32>, vector<2x32xf32>, vector<2x32xf32>, vector<2x32xf32>, vector<2x32xf32>, vector<2x32xf32>, vector<2x32xf32> -> vector<2x512xf32>
    %192 = arith.truncf %191 : vector<2x512xf32> to vector<2x512xbf16>
    %cst_25 = arith.constant dense<0.000000e+00> : vector<2x64xf32>
    %193 = tpu.matmul %192, %140, %cst_25 {dimension_numbers = #tpu.dot_dimension_numbers<[1], [0], [0], [1], [0, 0, 1, 1], [], []>} : vector<2x512xbf16>, vector<512x64xbf16>, vector<2x64xf32> -> vector<2x64xf32>
    %194 = vector.broadcast %141 : vector<1x64xf32> to vector<2x64xf32>
    %195 = arith.addf %193, %194 : vector<2x64xf32>
    %cst_26 = arith.constant 0.000000e+00 : f32
    %196 = vector.broadcast %cst_26 : f32 to vector<2x64xf32>
    %197 = arith.maximumf %195, %196 : vector<2x64xf32>
    %198 = tpu.concatenate %85, %87, %89, %91, %101, %103, %105, %107, %117, %119, %121, %123, %133, %135, %137, %139 in 1 : vector<2x32xf32>, vector<2x32xf32>, vector<2x32xf32>, vector<2x32xf32>, vector<2x32xf32>, vector<2x32xf32>, vector<2x32xf32>, vector<2x32xf32>, vector<2x32xf32>, vector<2x32xf32>, vector<2x32xf32>, vector<2x32xf32>, vector<2x32xf32>, vector<2x32xf32>, vector<2x32xf32>, vector<2x32xf32> -> vector<2x512xf32>
    %199 = arith.truncf %198 : vector<2x512xf32> to vector<2x512xbf16>
    %cst_27 = arith.constant dense<0.000000e+00> : vector<2x64xf32>
    %200 = tpu.matmul %199, %140, %cst_27 {dimension_numbers = #tpu.dot_dimension_numbers<[1], [0], [0], [1], [0, 0, 1, 1], [], []>} : vector<2x512xbf16>, vector<512x64xbf16>, vector<2x64xf32> -> vector<2x64xf32>
    %201 = vector.broadcast %141 : vector<1x64xf32> to vector<2x64xf32>
    %202 = arith.addf %200, %201 : vector<2x64xf32>
    %cst_28 = arith.constant 0.000000e+00 : f32
    %203 = vector.broadcast %cst_28 : f32 to vector<2x64xf32>
    %204 = arith.maximumf %202, %203 : vector<2x64xf32>
    %c0_29 = arith.constant 0 : index
    %c0_30 = arith.constant 0 : index
    %205 = vector.load %arg6[%c0_29, %c0_30] : memref<576x32xbf16, #tpu.memory_space<vmem>>, vector<576x32xbf16>
    %c0_31 = arith.constant 0 : index
    %c0_32 = arith.constant 0 : index
    %206 = vector.load %arg7[%c0_31, %c0_32] : memref<1x32xf32, #tpu.memory_space<vmem>>, vector<1x32xf32>
    %207 = tpu.concatenate %148, %155, %162, %169, %176, %183, %190, %197, %204 in 1 : vector<2x64xf32>, vector<2x64xf32>, vector<2x64xf32>, vector<2x64xf32>, vector<2x64xf32>, vector<2x64xf32>, vector<2x64xf32>, vector<2x64xf32>, vector<2x64xf32> -> vector<2x576xf32>
    %208 = arith.truncf %207 : vector<2x576xf32> to vector<2x576xbf16>
    %cst_33 = arith.constant dense<0.000000e+00> : vector<2x32xf32>
    %209 = tpu.matmul %208, %205, %cst_33 {dimension_numbers = #tpu.dot_dimension_numbers<[1], [0], [0], [1], [0, 0, 1, 1], [], []>} : vector<2x576xbf16>, vector<576x32xbf16>, vector<2x32xf32> -> vector<2x32xf32>
    %210 = vector.broadcast %206 : vector<1x32xf32> to vector<2x32xf32>
    %211 = arith.addf %209, %210 : vector<2x32xf32>
    %cst_34 = arith.constant 0.000000e+00 : f32
    %212 = vector.broadcast %cst_34 : f32 to vector<2x32xf32>
    %213 = arith.maximumf %211, %212 : vector<2x32xf32>
    %c0_35 = arith.constant 0 : index
    %c0_36 = arith.constant 0 : index
    %214 = vector.load %arg8[%c0_35, %c0_36] : memref<32x512xbf16, #tpu.memory_space<vmem>>, vector<32x512xbf16>
    %215 = arith.truncf %213 : vector<2x32xf32> to vector<2x32xbf16>
    %cst_37 = arith.constant dense<0.000000e+00> : vector<2x512xf32>
    %216 = tpu.matmul %215, %214, %cst_37 {dimension_numbers = #tpu.dot_dimension_numbers<[1], [0], [0], [1], [0, 0, 1, 1], [], []>} : vector<2x32xbf16>, vector<32x512xbf16>, vector<2x512xf32> -> vector<2x512xf32>
    %c0_38 = arith.constant 0 : index
    %c0_39 = arith.constant 0 : index
    %217 = vector.load %arg9[%c0_38, %c0_39] : memref<1x512xf32, #tpu.memory_space<vmem>>, vector<1x512xf32>
    %218 = vector.broadcast %217 : vector<1x512xf32> to vector<2x512xf32>
    %219 = arith.addf %216, %218 : vector<2x512xf32>
    %cst_40 = arith.constant 0.000000e+00 : f32
    %220 = vector.broadcast %cst_40 : f32 to vector<2x512xf32>
    %221 = arith.maximumf %219, %220 : vector<2x512xf32>
    %c0_41 = arith.constant 0 : index
    %c0_42 = arith.constant 0 : index
    %222 = vector.load %arg10[%c0_41, %c0_42] : memref<512x128xbf16, #tpu.memory_space<vmem>>, vector<512x128xbf16>
    %223 = arith.truncf %221 : vector<2x512xf32> to vector<2x512xbf16>
    %cst_43 = arith.constant dense<0.000000e+00> : vector<2x128xf32>
    %224 = tpu.matmul %223, %222, %cst_43 {dimension_numbers = #tpu.dot_dimension_numbers<[1], [0], [0], [1], [0, 0, 1, 1], [], []>} : vector<2x512xbf16>, vector<512x128xbf16>, vector<2x128xf32> -> vector<2x128xf32>
    %c0_44 = arith.constant 0 : index
    %c0_45 = arith.constant 0 : index
    %225 = vector.load %arg11[%c0_44, %c0_45] : memref<1x128xf32, #tpu.memory_space<vmem>>, vector<1x128xf32>
    %226 = vector.broadcast %225 : vector<1x128xf32> to vector<2x128xf32>
    %227 = arith.addf %224, %226 : vector<2x128xf32>
    %c0_46 = arith.constant 0 : index
    %c0_47 = arith.constant 0 : index
    %228 = vector.load %arg12[%c0_46, %c0_47] : memref<2x128xf32, #tpu.memory_space<vmem>>, vector<2x128xf32>
    tpu.vector_store %arg12[%c0_46, %c0_47], %227 {strides = array<i32>} : memref<2x128xf32, #tpu.memory_space<vmem>>, vector<2x128xf32>,
    return
  }
  func.func @transform_0(%arg0: i32) -> (i32, i32) {
    %c0_i32 = arith.constant 0 : i32
    %c0_i32_0 = arith.constant 0 : i32
    return %arg0, %c0_i32 : i32, i32
  }
  func.func @transform_1(%arg0: i32) -> (i32, i32) {
    %c0_i32 = arith.constant 0 : i32
    %c0_i32_0 = arith.constant 0 : i32
    %c0_i32_1 = arith.constant 0 : i32
    return %c0_i32, %c0_i32_0 : i32, i32
  }
  func.func @transform_2(%arg0: i32) -> (i32, i32) {
    %c0_i32 = arith.constant 0 : i32
    %c0_i32_0 = arith.constant 0 : i32
    %c0_i32_1 = arith.constant 0 : i32
    return %c0_i32, %c0_i32_0 : i32, i32
  }
  func.func @transform_3(%arg0: i32) -> (i32, i32) {
    %c0_i32 = arith.constant 0 : i32
    %c0_i32_0 = arith.constant 0 : i32
    %c0_i32_1 = arith.constant 0 : i32
    return %c0_i32, %c0_i32_0 : i32, i32
  }
  func.func @transform_4(%arg0: i32) -> (i32, i32) {
    %c0_i32 = arith.constant 0 : i32
    %c0_i32_0 = arith.constant 0 : i32
    %c0_i32_1 = arith.constant 0 : i32
    return %c0_i32, %c0_i32_0 : i32, i32
  }
  func.func @transform_5(%arg0: i32) -> (i32, i32) {
    %c0_i32 = arith.constant 0 : i32
    %c0_i32_0 = arith.constant 0 : i32
    %c0_i32_1 = arith.constant 0 : i32
    return %c0_i32, %c0_i32_0 : i32, i32
  }
  func.func @transform_6(%arg0: i32) -> (i32, i32) {
    %c0_i32 = arith.constant 0 : i32
    %c0_i32_0 = arith.constant 0 : i32
    %c0_i32_1 = arith.constant 0 : i32
    return %c0_i32, %c0_i32_0 : i32, i32
  }
  func.func @transform_7(%arg0: i32) -> (i32, i32) {
    %c0_i32 = arith.constant 0 : i32
    %c0_i32_0 = arith.constant 0 : i32
    %c0_i32_1 = arith.constant 0 : i32
    return %c0_i32, %c0_i32_0 : i32, i32
  }
  func.func @transform_8(%arg0: i32) -> (i32, i32) {
    %c0_i32 = arith.constant 0 : i32
    %c0_i32_0 = arith.constant 0 : i32
    %c0_i32_1 = arith.constant 0 : i32
    return %c0_i32, %c0_i32_0 : i32, i32
  }
  func.func @transform_9(%arg0: i32) -> (i32, i32) {
    %c0_i32 = arith.constant 0 : i32
    %c0_i32_0 = arith.constant 0 : i32
    %c0_i32_1 = arith.constant 0 : i32
    return %c0_i32, %c0_i32_0 : i32, i32
  }
  func.func @transform_10(%arg0: i32) -> (i32, i32) {
    %c0_i32 = arith.constant 0 : i32
    %c0_i32_0 = arith.constant 0 : i32
    %c0_i32_1 = arith.constant 0 : i32
    return %c0_i32, %c0_i32_0 : i32, i32
  }
  func.func @transform_11(%arg0: i32) -> (i32, i32) {
    %c0_i32 = arith.constant 0 : i32
    %c0_i32_0 = arith.constant 0 : i32
    return %arg0, %c0_i32 : i32, i32
  }
}

</mosaic_0001>

<llo_original>
// kernel: atari_ppo_forward.1
$region0: #{atari_ppo_forward.1}
  #allocation0 [shape = 'u32[]', space=smem, size = 0x4, offset = 0x4, fixed_abs, tag = 'smem constant byte address 0x4 - core index']
  #allocation1 [shape = 'u32[144,128]{1,0:T(1,128)}', space=vmem, size = 0x12000, scoped, tag = 'internal scratch']
  %s0 = inlined_call_operand.vmem [shape: f32[128,256], index: 0, kind: input, shape index: {}]
  %s1 = inlined_call_operand.vmem [shape: bf16[256,32], index: 1, kind: input, shape index: {}]
  %s2 = inlined_call_operand.vmem [shape: f32[1,32], index: 2, kind: input, shape index: {}]
  %s3 = inlined_call_operand.vmem [shape: bf16[512,64], index: 3, kind: input, shape index: {}]
  %s4 = inlined_call_operand.vmem [shape: f32[1,64], index: 4, kind: input, shape index: {}]
  %s5 = inlined_call_operand.vmem [shape: bf16[576,32], index: 5, kind: input, shape index: {}]
  %s6 = inlined_call_operand.vmem [shape: f32[1,32], index: 6, kind: input, shape index: {}]
  %s7 = inlined_call_operand.vmem [shape: bf16[32,512], index: 7, kind: input, shape index: {}]
  %s8 = inlined_call_operand.vmem [shape: f32[1,512], index: 8, kind: input, shape index: {}]
  %s9 = inlined_call_operand.vmem [shape: bf16[512,128], index: 9, kind: input, shape index: {}]
  %s10 = inlined_call_operand.vmem [shape: f32[1,128], index: 10, kind: input, shape index: {}]
  %s11 = inlined_call_operand.vmem [shape: f32[2,128], index: 11, kind: output, shape index: {}]
  %s12 = sld [smem:[#allocation0]]
  $region54: #{atari_ppo_forward.1} parent=0
    _
  %s14 = ssub.s32 1, %s12
  %s15 = scalar_select 0, %s14, %s12
  // Predicated region
  $region2: #{atari_ppo_forward.1} parent=0 // pred_check
    _
  $region3: #{atari_ppo_forward.1} parent=0 // pred_check_branch
    %17 = sbr.rel (0) target = $region5
  $region4: #{atari_ppo_forward.1} parent=0 // pred_region
    _
  $region5: #{atari_ppo_forward.1} parent=0 // pred_fallthru
    _
  // Predicated region
  $region6: #{atari_ppo_forward.1} parent=0 // pred_check
    _
  $region7: #{atari_ppo_forward.1} parent=0 // pred_check_branch
    %19 = sbr.rel (0) target = $region9
  $region8: #{atari_ppo_forward.1} parent=0 // pred_region
    _
  $region9: #{atari_ppo_forward.1} parent=0 // pred_fallthru
    _
  // Predicated region
  $region10: #{atari_ppo_forward.1} parent=0 // pred_check
    _
  $region11: #{atari_ppo_forward.1} parent=0 // pred_check_branch
    %21 = sbr.rel (0) target = $region13
  $region12: #{atari_ppo_forward.1} parent=0 // pred_region
    _
  $region13: #{atari_ppo_forward.1} parent=0 // pred_fallthru
    _
  // Predicated region
  $region14: #{atari_ppo_forward.1} parent=0 // pred_check
    _
  $region15: #{atari_ppo_forward.1} parent=0 // pred_check_branch
    %23 = sbr.rel (0) target = $region17
  $region16: #{atari_ppo_forward.1} parent=0 // pred_region
    _
  $region17: #{atari_ppo_forward.1} parent=0 // pred_fallthru
    _
  // Predicated region
  $region18: #{atari_ppo_forward.1} parent=0 // pred_check
    _
  $region19: #{atari_ppo_forward.1} parent=0 // pred_check_branch
    %25 = sbr.rel (0) target = $region21
  $region20: #{atari_ppo_forward.1} parent=0 // pred_region
    _
  $region21: #{atari_ppo_forward.1} parent=0 // pred_fallthru
    _
  // Predicated region
  $region22: #{atari_ppo_forward.1} parent=0 // pred_check
    _
  $region23: #{atari_ppo_forward.1} parent=0 // pred_check_branch
    %27 = sbr.rel (0) target = $region25
  $region24: #{atari_ppo_forward.1} parent=0 // pred_region
    _
  $region25: #{atari_ppo_forward.1} parent=0 // pred_fallthru
    _
  // Predicated region
  $region26: #{atari_ppo_forward.1} parent=0 // pred_check
    _
  $region27: #{atari_ppo_forward.1} parent=0 // pred_check_branch
    %29 = sbr.rel (0) target = $region29
  $region28: #{atari_ppo_forward.1} parent=0 // pred_region
    _
  $region29: #{atari_ppo_forward.1} parent=0 // pred_fallthru
    _
  // Predicated region
  $region30: #{atari_ppo_forward.1} parent=0 // pred_check
    _
  $region31: #{atari_ppo_forward.1} parent=0 // pred_check_branch
    %31 = sbr.rel (0) target = $region33
  $region32: #{atari_ppo_forward.1} parent=0 // pred_region
    _
  $region33: #{atari_ppo_forward.1} parent=0 // pred_fallthru
    _
  // Predicated region
  $region34: #{atari_ppo_forward.1} parent=0 // pred_check
    _
  $region35: #{atari_ppo_forward.1} parent=0 // pred_check_branch
    %33 = sbr.rel (0) target = $region37
  $region36: #{atari_ppo_forward.1} parent=0 // pred_region
    _
  $region37: #{atari_ppo_forward.1} parent=0 // pred_fallthru
    _
  // Predicated region
  $region38: #{atari_ppo_forward.1} parent=0 // pred_check
    _
  $region39: #{atari_ppo_forward.1} parent=0 // pred_check_branch
    %35 = sbr.rel (0) target = $region41
  $region40: #{atari_ppo_forward.1} parent=0 // pred_region
    _
  $region41: #{atari_ppo_forward.1} parent=0 // pred_fallthru
    _
  // Predicated region
  $region42: #{atari_ppo_forward.1} parent=0 // pred_check
    _
  $region43: #{atari_ppo_forward.1} parent=0 // pred_check_branch
    %37 = sbr.rel (0) target = $region45
  $region44: #{atari_ppo_forward.1} parent=0 // pred_region
    _
  $region45: #{atari_ppo_forward.1} parent=0 // pred_fallthru
    _
  %v39 = vld [vmem:[%s0] sm:$0xff]
  %v40 = vld [vmem:[%s0 + $0x8] sm:$0xff]
  %v41 = vld [vmem:[%s0 + $0x10] sm:$0xff]
  %v42 = vld [vmem:[%s0 + $0x18] sm:$0xff]
  %v43 = vld [vmem:[%s0 + $0x20] sm:$0xff]
  %v44 = vld [vmem:[%s0 + $0x28] sm:$0xff]
  %v45 = vld [vmem:[%s0 + $0x30] sm:$0xff]
  %v46 = vld [vmem:[%s0 + $0x38] sm:$0xff]
  %v47 = vld [vmem:[%s0 + $0x40] sm:$0xff]
  %v48 = vld [vmem:[%s0 + $0x48] sm:$0xff]
  %v49 = vld [vmem:[%s0 + $0x50] sm:$0xff]
  %v50 = vld [vmem:[%s0 + $0x58] sm:$0xff]
  %v51 = vld [vmem:[%s0 + $0x60] sm:$0xff]
  %v52 = vld [vmem:[%s0 + $0x68] sm:$0xff]
  %v53 = vld [vmem:[%s0 + $0x70] sm:$0xff]
  %v54 = vld [vmem:[%s0 + $0x78] sm:$0xff]
  %v55 = vld [vmem:[%s0 + $0x80] sm:$0xff]
  %v56 = vld [vmem:[%s0 + $0x88] sm:$0xff]
  %v57 = vld [vmem:[%s0 + $0x90] sm:$0xff]
  %v58 = vld [vmem:[%s0 + $0x98] sm:$0xff]
  %v59 = vld [vmem:[%s0 + $0xa0] sm:$0xff]
  %v60 = vld [vmem:[%s0 + $0xa8] sm:$0xff]
  %v61 = vld [vmem:[%s0 + $0xb0] sm:$0xff]
  %v62 = vld [vmem:[%s0 + $0xb8] sm:$0xff]
  %v63 = vld [vmem:[%s0 + $0xc0] sm:$0xff]
  %v64 = vld [vmem:[%s0 + $0xc8] sm:$0xff]
  %v65 = vld [vmem:[%s0 + $0xd0] sm:$0xff]
  %v66 = vld [vmem:[%s0 + $0xd8] sm:$0xff]
  %v67 = vld [vmem:[%s0 + $0xe0] sm:$0xff]
  %v68 = vld [vmem:[%s0 + $0xe8] sm:$0xff]
  %v69 = vld [vmem:[%s0 + $0xf0] sm:$0xff]
  %v70 = vld [vmem:[%s0 + $0xf8] sm:$0xff]
  %v71 = vmul.f32 %v39, 0.003921569
  %v72 = vmul.f32 %v40, 0.003921569
  %v73 = vmul.f32 %v41, 0.003921569
  %v74 = vmul.f32 %v42, 0.003921569
  %v75 = vmul.f32 %v43, 0.003921569
  %v76 = vmul.f32 %v44, 0.003921569
  %v77 = vmul.f32 %v45, 0.003921569
  %v78 = vmul.f32 %v46, 0.003921569
  %v79 = vmul.f32 %v47, 0.003921569
  %v80 = vmul.f32 %v48, 0.003921569
  %v81 = vmul.f32 %v49, 0.003921569
  %v82 = vmul.f32 %v50, 0.003921569
  %v83 = vmul.f32 %v51, 0.003921569
  %v84 = vmul.f32 %v52, 0.003921569
  %v85 = vmul.f32 %v53, 0.003921569
  %v86 = vmul.f32 %v54, 0.003921569
  %v87 = vmul.f32 %v55, 0.003921569
  %v88 = vmul.f32 %v56, 0.003921569
  %v89 = vmul.f32 %v57, 0.003921569
  %v90 = vmul.f32 %v58, 0.003921569
  %v91 = vmul.f32 %v59, 0.003921569
  %v92 = vmul.f32 %v60, 0.003921569
  %v93 = vmul.f32 %v61, 0.003921569
  %v94 = vmul.f32 %v62, 0.003921569
  %v95 = vmul.f32 %v63, 0.003921569
  %v96 = vmul.f32 %v64, 0.003921569
  %v97 = vmul.f32 %v65, 0.003921569
  %v98 = vmul.f32 %v66, 0.003921569
  %v99 = vmul.f32 %v67, 0.003921569
  %v100 = vmul.f32 %v68, 0.003921569
  %v101 = vmul.f32 %v69, 0.003921569
  %v102 = vmul.f32 %v70, 0.003921569
  %v103 = vld [vmem:[%s1] sm:$0xf]
  %v104 = vld [vmem:[%s1 + $0x4] sm:$0xf]
  %v105 = vld [vmem:[%s1 + $0x8] sm:$0xf]
  %v106 = vld [vmem:[%s1 + $0xc] sm:$0xf]
  %v107 = vld [vmem:[%s1 + $0x10] sm:$0xf]
  %v108 = vld [vmem:[%s1 + $0x14] sm:$0xf]
  %v109 = vld [vmem:[%s1 + $0x18] sm:$0xf]
  %v110 = vld [vmem:[%s1 + $0x1c] sm:$0xf]
  %v111 = vld [vmem:[%s1 + $0x20] sm:$0xf]
  %v112 = vld [vmem:[%s1 + $0x24] sm:$0xf]
  %v113 = vld [vmem:[%s1 + $0x28] sm:$0xf]
  %v114 = vld [vmem:[%s1 + $0x2c] sm:$0xf]
  %v115 = vld [vmem:[%s1 + $0x30] sm:$0xf]
  %v116 = vld [vmem:[%s1 + $0x34] sm:$0xf]
  %v117 = vld [vmem:[%s1 + $0x38] sm:$0xf]
  %v118 = vld [vmem:[%s1 + $0x3c] sm:$0xf]
  %v119 = vld [vmem:[%s1 + $0x40] sm:$0xf]
  %v120 = vld [vmem:[%s1 + $0x44] sm:$0xf]
  %v121 = vld [vmem:[%s1 + $0x48] sm:$0xf]
  %v122 = vld [vmem:[%s1 + $0x4c] sm:$0xf]
  %v123 = vld [vmem:[%s1 + $0x50] sm:$0xf]
  %v124 = vld [vmem:[%s1 + $0x54] sm:$0xf]
  %v125 = vld [vmem:[%s1 + $0x58] sm:$0xf]
  %v126 = vld [vmem:[%s1 + $0x5c] sm:$0xf]
  %v127 = vld [vmem:[%s1 + $0x60] sm:$0xf]
  %v128 = vld [vmem:[%s1 + $0x64] sm:$0xf]
  %v129 = vld [vmem:[%s1 + $0x68] sm:$0xf]
  %v130 = vld [vmem:[%s1 + $0x6c] sm:$0xf]
  %v131 = vld [vmem:[%s1 + $0x70] sm:$0xf]
  %v132 = vld [vmem:[%s1 + $0x74] sm:$0xf]
  %v133 = vld [vmem:[%s1 + $0x78] sm:$0xf]
  %v134 = vld [vmem:[%s1 + $0x7c] sm:$0xf]
  %v135 = vpack.c.bf16 %v73, %v71
  %v136 = vpack.c.bf16 %v74, %v72
  %v137 = vpack.c.bf16 %v77, %v75
  %v138 = vpack.c.bf16 %v78, %v76
  %v139 = vpack.c.bf16 %v81, %v79
  %v140 = vpack.c.bf16 %v82, %v80
  %v141 = vpack.c.bf16 %v85, %v83
  %v142 = vpack.c.bf16 %v86, %v84
  %v143 = vpack.c.bf16 %v89, %v87
  %v144 = vpack.c.bf16 %v90, %v88
  %v145 = vpack.c.bf16 %v93, %v91
  %v146 = vpack.c.bf16 %v94, %v92
  %v147 = vpack.c.bf16 %v97, %v95
  %v148 = vpack.c.bf16 %v98, %v96
  %v149 = vpack.c.bf16 %v101, %v99
  %v150 = vpack.c.bf16 %v102, %v100
  %v151 = vld [vmem:[%s2] sm:$0x1]
  %v153 = vlaneseq
  %v154 = vshrl.u32 %v153, 7
  %v155 = vsub.s32 0, %v154
  %v156 = vrot.slane %v151, %v155
  %v190 = vunpack.c.l.b16 %v103
  %v191 = vunpack.c.l.b16 %v104
  %v192 = vunpack.c.l.b16 %v105
  %v193 = vunpack.c.l.b16 %v106
  %v194 = vunpack.c.l.b16 %v107
  %v195 = vunpack.c.l.b16 %v108
  %v196 = vunpack.c.l.b16 %v109
  %v197 = vunpack.c.l.b16 %v110
  %v198 = vunpack.c.l.b16 %v111
  %v199 = vunpack.c.l.b16 %v112
  %v200 = vunpack.c.l.b16 %v113
  %v201 = vunpack.c.l.b16 %v114
  %v202 = vunpack.c.l.b16 %v115
  %v203 = vunpack.c.l.b16 %v116
  %v204 = vunpack.c.l.b16 %v117
  %v205 = vunpack.c.l.b16 %v118
  %v206 = vunpack.c.l.b16 %v119
  %v207 = vunpack.c.l.b16 %v120
  %v208 = vunpack.c.l.b16 %v121
  %v209 = vunpack.c.l.b16 %v122
  %v210 = vunpack.c.l.b16 %v123
  %v211 = vunpack.c.l.b16 %v124
  %v212 = vunpack.c.l.b16 %v125
  %v213 = vunpack.c.l.b16 %v126
  %v214 = vunpack.c.l.b16 %v127
  %v215 = vunpack.c.l.b16 %v128
  %v216 = vunpack.c.l.b16 %v129
  %v217 = vunpack.c.l.b16 %v130
  %v218 = vunpack.c.l.b16 %v131
  %v219 = vunpack.c.l.b16 %v132
  %v220 = vunpack.c.l.b16 %v133
  %v221 = vunpack.c.l.b16 %v134
  %v222 = vpack.c.b16 %v191, %v190
  %v223 = vpack.c.b16 %v193, %v192
  %v224 = vpack.c.b16 %v195, %v194
  %v225 = vpack.c.b16 %v197, %v196
  %v226 = vpack.c.b16 %v199, %v198
  %v227 = vpack.c.b16 %v201, %v200
  %v228 = vpack.c.b16 %v203, %v202
  %v229 = vpack.c.b16 %v205, %v204
  %v230 = vpack.c.b16 %v207, %v206
  %v231 = vpack.c.b16 %v209, %v208
  %v232 = vpack.c.b16 %v211, %v210
  %v233 = vpack.c.b16 %v213, %v212
  %v234 = vpack.c.b16 %v215, %v214
  %v235 = vpack.c.b16 %v217, %v216
  %v236 = vpack.c.b16 %v219, %v218
  %v237 = vpack.c.b16 %v221, %v220
  %254 = vmatprep.subr.bf16.mxu0 0
  %255 = vmatpush1.bf16.msra.mxu0 %v229
  %256 = vmatprep.subr.bf16.mxu0 0
  %257 = vmatpush1.bf16.msra.mxu0 %v228
  %258 = vmatprep.subr.bf16.mxu0 0
  %259 = vmatpush1.bf16.msra.mxu0 %v227
  %260 = vmatprep.subr.bf16.mxu0 0
  %261 = vmatpush1.bf16.msra.mxu0 %v226
  %262 = vmatprep.subr.bf16.mxu0 0
  %263 = vmatpush1.bf16.msra.mxu0 %v225
  %264 = vmatprep.subr.bf16.mxu0 0
  %265 = vmatpush1.bf16.msra.mxu0 %v224
  %266 = vmatprep.subr.bf16.mxu0 0
  %267 = vmatpush1.bf16.msra.mxu0 %v223
  %268 = vmatprep.subr.bf16.mxu0 0
  %269 = vmatpush1.bf16.msra.mxu0 %v222
  %270 = vmatprep.subr.bf16.mxu0 0
  %271 = vmatpush2.bf16.msra.mxu0 %v237
  %272 = vmatprep.subr.bf16.mxu0 0
  %273 = vmatpush2.bf16.msra.mxu0 %v236
  %274 = vmatprep.subr.bf16.mxu0 0
  %275 = vmatpush2.bf16.msra.mxu0 %v235
  %276 = vmatprep.subr.bf16.mxu0 0
  %277 = vmatpush2.bf16.msra.mxu0 %v234
  %278 = vmatprep.subr.bf16.mxu0 0
  %279 = vmatpush2.bf16.msra.mxu0 %v233
  %280 = vmatprep.subr.bf16.mxu0 0
  %281 = vmatpush2.bf16.msra.mxu0 %v232
  %282 = vmatprep.subr.bf16.mxu0 0
  %283 = vmatpush2.bf16.msra.mxu0 %v231
  %284 = vmatprep.subr.bf16.mxu0 0
  %285 = vmatpush2.bf16.msra.mxu0 %v230
  %286 = vmatprep.mubr.bf16.mxu0 %v136
  %287 = vmatmul.mubr.bf16.gmra.mxu0 %v135
  %v288 = vpop.f32.mrf.mxu0
  %v289 = vadd.f32 %v156, %v288
  %v290 = vpop.f32.mrf.mxu0
  %v291 = vpop.f32.mrf.mxu0
  %v292 = vadd.f32 %v156, %v291
  %v293 = vpop.f32.mrf.mxu0
  %294 = vmatprep.mubr.bf16.mxu0 %v138
  %295 = vmatmul.mubr.bf16.gmra.mxu0 %v137
  %v296 = vpop.f32.mrf.mxu0
  %v297 = vadd.f32 %v156, %v296
  %v298 = vpop.f32.mrf.mxu0
  %v299 = vpop.f32.mrf.mxu0
  %v300 = vadd.f32 %v156, %v299
  %v301 = vpop.f32.mrf.mxu0
  %302 = vmatprep.mubr.bf16.mxu0 %v140
  %303 = vmatmul.mubr.bf16.gmra.mxu0 %v139
  %v304 = vpop.f32.mrf.mxu0
  %v305 = vadd.f32 %v156, %v304
  %v306 = vpop.f32.mrf.mxu0
  %v307 = vpop.f32.mrf.mxu0
  %v308 = vadd.f32 %v156, %v307
  %v309 = vpop.f32.mrf.mxu0
  %310 = vmatprep.mubr.bf16.mxu0 %v142
  %311 = vmatmul.mubr.bf16.gmra.mxu0 %v141
  %v312 = vpop.f32.mrf.mxu0
  %v313 = vadd.f32 %v156, %v312
  %v314 = vpop.f32.mrf.mxu0
  %v315 = vpop.f32.mrf.mxu0
  %v316 = vadd.f32 %v156, %v315
  %v317 = vpop.f32.mrf.mxu0
  %318 = vmatprep.mubr.bf16.mxu0 %v144
  %319 = vmatmul.mubr.bf16.gmra.mxu0 %v143
  %v320 = vpop.f32.mrf.mxu0
  %v321 = vadd.f32 %v156, %v320
  %v322 = vpop.f32.mrf.mxu0
  %v323 = vpop.f32.mrf.mxu0
  %v324 = vadd.f32 %v156, %v323
  %v325 = vpop.f32.mrf.mxu0
  %326 = vmatprep.mubr.bf16.mxu0 %v146
  %327 = vmatmul.mubr.bf16.gmra.mxu0 %v145
  %v328 = vpop.f32.mrf.mxu0
  %v329 = vadd.f32 %v156, %v328
  %v330 = vpop.f32.mrf.mxu0
  %v331 = vpop.f32.mrf.mxu0
  %v332 = vadd.f32 %v156, %v331
  %v333 = vpop.f32.mrf.mxu0
  %334 = vmatprep.mubr.bf16.mxu0 %v148
  %335 = vmatmul.mubr.bf16.gmra.mxu0 %v147
  %v336 = vpop.f32.mrf.mxu0
  %v337 = vadd.f32 %v156, %v336
  %v338 = vpop.f32.mrf.mxu0
  %v339 = vpop.f32.mrf.mxu0
  %v340 = vadd.f32 %v156, %v339
  %v341 = vpop.f32.mrf.mxu0
  %342 = vmatprep.mubr.bf16.mxu0 %v150
  %343 = vmatmul.mubr.bf16.gmra.mxu0 %v149
  %v344 = vpop.f32.mrf.mxu0
  %v345 = vadd.f32 %v156, %v344
  %v346 = vpop.f32.mrf.mxu0
  %v347 = vpop.f32.mrf.mxu0
  %v348 = vadd.f32 %v156, %v347
  %v349 = vpop.f32.mrf.mxu0
  %350 = vdwg.mxu0
  %v351 = vmax.f32 %v289, 0.0
  %v352 = vmax.f32 %v292, 0.0
  %v353 = vmax.f32 %v297, 0.0
  %v354 = vmax.f32 %v300, 0.0
  %v355 = vmax.f32 %v305, 0.0
  %v356 = vmax.f32 %v308, 0.0
  %v357 = vmax.f32 %v313, 0.0
  %v358 = vmax.f32 %v316, 0.0
  %v359 = vmax.f32 %v321, 0.0
  %v360 = vmax.f32 %v324, 0.0
  %v361 = vmax.f32 %v329, 0.0
  %v362 = vmax.f32 %v332, 0.0
  %v363 = vmax.f32 %v337, 0.0
  %v364 = vmax.f32 %v340, 0.0
  %v365 = vmax.f32 %v345, 0.0
  %v366 = vmax.f32 %v348, 0.0
  %v367 = vld [vmem:[%s3] sm:$0xf]
  %v368 = vld [vmem:[%s3 + $0x4] sm:$0xf]
  %v369 = vld [vmem:[%s3 + $0x8] sm:$0xf]
  %v370 = vld [vmem:[%s3 + $0xc] sm:$0xf]
  %v371 = vld [vmem:[%s3 + $0x10] sm:$0xf]
  %v372 = vld [vmem:[%s3 + $0x14] sm:$0xf]
  %v373 = vld [vmem:[%s3 + $0x18] sm:$0xf]
  %v374 = vld [vmem:[%s3 + $0x1c] sm:$0xf]
  %v375 = vld [vmem:[%s3 + $0x20] sm:$0xf]
  %v376 = vld [vmem:[%s3 + $0x24] sm:$0xf]
  %v377 = vld [vmem:[%s3 + $0x28] sm:$0xf]
  %v378 = vld [vmem:[%s3 + $0x2c] sm:$0xf]
  %v379 = vld [vmem:[%s3 + $0x30] sm:$0xf]
  %v380 = vld [vmem:[%s3 + $0x34] sm:$0xf]
  %v381 = vld [vmem:[%s3 + $0x38] sm:$0xf]
  %v382 = vld [vmem:[%s3 + $0x3c] sm:$0xf]
  %v383 = vld [vmem:[%s3 + $0x40] sm:$0xf]
  %v384 = vld [vmem:[%s3 + $0x44] sm:$0xf]
  %v385 = vld [vmem:[%s3 + $0x48] sm:$0xf]
  %v386 = vld [vmem:[%s3 + $0x4c] sm:$0xf]
  %v387 = vld [vmem:[%s3 + $0x50] sm:$0xf]
  %v388 = vld [vmem:[%s3 + $0x54] sm:$0xf]
  %v389 = vld [vmem:[%s3 + $0x58] sm:$0xf]
  %v390 = vld [vmem:[%s3 + $0x5c] sm:$0xf]
  %v391 = vld [vmem:[%s3 + $0x60] sm:$0xf]
  %v392 = vld [vmem:[%s3 + $0x64] sm:$0xf]
  %v393 = vld [vmem:[%s3 + $0x68] sm:$0xf]
  %v394 = vld [vmem:[%s3 + $0x6c] sm:$0xf]
  %v395 = vld [vmem:[%s3 + $0x70] sm:$0xf]
  %v396 = vld [vmem:[%s3 + $0x74] sm:$0xf]
  %v397 = vld [vmem:[%s3 + $0x78] sm:$0xf]
  %v398 = vld [vmem:[%s3 + $0x7c] sm:$0xf]
  %v399 = vld [vmem:[%s3 + $0x80] sm:$0xf]
  %v400 = vld [vmem:[%s3 + $0x84] sm:$0xf]
  %v401 = vld [vmem:[%s3 + $0x88] sm:$0xf]
  %v402 = vld [vmem:[%s3 + $0x8c] sm:$0xf]
  %v403 = vld [vmem:[%s3 + $0x90] sm:$0xf]
  %v404 = vld [vmem:[%s3 + $0x94] sm:$0xf]
  %v405 = vld [vmem:[%s3 + $0x98] sm:$0xf]
  %v406 = vld [vmem:[%s3 + $0x9c] sm:$0xf]
  %v407 = vld [vmem:[%s3 + $0xa0] sm:$0xf]
  %v408 = vld [vmem:[%s3 + $0xa4] sm:$0xf]
  %v409 = vld [vmem:[%s3 + $0xa8] sm:$0xf]
  %v410 = vld [vmem:[%s3 + $0xac] sm:$0xf]
  %v411 = vld [vmem:[%s3 + $0xb0] sm:$0xf]
  %v412 = vld [vmem:[%s3 + $0xb4] sm:$0xf]
  %v413 = vld [vmem:[%s3 + $0xb8] sm:$0xf]
  %v414 = vld [vmem:[%s3 + $0xbc] sm:$0xf]
  %v415 = vld [vmem:[%s3 + $0xc0] sm:$0xf]
  %v416 = vld [vmem:[%s3 + $0xc4] sm:$0xf]
  %v417 = vld [vmem:[%s3 + $0xc8] sm:$0xf]
  %v418 = vld [vmem:[%s3 + $0xcc] sm:$0xf]
  %v419 = vld [vmem:[%s3 + $0xd0] sm:$0xf]
  %v420 = vld [vmem:[%s3 + $0xd4] sm:$0xf]
  %v421 = vld [vmem:[%s3 + $0xd8] sm:$0xf]
  %v422 = vld [vmem:[%s3 + $0xdc] sm:$0xf]
  %v423 = vld [vmem:[%s3 + $0xe0] sm:$0xf]
  %v424 = vld [vmem:[%s3 + $0xe4] sm:$0xf]
  %v425 = vld [vmem:[%s3 + $0xe8] sm:$0xf]
  %v426 = vld [vmem:[%s3 + $0xec] sm:$0xf]
  %v427 = vld [vmem:[%s3 + $0xf0] sm:$0xf]
  %v428 = vld [vmem:[%s3 + $0xf4] sm:$0xf]
  %v429 = vld [vmem:[%s3 + $0xf8] sm:$0xf]
  %v430 = vld [vmem:[%s3 + $0xfc] sm:$0xf]
  %v431 = vld [vmem:[%s4] sm:$0x1]
  %v434 = vrot.slane %v359, 7
  %vm435 = vcmask 1041409
  %v436 = vsel %vm435, %v434, %v351
  %v438 = vrot.slane %v351, 1
  %v439 = vsel %vm435, %v359, %v438
  %440 = vrot.lane.b32.xlu0 %v439, 32
  %v441 = vpop.permute.xlu0 %440
  %v443 = vrot.slane %v351, 2
  %v444 = vrot.slane %v359, 1
  %v445 = vsel %vm435, %v444, %v443
  %446 = vrot.lane.b32.xlu0 %v445, 64
  %v447 = vpop.permute.xlu0 %446
  %v449 = vrot.slane %v351, 3
  %v450 = vrot.slane %v359, 2
  %v451 = vsel %vm435, %v450, %v449
  %452 = vrot.lane.b32.xlu0 %v451, 96
  %v453 = vpop.permute.xlu0 %452
  %v457 = vrot.slane %v360, 7
  %v458 = vsel %vm435, %v457, %v352
  %v460 = vrot.slane %v352, 1
  %v461 = vsel %vm435, %v360, %v460
  %462 = vrot.lane.b32.xlu0 %v461, 32
  %v463 = vpop.permute.xlu0 %462
  %v465 = vrot.slane %v352, 2
  %v466 = vrot.slane %v360, 1
  %v467 = vsel %vm435, %v466, %v465
  %468 = vrot.lane.b32.xlu0 %v467, 64
  %v469 = vpop.permute.xlu0 %468
  %v471 = vrot.slane %v352, 3
  %v472 = vrot.slane %v360, 2
  %v473 = vsel %vm435, %v472, %v471
  %474 = vrot.lane.b32.xlu0 %v473, 96
  %v475 = vpop.permute.xlu0 %474
  %v479 = vrot.slane %v361, 7
  %v480 = vsel %vm435, %v479, %v353
  %v482 = vrot.slane %v353, 1
  %v483 = vsel %vm435, %v361, %v482
  %484 = vrot.lane.b32.xlu0 %v483, 32
  %v485 = vpop.permute.xlu0 %484
  %v487 = vrot.slane %v353, 2
  %v488 = vrot.slane %v361, 1
  %v489 = vsel %vm435, %v488, %v487
  %490 = vrot.lane.b32.xlu0 %v489, 64
  %v491 = vpop.permute.xlu0 %490
  %v493 = vrot.slane %v353, 3
  %v494 = vrot.slane %v361, 2
  %v495 = vsel %vm435, %v494, %v493
  %496 = vrot.lane.b32.xlu0 %v495, 96
  %v497 = vpop.permute.xlu0 %496
  %v501 = vrot.slane %v362, 7
  %v502 = vsel %vm435, %v501, %v354
  %v504 = vrot.slane %v354, 1
  %v505 = vsel %vm435, %v362, %v504
  %506 = vrot.lane.b32.xlu0 %v505, 32
  %v507 = vpop.permute.xlu0 %506
  %v509 = vrot.slane %v354, 2
  %v510 = vrot.slane %v362, 1
  %v511 = vsel %vm435, %v510, %v509
  %512 = vrot.lane.b32.xlu0 %v511, 64
  %v513 = vpop.permute.xlu0 %512
  %v515 = vrot.slane %v354, 3
  %v516 = vrot.slane %v362, 2
  %v517 = vsel %vm435, %v516, %v515
  %518 = vrot.lane.b32.xlu0 %v517, 96
  %v519 = vpop.permute.xlu0 %518
  %vm521 = vcmask 261120
  %v522 = vsel %vm521, %v436, %v441
  %vm523 = vcmask 523264
  %v524 = vsel %vm523, %v522, %v447
  %vm525 = vcmask 785408
  %v526 = vsel %vm525, %v524, %v453
  %v527 = vsel %vm521, %v458, %v463
  %v528 = vsel %vm523, %v527, %v469
  %v529 = vsel %vm525, %v528, %v475
  %v530 = vsel %vm521, %v480, %v485
  %v531 = vsel %vm523, %v530, %v491
  %v532 = vsel %vm525, %v531, %v497
  %v533 = vsel %vm521, %v502, %v507
  %v534 = vsel %vm523, %v533, %v513
  %v535 = vsel %vm525, %v534, %v519
  %v536 = vpack.c.bf16 %v526, %v526
  %v537 = vpack.c.bf16 %v529, %v529
  %v538 = vpack.c.bf16 %v532, %v532
  %v539 = vpack.c.bf16 %v535, %v535
  %v541 = vlaneseq
  %v542 = vshrl.u32 %v541, 7
  %v543 = vsub.s32 0, %v542
  %v544 = vrot.slane %v431, %v543
  %v610 = vunpack.c.l.b16 %v367
  %v611 = vunpack.c.l.b16 %v368
  %v612 = vunpack.c.l.b16 %v369
  %v613 = vunpack.c.l.b16 %v370
  %v614 = vunpack.c.l.b16 %v371
  %v615 = vunpack.c.l.b16 %v372
  %v616 = vunpack.c.l.b16 %v373
  %v617 = vunpack.c.l.b16 %v374
  %v618 = vunpack.c.l.b16 %v375
  %v619 = vunpack.c.l.b16 %v376
  %v620 = vunpack.c.l.b16 %v377
  %v621 = vunpack.c.l.b16 %v378
  %v622 = vunpack.c.l.b16 %v379
  %v623 = vunpack.c.l.b16 %v380
  %v624 = vunpack.c.l.b16 %v381
  %v625 = vunpack.c.l.b16 %v382
  %v626 = vunpack.c.l.b16 %v383
  %v627 = vunpack.c.l.b16 %v384
  %v628 = vunpack.c.l.b16 %v385
  %v629 = vunpack.c.l.b16 %v386
  %v630 = vunpack.c.l.b16 %v387
  %v631 = vunpack.c.l.b16 %v388
  %v632 = vunpack.c.l.b16 %v389
  %v633 = vunpack.c.l.b16 %v390
  %v634 = vunpack.c.l.b16 %v391
  %v635 = vunpack.c.l.b16 %v392
  %v636 = vunpack.c.l.b16 %v393
  %v637 = vunpack.c.l.b16 %v394
  %v638 = vunpack.c.l.b16 %v395
  %v639 = vunpack.c.l.b16 %v396
  %v640 = vunpack.c.l.b16 %v397
  %v641 = vunpack.c.l.b16 %v398
  %v642 = vunpack.c.l.b16 %v399
  %v643 = vunpack.c.l.b16 %v400
  %v644 = vunpack.c.l.b16 %v401
  %v645 = vunpack.c.l.b16 %v402
  %v646 = vunpack.c.l.b16 %v403
  %v647 = vunpack.c.l.b16 %v404
  %v648 = vunpack.c.l.b16 %v405
  %v649 = vunpack.c.l.b16 %v406
  %v650 = vunpack.c.l.b16 %v407
  %v651 = vunpack.c.l.b16 %v408
  %v652 = vunpack.c.l.b16 %v409
  %v653 = vunpack.c.l.b16 %v410
  %v654 = vunpack.c.l.b16 %v411
  %v655 = vunpack.c.l.b16 %v412
  %v656 = vunpack.c.l.b16 %v413
  %v657 = vunpack.c.l.b16 %v414
  %v658 = vunpack.c.l.b16 %v415
  %v659 = vunpack.c.l.b16 %v416
  %v660 = vunpack.c.l.b16 %v417
  %v661 = vunpack.c.l.b16 %v418
  %v662 = vunpack.c.l.b16 %v419
  %v663 = vunpack.c.l.b16 %v420
  %v664 = vunpack.c.l.b16 %v421
  %v665 = vunpack.c.l.b16 %v422
  %v666 = vunpack.c.l.b16 %v423
  %v667 = vunpack.c.l.b16 %v424
  %v668 = vunpack.c.l.b16 %v425
  %v669 = vunpack.c.l.b16 %v426
  %v670 = vunpack.c.l.b16 %v427
  %v671 = vunpack.c.l.b16 %v428
  %v672 = vunpack.c.l.b16 %v429
  %v673 = vunpack.c.l.b16 %v430
  %v674 = vpack.c.b16 %v611, %v610
  %v675 = vpack.c.b16 %v613, %v612
  %v676 = vpack.c.b16 %v615, %v614
  %v677 = vpack.c.b16 %v617, %v616
  %v678 = vpack.c.b16 %v619, %v618
  %v679 = vpack.c.b16 %v621, %v620
  %v680 = vpack.c.b16 %v623, %v622
  %v681 = vpack.c.b16 %v625, %v624
  %v682 = vpack.c.b16 %v627, %v626
  %v683 = vpack.c.b16 %v629, %v628
  %v684 = vpack.c.b16 %v631, %v630
  %v685 = vpack.c.b16 %v633, %v632
  %v686 = vpack.c.b16 %v635, %v634
  %v687 = vpack.c.b16 %v637, %v636
  %v688 = vpack.c.b16 %v639, %v638
  %v689 = vpack.c.b16 %v641, %v640
  %v690 = vpack.c.b16 %v643, %v642
  %v691 = vpack.c.b16 %v645, %v644
  %v692 = vpack.c.b16 %v647, %v646
  %v693 = vpack.c.b16 %v649, %v648
  %v694 = vpack.c.b16 %v651, %v650
  %v695 = vpack.c.b16 %v653, %v652
  %v696 = vpack.c.b16 %v655, %v654
  %v697 = vpack.c.b16 %v657, %v656
  %v698 = vpack.c.b16 %v659, %v658
  %v699 = vpack.c.b16 %v661, %v660
  %v700 = vpack.c.b16 %v663, %v662
  %v701 = vpack.c.b16 %v665, %v664
  %v702 = vpack.c.b16 %v667, %v666
  %v703 = vpack.c.b16 %v669, %v668
  %v704 = vpack.c.b16 %v671, %v670
  %v705 = vpack.c.b16 %v673, %v672
  %738 = vmatprep.subr.bf16.mxu0 0
  %739 = vmatpush1.bf16.msra.mxu0 %v681
  %740 = vmatprep.subr.bf16.mxu0 0
  %741 = vmatpush1.bf16.msra.mxu0 %v680
  %742 = vmatprep.subr.bf16.mxu0 0
  %743 = vmatpush1.bf16.msra.mxu0 %v679
  %744 = vmatprep.subr.bf16.mxu0 0
  %745 = vmatpush1.bf16.msra.mxu0 %v678
  %746 = vmatprep.subr.bf16.mxu0 0
  %747 = vmatpush1.bf16.msra.mxu0 %v677
  %748 = vmatprep.subr.bf16.mxu0 0
  %749 = vmatpush1.bf16.msra.mxu0 %v676
  %750 = vmatprep.subr.bf16.mxu0 0
  %751 = vmatpush1.bf16.msra.mxu0 %v675
  %752 = vmatprep.subr.bf16.mxu0 0
  %753 = vmatpush1.bf16.msra.mxu0 %v674
  %754 = vmatprep.subr.bf16.mxu0 0
  %755 = vmatpush2.bf16.msra.mxu0 %v689
  %756 = vmatprep.subr.bf16.mxu0 0
  %757 = vmatpush2.bf16.msra.mxu0 %v688
  %758 = vmatprep.subr.bf16.mxu0 0
  %759 = vmatpush2.bf16.msra.mxu0 %v687
  %760 = vmatprep.subr.bf16.mxu0 0
  %761 = vmatpush2.bf16.msra.mxu0 %v686
  %762 = vmatprep.subr.bf16.mxu0 0
  %763 = vmatpush2.bf16.msra.mxu0 %v685
  %764 = vmatprep.subr.bf16.mxu0 0
  %765 = vmatpush2.bf16.msra.mxu0 %v684
  %766 = vmatprep.subr.bf16.mxu0 0
  %767 = vmatpush2.bf16.msra.mxu0 %v683
  %768 = vmatprep.subr.bf16.mxu0 0
  %769 = vmatpush2.bf16.msra.mxu0 %v682
  %770 = vmatprep.mubr.bf16.mxu0 %v537
  %771 = vmatmul.mubr.bf16.gmra.mxu0 %v536
  %v772 = vpop.f32.mrf.mxu0
  %v773 = vadd.f32 %v544, %v772
  %v774 = vpop.f32.mrf.mxu0
  %v775 = vpop.f32.mrf.mxu0
  %v776 = vpop.f32.mrf.mxu0
  %777 = vdwg.mxu0
  %778 = vmatprep.subr.bf16.mxu0 0
  %779 = vmatpush1.bf16.msra.mxu0 %v697
  %780 = vmatprep.subr.bf16.mxu0 0
  %781 = vmatpush1.bf16.msra.mxu0 %v696
  %782 = vmatprep.subr.bf16.mxu0 0
  %783 = vmatpush1.bf16.msra.mxu0 %v695
  %784 = vmatprep.subr.bf16.mxu0 0
  %785 = vmatpush1.bf16.msra.mxu0 %v694
  %786 = vmatprep.subr.bf16.mxu0 0
  %787 = vmatpush1.bf16.msra.mxu0 %v693
  %788 = vmatprep.subr.bf16.mxu0 0
  %789 = vmatpush1.bf16.msra.mxu0 %v692
  %790 = vmatprep.subr.bf16.mxu0 0
  %791 = vmatpush1.bf16.msra.mxu0 %v691
  %792 = vmatprep.subr.bf16.mxu0 0
  %793 = vmatpush1.bf16.msra.mxu0 %v690
  %794 = vmatprep.subr.bf16.mxu0 0
  %795 = vmatpush2.bf16.msra.mxu0 %v705
  %796 = vmatprep.subr.bf16.mxu0 0
  %797 = vmatpush2.bf16.msra.mxu0 %v704
  %798 = vmatprep.subr.bf16.mxu0 0
  %799 = vmatpush2.bf16.msra.mxu0 %v703
  %800 = vmatprep.subr.bf16.mxu0 0
  %801 = vmatpush2.bf16.msra.mxu0 %v702
  %802 = vmatprep.subr.bf16.mxu0 0
  %803 = vmatpush2.bf16.msra.mxu0 %v701
  %804 = vmatprep.subr.bf16.mxu0 0
  %805 = vmatpush2.bf16.msra.mxu0 %v700
  %806 = vmatprep.subr.bf16.mxu0 0
  %807 = vmatpush2.bf16.msra.mxu0 %v699
  %808 = vmatprep.subr.bf16.mxu0 0
  %809 = vmatpush2.bf16.msra.mxu0 %v698
  %810 = vmatprep.mubr.bf16.mxu0 %v539
  %811 = vmatmul.mubr.bf16.gmra.mxu0 %v538
  %v812 = vpop.f32.mrf.mxu0
  %v813 = vadd.f32 %v773, %v812
  %v814 = vpop.f32.mrf.mxu0
  %v815 = vpop.f32.mrf.mxu0
  %v816 = vpop.f32.mrf.mxu0
  %817 = vdwg.mxu0
  %v818 = vmax.f32 %v813, 0.0
  %vm819 = vcmask 1043459
  %v820 = vsel %vm819, %v434, %v351
  %v822 = vsel %vm819, %v359, %v438
  %823 = vrot.lane.b32.xlu0 %v822, 32
  %v824 = vpop.permute.xlu0 %823
  %v826 = vsel %vm819, %v444, %v443
  %827 = vrot.lane.b32.xlu0 %v826, 64
  %v828 = vpop.permute.xlu0 %827
  %v830 = vsel %vm819, %v450, %v449
  %831 = vrot.lane.b32.xlu0 %v830, 96
  %v832 = vpop.permute.xlu0 %831
  %v834 = vsel %vm819, %v457, %v352
  %v836 = vsel %vm819, %v360, %v460
  %837 = vrot.lane.b32.xlu0 %v836, 32
  %v838 = vpop.permute.xlu0 %837
  %v840 = vsel %vm819, %v466, %v465
  %841 = vrot.lane.b32.xlu0 %v840, 64
  %v842 = vpop.permute.xlu0 %841
  %v844 = vsel %vm819, %v472, %v471
  %845 = vrot.lane.b32.xlu0 %v844, 96
  %v846 = vpop.permute.xlu0 %845
  %v848 = vsel %vm819, %v479, %v353
  %v850 = vsel %vm819, %v361, %v482
  %851 = vrot.lane.b32.xlu0 %v850, 32
  %v852 = vpop.permute.xlu0 %851
  %v854 = vsel %vm819, %v488, %v487
  %855 = vrot.lane.b32.xlu0 %v854, 64
  %v856 = vpop.permute.xlu0 %855
  %v858 = vsel %vm819, %v494, %v493
  %859 = vrot.lane.b32.xlu0 %v858, 96
  %v860 = vpop.permute.xlu0 %859
  %v862 = vsel %vm819, %v501, %v354
  %v864 = vsel %vm819, %v362, %v504
  %865 = vrot.lane.b32.xlu0 %v864, 32
  %v866 = vpop.permute.xlu0 %865
  %v868 = vsel %vm819, %v510, %v509
  %869 = vrot.lane.b32.xlu0 %v868, 64
  %v870 = vpop.permute.xlu0 %869
  %v872 = vsel %vm819, %v516, %v515
  %873 = vrot.lane.b32.xlu0 %v872, 96
  %v874 = vpop.permute.xlu0 %873
  %v876 = vsel %vm521, %v820, %v824
  %v877 = vsel %vm523, %v876, %v828
  %v878 = vsel %vm525, %v877, %v832
  %v879 = vsel %vm521, %v834, %v838
  %v880 = vsel %vm523, %v879, %v842
  %v881 = vsel %vm525, %v880, %v846
  %v882 = vsel %vm521, %v848, %v852
  %v883 = vsel %vm523, %v882, %v856
  %v884 = vsel %vm525, %v883, %v860
  %v885 = vsel %vm521, %v862, %v866
  %v886 = vsel %vm523, %v885, %v870
  %v887 = vsel %vm525, %v886, %v874
  %v888 = vpack.c.bf16 %v878, %v878
  %v889 = vpack.c.bf16 %v881, %v881
  %v890 = vpack.c.bf16 %v884, %v884
  %v891 = vpack.c.bf16 %v887, %v887
  %v896 = vrot.slane %v888, 1
  %v897 = vrot.slane %v889, 1
  %v898 = vrot.slane %v890, 1
  %v899 = vrot.slane %v891, 1
  %904 = vmatprep.subr.bf16.mxu0 0
  %905 = vmatpush1.bf16.msra.mxu0 %v681
  %906 = vmatprep.subr.bf16.mxu0 0
  %907 = vmatpush1.bf16.msra.mxu0 %v680
  %908 = vmatprep.subr.bf16.mxu0 0
  %909 = vmatpush1.bf16.msra.mxu0 %v679
  %910 = vmatprep.subr.bf16.mxu0 0
  %911 = vmatpush1.bf16.msra.mxu0 %v678
  %912 = vmatprep.subr.bf16.mxu0 0
  %913 = vmatpush1.bf16.msra.mxu0 %v677
  %914 = vmatprep.subr.bf16.mxu0 0
  %915 = vmatpush1.bf16.msra.mxu0 %v676
  %916 = vmatprep.subr.bf16.mxu0 0
  %917 = vmatpush1.bf16.msra.mxu0 %v675
  %918 = vmatprep.subr.bf16.mxu0 0
  %919 = vmatpush1.bf16.msra.mxu0 %v674
  %920 = vmatprep.subr.bf16.mxu0 0
  %921 = vmatpush2.bf16.msra.mxu0 %v689
  %922 = vmatprep.subr.bf16.mxu0 0
  %923 = vmatpush2.bf16.msra.mxu0 %v688
  %924 = vmatprep.subr.bf16.mxu0 0
  %925 = vmatpush2.bf16.msra.mxu0 %v687
  %926 = vmatprep.subr.bf16.mxu0 0
  %927 = vmatpush2.bf16.msra.mxu0 %v686
  %928 = vmatprep.subr.bf16.mxu0 0
  %929 = vmatpush2.bf16.msra.mxu0 %v685
  %930 = vmatprep.subr.bf16.mxu0 0
  %931 = vmatpush2.bf16.msra.mxu0 %v684
  %932 = vmatprep.subr.bf16.mxu0 0
  %933 = vmatpush2.bf16.msra.mxu0 %v683
  %934 = vmatprep.subr.bf16.mxu0 0
  %935 = vmatpush2.bf16.msra.mxu0 %v682
  %936 = vmatprep.mubr.bf16.mxu0 %v897
  %937 = vmatmul.mubr.bf16.gmra.mxu0 %v896
  %v938 = vpop.f32.mrf.mxu0
  %v939 = vadd.f32 %v544, %v938
  %v940 = vpop.f32.mrf.mxu0
  %v941 = vpop.f32.mrf.mxu0
  %v942 = vpop.f32.mrf.mxu0
  %943 = vdwg.mxu0
  %944 = vmatprep.subr.bf16.mxu0 0
  %945 = vmatpush1.bf16.msra.mxu0 %v697
  %946 = vmatprep.subr.bf16.mxu0 0
  %947 = vmatpush1.bf16.msra.mxu0 %v696
  %948 = vmatprep.subr.bf16.mxu0 0
  %949 = vmatpush1.bf16.msra.mxu0 %v695
  %950 = vmatprep.subr.bf16.mxu0 0
  %951 = vmatpush1.bf16.msra.mxu0 %v694
  %952 = vmatprep.subr.bf16.mxu0 0
  %953 = vmatpush1.bf16.msra.mxu0 %v693
  %954 = vmatprep.subr.bf16.mxu0 0
  %955 = vmatpush1.bf16.msra.mxu0 %v692
  %956 = vmatprep.subr.bf16.mxu0 0
  %957 = vmatpush1.bf16.msra.mxu0 %v691
  %958 = vmatprep.subr.bf16.mxu0 0
  %959 = vmatpush1.bf16.msra.mxu0 %v690
  %960 = vmatprep.subr.bf16.mxu0 0
  %961 = vmatpush2.bf16.msra.mxu0 %v705
  %962 = vmatprep.subr.bf16.mxu0 0
  %963 = vmatpush2.bf16.msra.mxu0 %v704
  %964 = vmatprep.subr.bf16.mxu0 0
  %965 = vmatpush2.bf16.msra.mxu0 %v703
  %966 = vmatprep.subr.bf16.mxu0 0
  %967 = vmatpush2.bf16.msra.mxu0 %v702
  %968 = vmatprep.subr.bf16.mxu0 0
  %969 = vmatpush2.bf16.msra.mxu0 %v701
  %970 = vmatprep.subr.bf16.mxu0 0
  %971 = vmatpush2.bf16.msra.mxu0 %v700
  %972 = vmatprep.subr.bf16.mxu0 0
  %973 = vmatpush2.bf16.msra.mxu0 %v699
  %974 = vmatprep.subr.bf16.mxu0 0
  %975 = vmatpush2.bf16.msra.mxu0 %v698
  %976 = vmatprep.mubr.bf16.mxu0 %v899
  %977 = vmatmul.mubr.bf16.gmra.mxu0 %v898
  %v978 = vpop.f32.mrf.mxu0
  %v979 = vadd.f32 %v939, %v978
  %v980 = vpop.f32.mrf.mxu0
  %v981 = vpop.f32.mrf.mxu0
  %v982 = vpop.f32.mrf.mxu0
  %983 = vdwg.mxu0
  %v984 = vmax.f32 %v979, 0.0
  %vm985 = vcmask 1045509
  %v986 = vsel %vm985, %v434, %v351
  %v988 = vsel %vm985, %v359, %v438
  %989 = vrot.lane.b32.xlu0 %v988, 32
  %v990 = vpop.permute.xlu0 %989
  %v992 = vsel %vm985, %v444, %v443
  %993 = vrot.lane.b32.xlu0 %v992, 64
  %v994 = vpop.permute.xlu0 %993
  %v996 = vsel %vm985, %v450, %v449
  %997 = vrot.lane.b32.xlu0 %v996, 96
  %v998 = vpop.permute.xlu0 %997
  %v1000 = vsel %vm985, %v457, %v352
  %v1002 = vsel %vm985, %v360, %v460
  %1003 = vrot.lane.b32.xlu0 %v1002, 32
  %v1004 = vpop.permute.xlu0 %1003
  %v1006 = vsel %vm985, %v466, %v465
  %1007 = vrot.lane.b32.xlu0 %v1006, 64
  %v1008 = vpop.permute.xlu0 %1007
  %v1010 = vsel %vm985, %v472, %v471
  %1011 = vrot.lane.b32.xlu0 %v1010, 96
  %v1012 = vpop.permute.xlu0 %1011
  %v1014 = vsel %vm985, %v479, %v353
  %v1016 = vsel %vm985, %v361, %v482
  %1017 = vrot.lane.b32.xlu0 %v1016, 32
  %v1018 = vpop.permute.xlu0 %1017
  %v1020 = vsel %vm985, %v488, %v487
  %1021 = vrot.lane.b32.xlu0 %v1020, 64
  %v1022 = vpop.permute.xlu0 %1021
  %v1024 = vsel %vm985, %v494, %v493
  %1025 = vrot.lane.b32.xlu0 %v1024, 96
  %v1026 = vpop.permute.xlu0 %1025
  %v1028 = vsel %vm985, %v501, %v354
  %v1030 = vsel %vm985, %v362, %v504
  %1031 = vrot.lane.b32.xlu0 %v1030, 32
  %v1032 = vpop.permute.xlu0 %1031
  %v1034 = vsel %vm985, %v510, %v509
  %1035 = vrot.lane.b32.xlu0 %v1034, 64
  %v1036 = vpop.permute.xlu0 %1035
  %v1038 = vsel %vm985, %v516, %v515
  %1039 = vrot.lane.b32.xlu0 %v1038, 96
  %v1040 = vpop.permute.xlu0 %1039
  %v1042 = vsel %vm521, %v986, %v990
  %v1043 = vsel %vm523, %v1042, %v994
  %v1044 = vsel %vm525, %v1043, %v998
  %v1045 = vsel %vm521, %v1000, %v1004
  %v1046 = vsel %vm523, %v1045, %v1008
  %v1047 = vsel %vm525, %v1046, %v1012
  %v1048 = vsel %vm521, %v1014, %v1018
  %v1049 = vsel %vm523, %v1048, %v1022
  %v1050 = vsel %vm525, %v1049, %v1026
  %v1051 = vsel %vm521, %v1028, %v1032
  %v1052 = vsel %vm523, %v1051, %v1036
  %v1053 = vsel %vm525, %v1052, %v1040
  %v1054 = vpack.c.bf16 %v1044, %v1044
  %v1055 = vpack.c.bf16 %v1047, %v1047
  %v1056 = vpack.c.bf16 %v1050, %v1050
  %v1057 = vpack.c.bf16 %v1053, %v1053
  %v1062 = vrot.slane %v1054, 2
  %v1063 = vrot.slane %v1055, 2
  %v1064 = vrot.slane %v1056, 2
  %v1065 = vrot.slane %v1057, 2
  %1070 = vmatprep.subr.bf16.mxu0 0
  %1071 = vmatpush1.bf16.msra.mxu0 %v681
  %1072 = vmatprep.subr.bf16.mxu0 0
  %1073 = vmatpush1.bf16.msra.mxu0 %v680
  %1074 = vmatprep.subr.bf16.mxu0 0
  %1075 = vmatpush1.bf16.msra.mxu0 %v679
  %1076 = vmatprep.subr.bf16.mxu0 0
  %1077 = vmatpush1.bf16.msra.mxu0 %v678
  %1078 = vmatprep.subr.bf16.mxu0 0
  %1079 = vmatpush1.bf16.msra.mxu0 %v677
  %1080 = vmatprep.subr.bf16.mxu0 0
  %1081 = vmatpush1.bf16.msra.mxu0 %v676
  %1082 = vmatprep.subr.bf16.mxu0 0
  %1083 = vmatpush1.bf16.msra.mxu0 %v675
  %1084 = vmatprep.subr.bf16.mxu0 0
  %1085 = vmatpush1.bf16.msra.mxu0 %v674
  %1086 = vmatprep.subr.bf16.mxu0 0
  %1087 = vmatpush2.bf16.msra.mxu0 %v689
  %1088 = vmatprep.subr.bf16.mxu0 0
  %1089 = vmatpush2.bf16.msra.mxu0 %v688
  %1090 = vmatprep.subr.bf16.mxu0 0
  %1091 = vmatpush2.bf16.msra.mxu0 %v687
  %1092 = vmatprep.subr.bf16.mxu0 0
  %1093 = vmatpush2.bf16.msra.mxu0 %v686
  %1094 = vmatprep.subr.bf16.mxu0 0
  %1095 = vmatpush2.bf16.msra.mxu0 %v685
  %1096 = vmatprep.subr.bf16.mxu0 0
  %1097 = vmatpush2.bf16.msra.mxu0 %v684
  %1098 = vmatprep.subr.bf16.mxu0 0
  %1099 = vmatpush2.bf16.msra.mxu0 %v683
  %1100 = vmatprep.subr.bf16.mxu0 0
  %1101 = vmatpush2.bf16.msra.mxu0 %v682
  %1102 = vmatprep.mubr.bf16.mxu0 %v1063
  %1103 = vmatmul.mubr.bf16.gmra.mxu0 %v1062
  %v1104 = vpop.f32.mrf.mxu0
  %v1105 = vadd.f32 %v544, %v1104
  %v1106 = vpop.f32.mrf.mxu0
  %v1107 = vpop.f32.mrf.mxu0
  %v1108 = vpop.f32.mrf.mxu0
  %1109 = vdwg.mxu0
  %1110 = vmatprep.subr.bf16.mxu0 0
  %1111 = vmatpush1.bf16.msra.mxu0 %v697
  %1112 = vmatprep.subr.bf16.mxu0 0
  %1113 = vmatpush1.bf16.msra.mxu0 %v696
  %1114 = vmatprep.subr.bf16.mxu0 0
  %1115 = vmatpush1.bf16.msra.mxu0 %v695
  %1116 = vmatprep.subr.bf16.mxu0 0
  %1117 = vmatpush1.bf16.msra.mxu0 %v694
  %1118 = vmatprep.subr.bf16.mxu0 0
  %1119 = vmatpush1.bf16.msra.mxu0 %v693
  %1120 = vmatprep.subr.bf16.mxu0 0
  %1121 = vmatpush1.bf16.msra.mxu0 %v692
  %1122 = vmatprep.subr.bf16.mxu0 0
  %1123 = vmatpush1.bf16.msra.mxu0 %v691
  %1124 = vmatprep.subr.bf16.mxu0 0
  %1125 = vmatpush1.bf16.msra.mxu0 %v690
  %1126 = vmatprep.subr.bf16.mxu0 0
  %1127 = vmatpush2.bf16.msra.mxu0 %v705
  %1128 = vmatprep.subr.bf16.mxu0 0
  %1129 = vmatpush2.bf16.msra.mxu0 %v704
  %1130 = vmatprep.subr.bf16.mxu0 0
  %1131 = vmatpush2.bf16.msra.mxu0 %v703
  %1132 = vmatprep.subr.bf16.mxu0 0
  %1133 = vmatpush2.bf16.msra.mxu0 %v702
  %1134 = vmatprep.subr.bf16.mxu0 0
  %1135 = vmatpush2.bf16.msra.mxu0 %v701
  %1136 = vmatprep.subr.bf16.mxu0 0
  %1137 = vmatpush2.bf16.msra.mxu0 %v700
  %1138 = vmatprep.subr.bf16.mxu0 0
  %1139 = vmatpush2.bf16.msra.mxu0 %v699
  %1140 = vmatprep.subr.bf16.mxu0 0
  %1141 = vmatpush2.bf16.msra.mxu0 %v698
  %1142 = vmatprep.mubr.bf16.mxu0 %v1065
  %1143 = vmatmul.mubr.bf16.gmra.mxu0 %v1064
  %v1144 = vpop.f32.mrf.mxu0
  %v1145 = vadd.f32 %v1105, %v1144
  %v1146 = vpop.f32.mrf.mxu0
  %v1147 = vpop.f32.mrf.mxu0
  %v1148 = vpop.f32.mrf.mxu0
  %1149 = vdwg.mxu0
  %v1150 = vmax.f32 %v1145, 0.0
  %v1153 = vrot.slane %v363, 7
  %v1154 = vsel %vm435, %v1153, %v355
  %v1156 = vrot.slane %v355, 1
  %v1157 = vsel %vm435, %v363, %v1156
  %1158 = vrot.lane.b32.xlu0 %v1157, 32
  %v1159 = vpop.permute.xlu0 %1158
  %v1161 = vrot.slane %v355, 2
  %v1162 = vrot.slane %v363, 1
  %v1163 = vsel %vm435, %v1162, %v1161
  %1164 = vrot.lane.b32.xlu0 %v1163, 64
  %v1165 = vpop.permute.xlu0 %1164
  %v1167 = vrot.slane %v355, 3
  %v1168 = vrot.slane %v363, 2
  %v1169 = vsel %vm435, %v1168, %v1167
  %1170 = vrot.lane.b32.xlu0 %v1169, 96
  %v1171 = vpop.permute.xlu0 %1170
  %v1175 = vrot.slane %v364, 7
  %v1176 = vsel %vm435, %v1175, %v356
  %v1178 = vrot.slane %v356, 1
  %v1179 = vsel %vm435, %v364, %v1178
  %1180 = vrot.lane.b32.xlu0 %v1179, 32
  %v1181 = vpop.permute.xlu0 %1180
  %v1183 = vrot.slane %v356, 2
  %v1184 = vrot.slane %v364, 1
  %v1185 = vsel %vm435, %v1184, %v1183
  %1186 = vrot.lane.b32.xlu0 %v1185, 64
  %v1187 = vpop.permute.xlu0 %1186
  %v1189 = vrot.slane %v356, 3
  %v1190 = vrot.slane %v364, 2
  %v1191 = vsel %vm435, %v1190, %v1189
  %1192 = vrot.lane.b32.xlu0 %v1191, 96
  %v1193 = vpop.permute.xlu0 %1192
  %v1195 = vsel %vm521, %v1154, %v1159
  %v1196 = vsel %vm523, %v1195, %v1165
  %v1197 = vsel %vm525, %v1196, %v1171
  %v1198 = vsel %vm521, %v1176, %v1181
  %v1199 = vsel %vm523, %v1198, %v1187
  %v1200 = vsel %vm525, %v1199, %v1193
  %v1201 = vpack.c.bf16 %v1197, %v1197
  %v1202 = vpack.c.bf16 %v1200, %v1200
  %1203 = vmatprep.subr.bf16.mxu0 0
  %1204 = vmatpush1.bf16.msra.mxu0 %v681
  %1205 = vmatprep.subr.bf16.mxu0 0
  %1206 = vmatpush1.bf16.msra.mxu0 %v680
  %1207 = vmatprep.subr.bf16.mxu0 0
  %1208 = vmatpush1.bf16.msra.mxu0 %v679
  %1209 = vmatprep.subr.bf16.mxu0 0
  %1210 = vmatpush1.bf16.msra.mxu0 %v678
  %1211 = vmatprep.subr.bf16.mxu0 0
  %1212 = vmatpush1.bf16.msra.mxu0 %v677
  %1213 = vmatprep.subr.bf16.mxu0 0
  %1214 = vmatpush1.bf16.msra.mxu0 %v676
  %1215 = vmatprep.subr.bf16.mxu0 0
  %1216 = vmatpush1.bf16.msra.mxu0 %v675
  %1217 = vmatprep.subr.bf16.mxu0 0
  %1218 = vmatpush1.bf16.msra.mxu0 %v674
  %1219 = vmatprep.subr.bf16.mxu0 0
  %1220 = vmatpush2.bf16.msra.mxu0 %v689
  %1221 = vmatprep.subr.bf16.mxu0 0
  %1222 = vmatpush2.bf16.msra.mxu0 %v688
  %1223 = vmatprep.subr.bf16.mxu0 0
  %1224 = vmatpush2.bf16.msra.mxu0 %v687
  %1225 = vmatprep.subr.bf16.mxu0 0
  %1226 = vmatpush2.bf16.msra.mxu0 %v686
  %1227 = vmatprep.subr.bf16.mxu0 0
  %1228 = vmatpush2.bf16.msra.mxu0 %v685
  %1229 = vmatprep.subr.bf16.mxu0 0
  %1230 = vmatpush2.bf16.msra.mxu0 %v684
  %1231 = vmatprep.subr.bf16.mxu0 0
  %1232 = vmatpush2.bf16.msra.mxu0 %v683
  %1233 = vmatprep.subr.bf16.mxu0 0
  %1234 = vmatpush2.bf16.msra.mxu0 %v682
  %1235 = vmatprep.mubr.bf16.mxu0 %v539
  %1236 = vmatmul.mubr.bf16.gmra.mxu0 %v538
  %v1237 = vpop.f32.mrf.mxu0
  %v1238 = vadd.f32 %v544, %v1237
  %v1239 = vpop.f32.mrf.mxu0
  %v1240 = vpop.f32.mrf.mxu0
  %v1241 = vpop.f32.mrf.mxu0
  %1242 = vdwg.mxu0
  %1243 = vmatprep.subr.bf16.mxu0 0
  %1244 = vmatpush1.bf16.msra.mxu0 %v697
  %1245 = vmatprep.subr.bf16.mxu0 0
  %1246 = vmatpush1.bf16.msra.mxu0 %v696
  %1247 = vmatprep.subr.bf16.mxu0 0
  %1248 = vmatpush1.bf16.msra.mxu0 %v695
  %1249 = vmatprep.subr.bf16.mxu0 0
  %1250 = vmatpush1.bf16.msra.mxu0 %v694
  %1251 = vmatprep.subr.bf16.mxu0 0
  %1252 = vmatpush1.bf16.msra.mxu0 %v693
  %1253 = vmatprep.subr.bf16.mxu0 0
  %1254 = vmatpush1.bf16.msra.mxu0 %v692
  %1255 = vmatprep.subr.bf16.mxu0 0
  %1256 = vmatpush1.bf16.msra.mxu0 %v691
  %1257 = vmatprep.subr.bf16.mxu0 0
  %1258 = vmatpush1.bf16.msra.mxu0 %v690
  %1259 = vmatprep.subr.bf16.mxu0 0
  %1260 = vmatpush2.bf16.msra.mxu0 %v705
  %1261 = vmatprep.subr.bf16.mxu0 0
  %1262 = vmatpush2.bf16.msra.mxu0 %v704
  %1263 = vmatprep.subr.bf16.mxu0 0
  %1264 = vmatpush2.bf16.msra.mxu0 %v703
  %1265 = vmatprep.subr.bf16.mxu0 0
  %1266 = vmatpush2.bf16.msra.mxu0 %v702
  %1267 = vmatprep.subr.bf16.mxu0 0
  %1268 = vmatpush2.bf16.msra.mxu0 %v701
  %1269 = vmatprep.subr.bf16.mxu0 0
  %1270 = vmatpush2.bf16.msra.mxu0 %v700
  %1271 = vmatprep.subr.bf16.mxu0 0
  %1272 = vmatpush2.bf16.msra.mxu0 %v699
  %1273 = vmatprep.subr.bf16.mxu0 0
  %1274 = vmatpush2.bf16.msra.mxu0 %v698
  %1275 = vmatprep.mubr.bf16.mxu0 %v1202
  %1276 = vmatmul.mubr.bf16.gmra.mxu0 %v1201
  %v1277 = vpop.f32.mrf.mxu0
  %v1278 = vadd.f32 %v1238, %v1277
  %v1279 = vpop.f32.mrf.mxu0
  %v1280 = vpop.f32.mrf.mxu0
  %v1281 = vpop.f32.mrf.mxu0
  %1282 = vdwg.mxu0
  %v1283 = vmax.f32 %v1278, 0.0
  %v1284 = vsel %vm819, %v1153, %v355
  %v1286 = vsel %vm819, %v363, %v1156
  %1287 = vrot.lane.b32.xlu0 %v1286, 32
  %v1288 = vpop.permute.xlu0 %1287
  %v1290 = vsel %vm819, %v1162, %v1161
  %1291 = vrot.lane.b32.xlu0 %v1290, 64
  %v1292 = vpop.permute.xlu0 %1291
  %v1294 = vsel %vm819, %v1168, %v1167
  %1295 = vrot.lane.b32.xlu0 %v1294, 96
  %v1296 = vpop.permute.xlu0 %1295
  %v1298 = vsel %vm819, %v1175, %v356
  %v1300 = vsel %vm819, %v364, %v1178
  %1301 = vrot.lane.b32.xlu0 %v1300, 32
  %v1302 = vpop.permute.xlu0 %1301
  %v1304 = vsel %vm819, %v1184, %v1183
  %1305 = vrot.lane.b32.xlu0 %v1304, 64
  %v1306 = vpop.permute.xlu0 %1305
  %v1308 = vsel %vm819, %v1190, %v1189
  %1309 = vrot.lane.b32.xlu0 %v1308, 96
  %v1310 = vpop.permute.xlu0 %1309
  %v1312 = vsel %vm521, %v1284, %v1288
  %v1313 = vsel %vm523, %v1312, %v1292
  %v1314 = vsel %vm525, %v1313, %v1296
  %v1315 = vsel %vm521, %v1298, %v1302
  %v1316 = vsel %vm523, %v1315, %v1306
  %v1317 = vsel %vm525, %v1316, %v1310
  %v1318 = vpack.c.bf16 %v1314, %v1314
  %v1319 = vpack.c.bf16 %v1317, %v1317
  %v1322 = vrot.slane %v1318, 1
  %v1323 = vrot.slane %v1319, 1
  %1326 = vmatprep.subr.bf16.mxu0 0
  %1327 = vmatpush1.bf16.msra.mxu0 %v681
  %1328 = vmatprep.subr.bf16.mxu0 0
  %1329 = vmatpush1.bf16.msra.mxu0 %v680
  %1330 = vmatprep.subr.bf16.mxu0 0
  %1331 = vmatpush1.bf16.msra.mxu0 %v679
  %1332 = vmatprep.subr.bf16.mxu0 0
  %1333 = vmatpush1.bf16.msra.mxu0 %v678
  %1334 = vmatprep.subr.bf16.mxu0 0
  %1335 = vmatpush1.bf16.msra.mxu0 %v677
  %1336 = vmatprep.subr.bf16.mxu0 0
  %1337 = vmatpush1.bf16.msra.mxu0 %v676
  %1338 = vmatprep.subr.bf16.mxu0 0
  %1339 = vmatpush1.bf16.msra.mxu0 %v675
  %1340 = vmatprep.subr.bf16.mxu0 0
  %1341 = vmatpush1.bf16.msra.mxu0 %v674
  %1342 = vmatprep.subr.bf16.mxu0 0
  %1343 = vmatpush2.bf16.msra.mxu0 %v689
  %1344 = vmatprep.subr.bf16.mxu0 0
  %1345 = vmatpush2.bf16.msra.mxu0 %v688
  %1346 = vmatprep.subr.bf16.mxu0 0
  %1347 = vmatpush2.bf16.msra.mxu0 %v687
  %1348 = vmatprep.subr.bf16.mxu0 0
  %1349 = vmatpush2.bf16.msra.mxu0 %v686
  %1350 = vmatprep.subr.bf16.mxu0 0
  %1351 = vmatpush2.bf16.msra.mxu0 %v685
  %1352 = vmatprep.subr.bf16.mxu0 0
  %1353 = vmatpush2.bf16.msra.mxu0 %v684
  %1354 = vmatprep.subr.bf16.mxu0 0
  %1355 = vmatpush2.bf16.msra.mxu0 %v683
  %1356 = vmatprep.subr.bf16.mxu0 0
  %1357 = vmatpush2.bf16.msra.mxu0 %v682
  %1358 = vmatprep.mubr.bf16.mxu0 %v899
  %1359 = vmatmul.mubr.bf16.gmra.mxu0 %v898
  %v1360 = vpop.f32.mrf.mxu0
  %v1361 = vadd.f32 %v544, %v1360
  %v1362 = vpop.f32.mrf.mxu0
  %v1363 = vpop.f32.mrf.mxu0
  %v1364 = vpop.f32.mrf.mxu0
  %1365 = vdwg.mxu0
  %1366 = vmatprep.subr.bf16.mxu0 0
  %1367 = vmatpush1.bf16.msra.mxu0 %v697
  %1368 = vmatprep.subr.bf16.mxu0 0
  %1369 = vmatpush1.bf16.msra.mxu0 %v696
  %1370 = vmatprep.subr.bf16.mxu0 0
  %1371 = vmatpush1.bf16.msra.mxu0 %v695
  %1372 = vmatprep.subr.bf16.mxu0 0
  %1373 = vmatpush1.bf16.msra.mxu0 %v694
  %1374 = vmatprep.subr.bf16.mxu0 0
  %1375 = vmatpush1.bf16.msra.mxu0 %v693
  %1376 = vmatprep.subr.bf16.mxu0 0
  %1377 = vmatpush1.bf16.msra.mxu0 %v692
  %1378 = vmatprep.subr.bf16.mxu0 0
  %1379 = vmatpush1.bf16.msra.mxu0 %v691
  %1380 = vmatprep.subr.bf16.mxu0 0
  %1381 = vmatpush1.bf16.msra.mxu0 %v690
  %1382 = vmatprep.subr.bf16.mxu0 0
  %1383 = vmatpush2.bf16.msra.mxu0 %v705
  %1384 = vmatprep.subr.bf16.mxu0 0
  %1385 = vmatpush2.bf16.msra.mxu0 %v704
  %1386 = vmatprep.subr.bf16.mxu0 0
  %1387 = vmatpush2.bf16.msra.mxu0 %v703
  %1388 = vmatprep.subr.bf16.mxu0 0
  %1389 = vmatpush2.bf16.msra.mxu0 %v702
  %1390 = vmatprep.subr.bf16.mxu0 0
  %1391 = vmatpush2.bf16.msra.mxu0 %v701
  %1392 = vmatprep.subr.bf16.mxu0 0
  %1393 = vmatpush2.bf16.msra.mxu0 %v700
  %1394 = vmatprep.subr.bf16.mxu0 0
  %1395 = vmatpush2.bf16.msra.mxu0 %v699
  %1396 = vmatprep.subr.bf16.mxu0 0
  %1397 = vmatpush2.bf16.msra.mxu0 %v698
  %1398 = vmatprep.mubr.bf16.mxu0 %v1323
  %1399 = vmatmul.mubr.bf16.gmra.mxu0 %v1322
  %v1400 = vpop.f32.mrf.mxu0
  %v1401 = vadd.f32 %v1361, %v1400
  %v1402 = vpop.f32.mrf.mxu0
  %v1403 = vpop.f32.mrf.mxu0
  %v1404 = vpop.f32.mrf.mxu0
  %1405 = vdwg.mxu0
  %v1406 = vmax.f32 %v1401, 0.0
  %v1407 = vsel %vm985, %v1153, %v355
  %v1409 = vsel %vm985, %v363, %v1156
  %1410 = vrot.lane.b32.xlu0 %v1409, 32
  %v1411 = vpop.permute.xlu0 %1410
  %v1413 = vsel %vm985, %v1162, %v1161
  %1414 = vrot.lane.b32.xlu0 %v1413, 64
  %v1415 = vpop.permute.xlu0 %1414
  %v1417 = vsel %vm985, %v1168, %v1167
  %1418 = vrot.lane.b32.xlu0 %v1417, 96
  %v1419 = vpop.permute.xlu0 %1418
  %v1421 = vsel %vm985, %v1175, %v356
  %v1423 = vsel %vm985, %v364, %v1178
  %1424 = vrot.lane.b32.xlu0 %v1423, 32
  %v1425 = vpop.permute.xlu0 %1424
  %v1427 = vsel %vm985, %v1184, %v1183
  %1428 = vrot.lane.b32.xlu0 %v1427, 64
  %v1429 = vpop.permute.xlu0 %1428
  %v1431 = vsel %vm985, %v1190, %v1189
  %1432 = vrot.lane.b32.xlu0 %v1431, 96
  %v1433 = vpop.permute.xlu0 %1432
  %v1435 = vsel %vm521, %v1407, %v1411
  %v1436 = vsel %vm523, %v1435, %v1415
  %v1437 = vsel %vm525, %v1436, %v1419
  %v1438 = vsel %vm521, %v1421, %v1425
  %v1439 = vsel %vm523, %v1438, %v1429
  %v1440 = vsel %vm525, %v1439, %v1433
  %v1441 = vpack.c.bf16 %v1437, %v1437
  %v1442 = vpack.c.bf16 %v1440, %v1440
  %v1445 = vrot.slane %v1441, 2
  %v1446 = vrot.slane %v1442, 2
  %1449 = vmatprep.subr.bf16.mxu0 0
  %1450 = vmatpush1.bf16.msra.mxu0 %v681
  %1451 = vmatprep.subr.bf16.mxu0 0
  %1452 = vmatpush1.bf16.msra.mxu0 %v680
  %1453 = vmatprep.subr.bf16.mxu0 0
  %1454 = vmatpush1.bf16.msra.mxu0 %v679
  %1455 = vmatprep.subr.bf16.mxu0 0
  %1456 = vmatpush1.bf16.msra.mxu0 %v678
  %1457 = vmatprep.subr.bf16.mxu0 0
  %1458 = vmatpush1.bf16.msra.mxu0 %v677
  %1459 = vmatprep.subr.bf16.mxu0 0
  %1460 = vmatpush1.bf16.msra.mxu0 %v676
  %1461 = vmatprep.subr.bf16.mxu0 0
  %1462 = vmatpush1.bf16.msra.mxu0 %v675
  %1463 = vmatprep.subr.bf16.mxu0 0
  %1464 = vmatpush1.bf16.msra.mxu0 %v674
  %1465 = vmatprep.subr.bf16.mxu0 0
  %1466 = vmatpush2.bf16.msra.mxu0 %v689
  %1467 = vmatprep.subr.bf16.mxu0 0
  %1468 = vmatpush2.bf16.msra.mxu0 %v688
  %1469 = vmatprep.subr.bf16.mxu0 0
  %1470 = vmatpush2.bf16.msra.mxu0 %v687
  %1471 = vmatprep.subr.bf16.mxu0 0
  %1472 = vmatpush2.bf16.msra.mxu0 %v686
  %1473 = vmatprep.subr.bf16.mxu0 0
  %1474 = vmatpush2.bf16.msra.mxu0 %v685
  %1475 = vmatprep.subr.bf16.mxu0 0
  %1476 = vmatpush2.bf16.msra.mxu0 %v684
  %1477 = vmatprep.subr.bf16.mxu0 0
  %1478 = vmatpush2.bf16.msra.mxu0 %v683
  %1479 = vmatprep.subr.bf16.mxu0 0
  %1480 = vmatpush2.bf16.msra.mxu0 %v682
  %1481 = vmatprep.mubr.bf16.mxu0 %v1065
  %1482 = vmatmul.mubr.bf16.gmra.mxu0 %v1064
  %v1483 = vpop.f32.mrf.mxu0
  %v1484 = vadd.f32 %v544, %v1483
  %v1485 = vpop.f32.mrf.mxu0
  %v1486 = vpop.f32.mrf.mxu0
  %v1487 = vpop.f32.mrf.mxu0
  %1488 = vdwg.mxu0
  %1489 = vmatprep.subr.bf16.mxu0 0
  %1490 = vmatpush1.bf16.msra.mxu0 %v697
  %1491 = vmatprep.subr.bf16.mxu0 0
  %1492 = vmatpush1.bf16.msra.mxu0 %v696
  %1493 = vmatprep.subr.bf16.mxu0 0
  %1494 = vmatpush1.bf16.msra.mxu0 %v695
  %1495 = vmatprep.subr.bf16.mxu0 0
  %1496 = vmatpush1.bf16.msra.mxu0 %v694
  %1497 = vmatprep.subr.bf16.mxu0 0
  %1498 = vmatpush1.bf16.msra.mxu0 %v693
  %1499 = vmatprep.subr.bf16.mxu0 0
  %1500 = vmatpush1.bf16.msra.mxu0 %v692
  %1501 = vmatprep.subr.bf16.mxu0 0
  %1502 = vmatpush1.bf16.msra.mxu0 %v691
  %1503 = vmatprep.subr.bf16.mxu0 0
  %1504 = vmatpush1.bf16.msra.mxu0 %v690
  %1505 = vmatprep.subr.bf16.mxu0 0
  %1506 = vmatpush2.bf16.msra.mxu0 %v705
  %1507 = vmatprep.subr.bf16.mxu0 0
  %1508 = vmatpush2.bf16.msra.mxu0 %v704
  %1509 = vmatprep.subr.bf16.mxu0 0
  %1510 = vmatpush2.bf16.msra.mxu0 %v703
  %1511 = vmatprep.subr.bf16.mxu0 0
  %1512 = vmatpush2.bf16.msra.mxu0 %v702
  %1513 = vmatprep.subr.bf16.mxu0 0
  %1514 = vmatpush2.bf16.msra.mxu0 %v701
  %1515 = vmatprep.subr.bf16.mxu0 0
  %1516 = vmatpush2.bf16.msra.mxu0 %v700
  %1517 = vmatprep.subr.bf16.mxu0 0
  %1518 = vmatpush2.bf16.msra.mxu0 %v699
  %1519 = vmatprep.subr.bf16.mxu0 0
  %1520 = vmatpush2.bf16.msra.mxu0 %v698
  %1521 = vmatprep.mubr.bf16.mxu0 %v1446
  %1522 = vmatmul.mubr.bf16.gmra.mxu0 %v1445
  %v1523 = vpop.f32.mrf.mxu0
  %v1524 = vadd.f32 %v1484, %v1523
  %v1525 = vpop.f32.mrf.mxu0
  %v1526 = vpop.f32.mrf.mxu0
  %v1527 = vpop.f32.mrf.mxu0
  %1528 = vdwg.mxu0
  %v1529 = vmax.f32 %v1524, 0.0
  %v1532 = vrot.slane %v365, 7
  %v1533 = vsel %vm435, %v1532, %v357
  %v1535 = vrot.slane %v357, 1
  %v1536 = vsel %vm435, %v365, %v1535
  %1537 = vrot.lane.b32.xlu0 %v1536, 32
  %v1538 = vpop.permute.xlu0 %1537
  %v1540 = vrot.slane %v357, 2
  %v1541 = vrot.slane %v365, 1
  %v1542 = vsel %vm435, %v1541, %v1540
  %1543 = vrot.lane.b32.xlu0 %v1542, 64
  %v1544 = vpop.permute.xlu0 %1543
  %v1546 = vrot.slane %v357, 3
  %v1547 = vrot.slane %v365, 2
  %v1548 = vsel %vm435, %v1547, %v1546
  %1549 = vrot.lane.b32.xlu0 %v1548, 96
  %v1550 = vpop.permute.xlu0 %1549
  %v1554 = vrot.slane %v366, 7
  %v1555 = vsel %vm435, %v1554, %v358
  %v1557 = vrot.slane %v358, 1
  %v1558 = vsel %vm435, %v366, %v1557
  %1559 = vrot.lane.b32.xlu0 %v1558, 32
  %v1560 = vpop.permute.xlu0 %1559
  %v1562 = vrot.slane %v358, 2
  %v1563 = vrot.slane %v366, 1
  %v1564 = vsel %vm435, %v1563, %v1562
  %1565 = vrot.lane.b32.xlu0 %v1564, 64
  %v1566 = vpop.permute.xlu0 %1565
  %v1568 = vrot.slane %v358, 3
  %v1569 = vrot.slane %v366, 2
  %v1570 = vsel %vm435, %v1569, %v1568
  %1571 = vrot.lane.b32.xlu0 %v1570, 96
  %v1572 = vpop.permute.xlu0 %1571
  %v1574 = vsel %vm521, %v1533, %v1538
  %v1575 = vsel %vm523, %v1574, %v1544
  %v1576 = vsel %vm525, %v1575, %v1550
  %v1577 = vsel %vm521, %v1555, %v1560
  %v1578 = vsel %vm523, %v1577, %v1566
  %v1579 = vsel %vm525, %v1578, %v1572
  %v1580 = vpack.c.bf16 %v1576, %v1576
  %v1581 = vpack.c.bf16 %v1579, %v1579
  %1582 = vmatprep.subr.bf16.mxu0 0
  %1583 = vmatpush1.bf16.msra.mxu0 %v681
  %1584 = vmatprep.subr.bf16.mxu0 0
  %1585 = vmatpush1.bf16.msra.mxu0 %v680
  %1586 = vmatprep.subr.bf16.mxu0 0
  %1587 = vmatpush1.bf16.msra.mxu0 %v679
  %1588 = vmatprep.subr.bf16.mxu0 0
  %1589 = vmatpush1.bf16.msra.mxu0 %v678
  %1590 = vmatprep.subr.bf16.mxu0 0
  %1591 = vmatpush1.bf16.msra.mxu0 %v677
  %1592 = vmatprep.subr.bf16.mxu0 0
  %1593 = vmatpush1.bf16.msra.mxu0 %v676
  %1594 = vmatprep.subr.bf16.mxu0 0
  %1595 = vmatpush1.bf16.msra.mxu0 %v675
  %1596 = vmatprep.subr.bf16.mxu0 0
  %1597 = vmatpush1.bf16.msra.mxu0 %v674
  %1598 = vmatprep.subr.bf16.mxu0 0
  %1599 = vmatpush2.bf16.msra.mxu0 %v689
  %1600 = vmatprep.subr.bf16.mxu0 0
  %1601 = vmatpush2.bf16.msra.mxu0 %v688
  %1602 = vmatprep.subr.bf16.mxu0 0
  %1603 = vmatpush2.bf16.msra.mxu0 %v687
  %1604 = vmatprep.subr.bf16.mxu0 0
  %1605 = vmatpush2.bf16.msra.mxu0 %v686
  %1606 = vmatprep.subr.bf16.mxu0 0
  %1607 = vmatpush2.bf16.msra.mxu0 %v685
  %1608 = vmatprep.subr.bf16.mxu0 0
  %1609 = vmatpush2.bf16.msra.mxu0 %v684
  %1610 = vmatprep.subr.bf16.mxu0 0
  %1611 = vmatpush2.bf16.msra.mxu0 %v683
  %1612 = vmatprep.subr.bf16.mxu0 0
  %1613 = vmatpush2.bf16.msra.mxu0 %v682
  %1614 = vmatprep.mubr.bf16.mxu0 %v1202
  %1615 = vmatmul.mubr.bf16.gmra.mxu0 %v1201
  %v1616 = vpop.f32.mrf.mxu0
  %v1617 = vadd.f32 %v544, %v1616
  %v1618 = vpop.f32.mrf.mxu0
  %v1619 = vpop.f32.mrf.mxu0
  %v1620 = vpop.f32.mrf.mxu0
  %1621 = vdwg.mxu0
  %1622 = vmatprep.subr.bf16.mxu0 0
  %1623 = vmatpush1.bf16.msra.mxu0 %v697
  %1624 = vmatprep.subr.bf16.mxu0 0
  %1625 = vmatpush1.bf16.msra.mxu0 %v696
  %1626 = vmatprep.subr.bf16.mxu0 0
  %1627 = vmatpush1.bf16.msra.mxu0 %v695
  %1628 = vmatprep.subr.bf16.mxu0 0
  %1629 = vmatpush1.bf16.msra.mxu0 %v694
  %1630 = vmatprep.subr.bf16.mxu0 0
  %1631 = vmatpush1.bf16.msra.mxu0 %v693
  %1632 = vmatprep.subr.bf16.mxu0 0
  %1633 = vmatpush1.bf16.msra.mxu0 %v692
  %1634 = vmatprep.subr.bf16.mxu0 0
  %1635 = vmatpush1.bf16.msra.mxu0 %v691
  %1636 = vmatprep.subr.bf16.mxu0 0
  %1637 = vmatpush1.bf16.msra.mxu0 %v690
  %1638 = vmatprep.subr.bf16.mxu0 0
  %1639 = vmatpush2.bf16.msra.mxu0 %v705
  %1640 = vmatprep.subr.bf16.mxu0 0
  %1641 = vmatpush2.bf16.msra.mxu0 %v704
  %1642 = vmatprep.subr.bf16.mxu0 0
  %1643 = vmatpush2.bf16.msra.mxu0 %v703
  %1644 = vmatprep.subr.bf16.mxu0 0
  %1645 = vmatpush2.bf16.msra.mxu0 %v702
  %1646 = vmatprep.subr.bf16.mxu0 0
  %1647 = vmatpush2.bf16.msra.mxu0 %v701
  %1648 = vmatprep.subr.bf16.mxu0 0
  %1649 = vmatpush2.bf16.msra.mxu0 %v700
  %1650 = vmatprep.subr.bf16.mxu0 0
  %1651 = vmatpush2.bf16.msra.mxu0 %v699
  %1652 = vmatprep.subr.bf16.mxu0 0
  %1653 = vmatpush2.bf16.msra.mxu0 %v698
  %1654 = vmatprep.mubr.bf16.mxu0 %v1581
  %1655 = vmatmul.mubr.bf16.gmra.mxu0 %v1580
  %v1656 = vpop.f32.mrf.mxu0
  %v1657 = vadd.f32 %v1617, %v1656
  %v1658 = vpop.f32.mrf.mxu0
  %v1659 = vpop.f32.mrf.mxu0
  %v1660 = vpop.f32.mrf.mxu0
  %1661 = vdwg.mxu0
  %v1662 = vmax.f32 %v1657, 0.0
  %v1663 = vsel %vm819, %v1532, %v357
  %v1665 = vsel %vm819, %v365, %v1535
  %1666 = vrot.lane.b32.xlu0 %v1665, 32
  %v1667 = vpop.permute.xlu0 %1666
  %v1669 = vsel %vm819, %v1541, %v1540
  %1670 = vrot.lane.b32.xlu0 %v1669, 64
  %v1671 = vpop.permute.xlu0 %1670
  %v1673 = vsel %vm819, %v1547, %v1546
  %1674 = vrot.lane.b32.xlu0 %v1673, 96
  %v1675 = vpop.permute.xlu0 %1674
  %v1677 = vsel %vm819, %v1554, %v358
  %v1679 = vsel %vm819, %v366, %v1557
  %1680 = vrot.lane.b32.xlu0 %v1679, 32
  %v1681 = vpop.permute.xlu0 %1680
  %v1683 = vsel %vm819, %v1563, %v1562
  %1684 = vrot.lane.b32.xlu0 %v1683, 64
  %v1685 = vpop.permute.xlu0 %1684
  %v1687 = vsel %vm819, %v1569, %v1568
  %1688 = vrot.lane.b32.xlu0 %v1687, 96
  %v1689 = vpop.permute.xlu0 %1688
  %v1691 = vsel %vm521, %v1663, %v1667
  %v1692 = vsel %vm523, %v1691, %v1671
  %v1693 = vsel %vm525, %v1692, %v1675
  %v1694 = vsel %vm521, %v1677, %v1681
  %v1695 = vsel %vm523, %v1694, %v1685
  %v1696 = vsel %vm525, %v1695, %v1689
  %v1697 = vpack.c.bf16 %v1693, %v1693
  %v1698 = vpack.c.bf16 %v1696, %v1696
  %v1701 = vrot.slane %v1697, 1
  %v1702 = vrot.slane %v1698, 1
  %1705 = vmatprep.subr.bf16.mxu0 0
  %1706 = vmatpush1.bf16.msra.mxu0 %v681
  %1707 = vmatprep.subr.bf16.mxu0 0
  %1708 = vmatpush1.bf16.msra.mxu0 %v680
  %1709 = vmatprep.subr.bf16.mxu0 0
  %1710 = vmatpush1.bf16.msra.mxu0 %v679
  %1711 = vmatprep.subr.bf16.mxu0 0
  %1712 = vmatpush1.bf16.msra.mxu0 %v678
  %1713 = vmatprep.subr.bf16.mxu0 0
  %1714 = vmatpush1.bf16.msra.mxu0 %v677
  %1715 = vmatprep.subr.bf16.mxu0 0
  %1716 = vmatpush1.bf16.msra.mxu0 %v676
  %1717 = vmatprep.subr.bf16.mxu0 0
  %1718 = vmatpush1.bf16.msra.mxu0 %v675
  %1719 = vmatprep.subr.bf16.mxu0 0
  %1720 = vmatpush1.bf16.msra.mxu0 %v674
  %1721 = vmatprep.subr.bf16.mxu0 0
  %1722 = vmatpush2.bf16.msra.mxu0 %v689
  %1723 = vmatprep.subr.bf16.mxu0 0
  %1724 = vmatpush2.bf16.msra.mxu0 %v688
  %1725 = vmatprep.subr.bf16.mxu0 0
  %1726 = vmatpush2.bf16.msra.mxu0 %v687
  %1727 = vmatprep.subr.bf16.mxu0 0
  %1728 = vmatpush2.bf16.msra.mxu0 %v686
  %1729 = vmatprep.subr.bf16.mxu0 0
  %1730 = vmatpush2.bf16.msra.mxu0 %v685
  %1731 = vmatprep.subr.bf16.mxu0 0
  %1732 = vmatpush2.bf16.msra.mxu0 %v684
  %1733 = vmatprep.subr.bf16.mxu0 0
  %1734 = vmatpush2.bf16.msra.mxu0 %v683
  %1735 = vmatprep.subr.bf16.mxu0 0
  %1736 = vmatpush2.bf16.msra.mxu0 %v682
  %1737 = vmatprep.mubr.bf16.mxu0 %v1323
  %1738 = vmatmul.mubr.bf16.gmra.mxu0 %v1322
  %v1739 = vpop.f32.mrf.mxu0
  %v1740 = vadd.f32 %v544, %v1739
  %v1741 = vpop.f32.mrf.mxu0
  %v1742 = vpop.f32.mrf.mxu0
  %v1743 = vpop.f32.mrf.mxu0
  %1744 = vdwg.mxu0
  %1745 = vmatprep.subr.bf16.mxu0 0
  %1746 = vmatpush1.bf16.msra.mxu0 %v697
  %1747 = vmatprep.subr.bf16.mxu0 0
  %1748 = vmatpush1.bf16.msra.mxu0 %v696
  %1749 = vmatprep.subr.bf16.mxu0 0
  %1750 = vmatpush1.bf16.msra.mxu0 %v695
  %1751 = vmatprep.subr.bf16.mxu0 0
  %1752 = vmatpush1.bf16.msra.mxu0 %v694
  %1753 = vmatprep.subr.bf16.mxu0 0
  %1754 = vmatpush1.bf16.msra.mxu0 %v693
  %1755 = vmatprep.subr.bf16.mxu0 0
  %1756 = vmatpush1.bf16.msra.mxu0 %v692
  %1757 = vmatprep.subr.bf16.mxu0 0
  %1758 = vmatpush1.bf16.msra.mxu0 %v691
  %1759 = vmatprep.subr.bf16.mxu0 0
  %1760 = vmatpush1.bf16.msra.mxu0 %v690
  %1761 = vmatprep.subr.bf16.mxu0 0
  %1762 = vmatpush2.bf16.msra.mxu0 %v705
  %1763 = vmatprep.subr.bf16.mxu0 0
  %1764 = vmatpush2.bf16.msra.mxu0 %v704
  %1765 = vmatprep.subr.bf16.mxu0 0
  %1766 = vmatpush2.bf16.msra.mxu0 %v703
  %1767 = vmatprep.subr.bf16.mxu0 0
  %1768 = vmatpush2.bf16.msra.mxu0 %v702
  %1769 = vmatprep.subr.bf16.mxu0 0
  %1770 = vmatpush2.bf16.msra.mxu0 %v701
  %1771 = vmatprep.subr.bf16.mxu0 0
  %1772 = vmatpush2.bf16.msra.mxu0 %v700
  %1773 = vmatprep.subr.bf16.mxu0 0
  %1774 = vmatpush2.bf16.msra.mxu0 %v699
  %1775 = vmatprep.subr.bf16.mxu0 0
  %1776 = vmatpush2.bf16.msra.mxu0 %v698
  %1777 = vmatprep.mubr.bf16.mxu0 %v1702
  %1778 = vmatmul.mubr.bf16.gmra.mxu0 %v1701
  %v1779 = vpop.f32.mrf.mxu0
  %v1780 = vadd.f32 %v1740, %v1779
  %v1781 = vpop.f32.mrf.mxu0
  %v1782 = vpop.f32.mrf.mxu0
  %v1783 = vpop.f32.mrf.mxu0
  %1784 = vdwg.mxu0
  %v1785 = vmax.f32 %v1780, 0.0
  %v1786 = vsel %vm985, %v1532, %v357
  %v1788 = vsel %vm985, %v365, %v1535
  %1789 = vrot.lane.b32.xlu0 %v1788, 32
  %v1790 = vpop.permute.xlu0 %1789
  %v1792 = vsel %vm985, %v1541, %v1540
  %1793 = vrot.lane.b32.xlu0 %v1792, 64
  %v1794 = vpop.permute.xlu0 %1793
  %v1796 = vsel %vm985, %v1547, %v1546
  %1797 = vrot.lane.b32.xlu0 %v1796, 96
  %v1798 = vpop.permute.xlu0 %1797
  %v1800 = vsel %vm985, %v1554, %v358
  %v1802 = vsel %vm985, %v366, %v1557
  %1803 = vrot.lane.b32.xlu0 %v1802, 32
  %v1804 = vpop.permute.xlu0 %1803
  %v1806 = vsel %vm985, %v1563, %v1562
  %1807 = vrot.lane.b32.xlu0 %v1806, 64
  %v1808 = vpop.permute.xlu0 %1807
  %v1810 = vsel %vm985, %v1569, %v1568
  %1811 = vrot.lane.b32.xlu0 %v1810, 96
  %v1812 = vpop.permute.xlu0 %1811
  %v1814 = vsel %vm521, %v1786, %v1790
  %v1815 = vsel %vm523, %v1814, %v1794
  %v1816 = vsel %vm525, %v1815, %v1798
  %v1817 = vsel %vm521, %v1800, %v1804
  %v1818 = vsel %vm523, %v1817, %v1808
  %v1819 = vsel %vm525, %v1818, %v1812
  %v1820 = vpack.c.bf16 %v1816, %v1816
  %v1821 = vpack.c.bf16 %v1819, %v1819
  %v1824 = vrot.slane %v1820, 2
  %v1825 = vrot.slane %v1821, 2
  %1828 = vmatprep.subr.bf16.mxu0 0
  %1829 = vmatpush1.bf16.msra.mxu0 %v681
  %1830 = vmatprep.subr.bf16.mxu0 0
  %1831 = vmatpush1.bf16.msra.mxu0 %v680
  %1832 = vmatprep.subr.bf16.mxu0 0
  %1833 = vmatpush1.bf16.msra.mxu0 %v679
  %1834 = vmatprep.subr.bf16.mxu0 0
  %1835 = vmatpush1.bf16.msra.mxu0 %v678
  %1836 = vmatprep.subr.bf16.mxu0 0
  %1837 = vmatpush1.bf16.msra.mxu0 %v677
  %1838 = vmatprep.subr.bf16.mxu0 0
  %1839 = vmatpush1.bf16.msra.mxu0 %v676
  %1840 = vmatprep.subr.bf16.mxu0 0
  %1841 = vmatpush1.bf16.msra.mxu0 %v675
  %1842 = vmatprep.subr.bf16.mxu0 0
  %1843 = vmatpush1.bf16.msra.mxu0 %v674
  %1844 = vmatprep.subr.bf16.mxu0 0
  %1845 = vmatpush2.bf16.msra.mxu0 %v689
  %1846 = vmatprep.subr.bf16.mxu0 0
  %1847 = vmatpush2.bf16.msra.mxu0 %v688
  %1848 = vmatprep.subr.bf16.mxu0 0
  %1849 = vmatpush2.bf16.msra.mxu0 %v687
  %1850 = vmatprep.subr.bf16.mxu0 0
  %1851 = vmatpush2.bf16.msra.mxu0 %v686
  %1852 = vmatprep.subr.bf16.mxu0 0
  %1853 = vmatpush2.bf16.msra.mxu0 %v685
  %1854 = vmatprep.subr.bf16.mxu0 0
  %1855 = vmatpush2.bf16.msra.mxu0 %v684
  %1856 = vmatprep.subr.bf16.mxu0 0
  %1857 = vmatpush2.bf16.msra.mxu0 %v683
  %1858 = vmatprep.subr.bf16.mxu0 0
  %1859 = vmatpush2.bf16.msra.mxu0 %v682
  %1860 = vmatprep.mubr.bf16.mxu0 %v1446
  %1861 = vmatmul.mubr.bf16.gmra.mxu0 %v1445
  %v1862 = vpop.f32.mrf.mxu0
  %v1863 = vadd.f32 %v544, %v1862
  %v1864 = vpop.f32.mrf.mxu0
  %v1865 = vpop.f32.mrf.mxu0
  %v1866 = vpop.f32.mrf.mxu0
  %1867 = vdwg.mxu0
  %1868 = vmatprep.subr.bf16.mxu0 0
  %1869 = vmatpush1.bf16.msra.mxu0 %v697
  %1870 = vmatprep.subr.bf16.mxu0 0
  %1871 = vmatpush1.bf16.msra.mxu0 %v696
  %1872 = vmatprep.subr.bf16.mxu0 0
  %1873 = vmatpush1.bf16.msra.mxu0 %v695
  %1874 = vmatprep.subr.bf16.mxu0 0
  %1875 = vmatpush1.bf16.msra.mxu0 %v694
  %1876 = vmatprep.subr.bf16.mxu0 0
  %1877 = vmatpush1.bf16.msra.mxu0 %v693
  %1878 = vmatprep.subr.bf16.mxu0 0
  %1879 = vmatpush1.bf16.msra.mxu0 %v692
  %1880 = vmatprep.subr.bf16.mxu0 0
  %1881 = vmatpush1.bf16.msra.mxu0 %v691
  %1882 = vmatprep.subr.bf16.mxu0 0
  %1883 = vmatpush1.bf16.msra.mxu0 %v690
  %1884 = vmatprep.subr.bf16.mxu0 0
  %1885 = vmatpush2.bf16.msra.mxu0 %v705
  %1886 = vmatprep.subr.bf16.mxu0 0
  %1887 = vmatpush2.bf16.msra.mxu0 %v704
  %1888 = vmatprep.subr.bf16.mxu0 0
  %1889 = vmatpush2.bf16.msra.mxu0 %v703
  %1890 = vmatprep.subr.bf16.mxu0 0
  %1891 = vmatpush2.bf16.msra.mxu0 %v702
  %1892 = vmatprep.subr.bf16.mxu0 0
  %1893 = vmatpush2.bf16.msra.mxu0 %v701
  %1894 = vmatprep.subr.bf16.mxu0 0
  %1895 = vmatpush2.bf16.msra.mxu0 %v700
  %1896 = vmatprep.subr.bf16.mxu0 0
  %1897 = vmatpush2.bf16.msra.mxu0 %v699
  %1898 = vmatprep.subr.bf16.mxu0 0
  %1899 = vmatpush2.bf16.msra.mxu0 %v698
  %1900 = vmatprep.mubr.bf16.mxu0 %v1825
  %1901 = vmatmul.mubr.bf16.gmra.mxu0 %v1824
  %v1902 = vpop.f32.mrf.mxu0
  %v1903 = vadd.f32 %v1863, %v1902
  %v1904 = vpop.f32.mrf.mxu0
  %v1905 = vpop.f32.mrf.mxu0
  %v1906 = vpop.f32.mrf.mxu0
  %1907 = vdwg.mxu0
  %v1908 = vmax.f32 %v1903, 0.0
  %v1909 = vld [vmem:[%s5] sm:$0xf]
  %v1910 = vld [vmem:[%s5 + $0x4] sm:$0xf]
  %v1911 = vld [vmem:[%s5 + $0x8] sm:$0xf]
  %v1912 = vld [vmem:[%s5 + $0xc] sm:$0xf]
  %v1913 = vld [vmem:[%s5 + $0x10] sm:$0xf]
  %v1914 = vld [vmem:[%s5 + $0x14] sm:$0xf]
  %v1915 = vld [vmem:[%s5 + $0x18] sm:$0xf]
  %v1916 = vld [vmem:[%s5 + $0x1c] sm:$0xf]
  %v1917 = vld [vmem:[%s5 + $0x20] sm:$0xf]
  %v1918 = vld [vmem:[%s5 + $0x24] sm:$0xf]
  %v1919 = vld [vmem:[%s5 + $0x28] sm:$0xf]
  %v1920 = vld [vmem:[%s5 + $0x2c] sm:$0xf]
  %v1921 = vld [vmem:[%s5 + $0x30] sm:$0xf]
  %v1922 = vld [vmem:[%s5 + $0x34] sm:$0xf]
  %v1923 = vld [vmem:[%s5 + $0x38] sm:$0xf]
  %v1924 = vld [vmem:[%s5 + $0x3c] sm:$0xf]
  %v1925 = vld [vmem:[%s5 + $0x40] sm:$0xf]
  %v1926 = vld [vmem:[%s5 + $0x44] sm:$0xf]
  %v1927 = vld [vmem:[%s5 + $0x48] sm:$0xf]
  %v1928 = vld [vmem:[%s5 + $0x4c] sm:$0xf]
  %v1929 = vld [vmem:[%s5 + $0x50] sm:$0xf]
  %v1930 = vld [vmem:[%s5 + $0x54] sm:$0xf]
  %v1931 = vld [vmem:[%s5 + $0x58] sm:$0xf]
  %v1932 = vld [vmem:[%s5 + $0x5c] sm:$0xf]
  %v1933 = vld [vmem:[%s5 + $0x60] sm:$0xf]
  %v1934 = vld [vmem:[%s5 + $0x64] sm:$0xf]
  %v1935 = vld [vmem:[%s5 + $0x68] sm:$0xf]
  %v1936 = vld [vmem:[%s5 + $0x6c] sm:$0xf]
  %v1937 = vld [vmem:[%s5 + $0x70] sm:$0xf]
  %v1938 = vld [vmem:[%s5 + $0x74] sm:$0xf]
  %v1939 = vld [vmem:[%s5 + $0x78] sm:$0xf]
  %v1940 = vld [vmem:[%s5 + $0x7c] sm:$0xf]
  %v1941 = vld [vmem:[%s5 + $0x80] sm:$0xf]
  %v1942 = vld [vmem:[%s5 + $0x84] sm:$0xf]
  %v1943 = vld [vmem:[%s5 + $0x88] sm:$0xf]
  %v1944 = vld [vmem:[%s5 + $0x8c] sm:$0xf]
  %v1945 = vld [vmem:[%s5 + $0x90] sm:$0xf]
  %v1946 = vld [vmem:[%s5 + $0x94] sm:$0xf]
  %v1947 = vld [vmem:[%s5 + $0x98] sm:$0xf]
  %v1948 = vld [vmem:[%s5 + $0x9c] sm:$0xf]
  %v1949 = vld [vmem:[%s5 + $0xa0] sm:$0xf]
  %v1950 = vld [vmem:[%s5 + $0xa4] sm:$0xf]
  %v1951 = vld [vmem:[%s5 + $0xa8] sm:$0xf]
  %v1952 = vld [vmem:[%s5 + $0xac] sm:$0xf]
  %v1953 = vld [vmem:[%s5 + $0xb0] sm:$0xf]
  %v1954 = vld [vmem:[%s5 + $0xb4] sm:$0xf]
  %v1955 = vld [vmem:[%s5 + $0xb8] sm:$0xf]
  %v1956 = vld [vmem:[%s5 + $0xbc] sm:$0xf]
  %v1957 = vld [vmem:[%s5 + $0xc0] sm:$0xf]
  %v1958 = vld [vmem:[%s5 + $0xc4] sm:$0xf]
  %v1959 = vld [vmem:[%s5 + $0xc8] sm:$0xf]
  %v1960 = vld [vmem:[%s5 + $0xcc] sm:$0xf]
  %v1961 = vld [vmem:[%s5 + $0xd0] sm:$0xf]
  %v1962 = vld [vmem:[%s5 + $0xd4] sm:$0xf]
  %v1963 = vld [vmem:[%s5 + $0xd8] sm:$0xf]
  %v1964 = vld [vmem:[%s5 + $0xdc] sm:$0xf]
  %v1965 = vld [vmem:[%s5 + $0xe0] sm:$0xf]
  %v1966 = vld [vmem:[%s5 + $0xe4] sm:$0xf]
  %v1967 = vld [vmem:[%s5 + $0xe8] sm:$0xf]
  %v1968 = vld [vmem:[%s5 + $0xec] sm:$0xf]
  %v1969 = vld [vmem:[%s5 + $0xf0] sm:$0xf]
  %v1970 = vld [vmem:[%s5 + $0xf4] sm:$0xf]
  %v1971 = vld [vmem:[%s5 + $0xf8] sm:$0xf]
  %v1972 = vld [vmem:[%s5 + $0xfc] sm:$0xf]
  %v1973 = vld [vmem:[%s5 + $0x100] sm:$0xf]
  %v1974 = vld [vmem:[%s5 + $0x104] sm:$0xf]
  %v1975 = vld [vmem:[%s5 + $0x108] sm:$0xf]
  %v1976 = vld [vmem:[%s5 + $0x10c] sm:$0xf]
  %v1977 = vld [vmem:[%s5 + $0x110] sm:$0xf]
  %v1978 = vld [vmem:[%s5 + $0x114] sm:$0xf]
  %v1979 = vld [vmem:[%s5 + $0x118] sm:$0xf]
  %v1980 = vld [vmem:[%s5 + $0x11c] sm:$0xf]
  %v1981 = vld [vmem:[%s6] sm:$0x1]
  %1983 = vrot.lane.b32.xlu0 %v984, 64
  %v1984 = vpop.permute.xlu0 %1983
  %1987 = vrot.lane.b32.xlu0 %v1283, 64
  %v1988 = vpop.permute.xlu0 %1987
  %1991 = vrot.lane.b32.xlu0 %v1529, 64
  %v1992 = vpop.permute.xlu0 %1991
  %1995 = vrot.lane.b32.xlu0 %v1785, 64
  %v1996 = vpop.permute.xlu0 %1995
  %v1998 = vsel %vm523, %v818, %v1984
  %v1999 = vsel %vm523, %v1150, %v1988
  %v2000 = vsel %vm523, %v1406, %v1992
  %v2001 = vsel %vm523, %v1662, %v1996
  %v2002 = vpack.c.bf16 %v1998, %v1998
  %v2003 = vpack.c.bf16 %v1999, %v1999
  %v2004 = vpack.c.bf16 %v2000, %v2000
  %v2005 = vpack.c.bf16 %v2001, %v2001
  %v2006 = vpack.c.bf16 %v1908, %v1908
  %v2008 = vlaneseq
  %v2009 = vshrl.u32 %v2008, 7
  %v2010 = vsub.s32 0, %v2009
  %v2011 = vrot.slane %v1981, %v2010
  %v2085 = vunpack.c.l.b16 %v1909
  %v2086 = vunpack.c.l.b16 %v1910
  %v2087 = vunpack.c.l.b16 %v1911
  %v2088 = vunpack.c.l.b16 %v1912
  %v2089 = vunpack.c.l.b16 %v1913
  %v2090 = vunpack.c.l.b16 %v1914
  %v2091 = vunpack.c.l.b16 %v1915
  %v2092 = vunpack.c.l.b16 %v1916
  %v2093 = vunpack.c.l.b16 %v1917
  %v2094 = vunpack.c.l.b16 %v1918
  %v2095 = vunpack.c.l.b16 %v1919
  %v2096 = vunpack.c.l.b16 %v1920
  %v2097 = vunpack.c.l.b16 %v1921
  %v2098 = vunpack.c.l.b16 %v1922
  %v2099 = vunpack.c.l.b16 %v1923
  %v2100 = vunpack.c.l.b16 %v1924
  %v2101 = vunpack.c.l.b16 %v1925
  %v2102 = vunpack.c.l.b16 %v1926
  %v2103 = vunpack.c.l.b16 %v1927
  %v2104 = vunpack.c.l.b16 %v1928
  %v2105 = vunpack.c.l.b16 %v1929
  %v2106 = vunpack.c.l.b16 %v1930
  %v2107 = vunpack.c.l.b16 %v1931
  %v2108 = vunpack.c.l.b16 %v1932
  %v2109 = vunpack.c.l.b16 %v1933
  %v2110 = vunpack.c.l.b16 %v1934
  %v2111 = vunpack.c.l.b16 %v1935
  %v2112 = vunpack.c.l.b16 %v1936
  %v2113 = vunpack.c.l.b16 %v1937
  %v2114 = vunpack.c.l.b16 %v1938
  %v2115 = vunpack.c.l.b16 %v1939
  %v2116 = vunpack.c.l.b16 %v1940
  %v2117 = vunpack.c.l.b16 %v1941
  %v2118 = vunpack.c.l.b16 %v1942
  %v2119 = vunpack.c.l.b16 %v1943
  %v2120 = vunpack.c.l.b16 %v1944
  %v2121 = vunpack.c.l.b16 %v1945
  %v2122 = vunpack.c.l.b16 %v1946
  %v2123 = vunpack.c.l.b16 %v1947
  %v2124 = vunpack.c.l.b16 %v1948
  %v2125 = vunpack.c.l.b16 %v1949
  %v2126 = vunpack.c.l.b16 %v1950
  %v2127 = vunpack.c.l.b16 %v1951
  %v2128 = vunpack.c.l.b16 %v1952
  %v2129 = vunpack.c.l.b16 %v1953
  %v2130 = vunpack.c.l.b16 %v1954
  %v2131 = vunpack.c.l.b16 %v1955
  %v2132 = vunpack.c.l.b16 %v1956
  %v2133 = vunpack.c.l.b16 %v1957
  %v2134 = vunpack.c.l.b16 %v1958
  %v2135 = vunpack.c.l.b16 %v1959
  %v2136 = vunpack.c.l.b16 %v1960
  %v2137 = vunpack.c.l.b16 %v1961
  %v2138 = vunpack.c.l.b16 %v1962
  %v2139 = vunpack.c.l.b16 %v1963
  %v2140 = vunpack.c.l.b16 %v1964
  %v2141 = vunpack.c.l.b16 %v1965
  %v2142 = vunpack.c.l.b16 %v1966
  %v2143 = vunpack.c.l.b16 %v1967
  %v2144 = vunpack.c.l.b16 %v1968
  %v2145 = vunpack.c.l.b16 %v1969
  %v2146 = vunpack.c.l.b16 %v1970
  %v2147 = vunpack.c.l.b16 %v1971
  %v2148 = vunpack.c.l.b16 %v1972
  %v2149 = vunpack.c.l.b16 %v1973
  %v2150 = vunpack.c.l.b16 %v1974
  %v2151 = vunpack.c.l.b16 %v1975
  %v2152 = vunpack.c.l.b16 %v1976
  %v2153 = vunpack.c.l.b16 %v1977
  %v2154 = vunpack.c.l.b16 %v1978
  %v2155 = vunpack.c.l.b16 %v1979
  %v2156 = vunpack.c.l.b16 %v1980
  %v2157 = vpack.c.b16 %v2086, %v2085
  %v2158 = vpack.c.b16 %v2088, %v2087
  %v2159 = vpack.c.b16 %v2090, %v2089
  %v2160 = vpack.c.b16 %v2092, %v2091
  %v2161 = vpack.c.b16 %v2094, %v2093
  %v2162 = vpack.c.b16 %v2096, %v2095
  %v2163 = vpack.c.b16 %v2098, %v2097
  %v2164 = vpack.c.b16 %v2100, %v2099
  %v2165 = vpack.c.b16 %v2102, %v2101
  %v2166 = vpack.c.b16 %v2104, %v2103
  %v2167 = vpack.c.b16 %v2106, %v2105
  %v2168 = vpack.c.b16 %v2108, %v2107
  %v2169 = vpack.c.b16 %v2110, %v2109
  %v2170 = vpack.c.b16 %v2112, %v2111
  %v2171 = vpack.c.b16 %v2114, %v2113
  %v2172 = vpack.c.b16 %v2116, %v2115
  %v2173 = vpack.c.b16 %v2118, %v2117
  %v2174 = vpack.c.b16 %v2120, %v2119
  %v2175 = vpack.c.b16 %v2122, %v2121
  %v2176 = vpack.c.b16 %v2124, %v2123
  %v2177 = vpack.c.b16 %v2126, %v2125
  %v2178 = vpack.c.b16 %v2128, %v2127
  %v2179 = vpack.c.b16 %v2130, %v2129
  %v2180 = vpack.c.b16 %v2132, %v2131
  %v2181 = vpack.c.b16 %v2134, %v2133
  %v2182 = vpack.c.b16 %v2136, %v2135
  %v2183 = vpack.c.b16 %v2138, %v2137
  %v2184 = vpack.c.b16 %v2140, %v2139
  %v2185 = vpack.c.b16 %v2142, %v2141
  %v2186 = vpack.c.b16 %v2144, %v2143
  %v2187 = vpack.c.b16 %v2146, %v2145
  %v2188 = vpack.c.b16 %v2148, %v2147
  %v2189 = vpack.c.b16 %v2150, %v2149
  %v2190 = vpack.c.b16 %v2152, %v2151
  %v2191 = vpack.c.b16 %v2154, %v2153
  %v2192 = vpack.c.b16 %v2156, %v2155
  %v2230 = vsel %vm523, %v2006, 0
  %2232 = vmatprep.subr.bf16.mxu0 0
  %2233 = vmatpush1.bf16.msra.mxu0 %v2164
  %2234 = vmatprep.subr.bf16.mxu0 0
  %2235 = vmatpush1.bf16.msra.mxu0 %v2163
  %2236 = vmatprep.subr.bf16.mxu0 0
  %2237 = vmatpush1.bf16.msra.mxu0 %v2162
  %2238 = vmatprep.subr.bf16.mxu0 0
  %2239 = vmatpush1.bf16.msra.mxu0 %v2161
  %2240 = vmatprep.subr.bf16.mxu0 0
  %2241 = vmatpush1.bf16.msra.mxu0 %v2160
  %2242 = vmatprep.subr.bf16.mxu0 0
  %2243 = vmatpush1.bf16.msra.mxu0 %v2159
  %2244 = vmatprep.subr.bf16.mxu0 0
  %2245 = vmatpush1.bf16.msra.mxu0 %v2158
  %2246 = vmatprep.subr.bf16.mxu0 0
  %2247 = vmatpush1.bf16.msra.mxu0 %v2157
  %2248 = vmatprep.subr.bf16.mxu0 0
  %2249 = vmatpush2.bf16.msra.mxu0 %v2172
  %2250 = vmatprep.subr.bf16.mxu0 0
  %2251 = vmatpush2.bf16.msra.mxu0 %v2171
  %2252 = vmatprep.subr.bf16.mxu0 0
  %2253 = vmatpush2.bf16.msra.mxu0 %v2170
  %2254 = vmatprep.subr.bf16.mxu0 0
  %2255 = vmatpush2.bf16.msra.mxu0 %v2169
  %2256 = vmatprep.subr.bf16.mxu0 0
  %2257 = vmatpush2.bf16.msra.mxu0 %v2168
  %2258 = vmatprep.subr.bf16.mxu0 0
  %2259 = vmatpush2.bf16.msra.mxu0 %v2167
  %2260 = vmatprep.subr.bf16.mxu0 0
  %2261 = vmatpush2.bf16.msra.mxu0 %v2166
  %2262 = vmatprep.subr.bf16.mxu0 0
  %2263 = vmatpush2.bf16.msra.mxu0 %v2165
  %2264 = vmatprep.mubr.bf16.mxu0 %v2003
  %2265 = vmatmul.mubr.bf16.gmra.mxu0 %v2002
  %v2266 = vpop.f32.mrf.mxu0
  %v2267 = vadd.f32 %v2011, %v2266
  %v2268 = vpop.f32.mrf.mxu0
  %v2269 = vpop.f32.mrf.mxu0
  %v2270 = vpop.f32.mrf.mxu0
  %2271 = vdwg.mxu0
  %2272 = vmatprep.subr.bf16.mxu0 0
  %2273 = vmatpush1.bf16.msra.mxu0 %v2180
  %2274 = vmatprep.subr.bf16.mxu0 0
  %2275 = vmatpush1.bf16.msra.mxu0 %v2179
  %2276 = vmatprep.subr.bf16.mxu0 0
  %2277 = vmatpush1.bf16.msra.mxu0 %v2178
  %2278 = vmatprep.subr.bf16.mxu0 0
  %2279 = vmatpush1.bf16.msra.mxu0 %v2177
  %2280 = vmatprep.subr.bf16.mxu0 0
  %2281 = vmatpush1.bf16.msra.mxu0 %v2176
  %2282 = vmatprep.subr.bf16.mxu0 0
  %2283 = vmatpush1.bf16.msra.mxu0 %v2175
  %2284 = vmatprep.subr.bf16.mxu0 0
  %2285 = vmatpush1.bf16.msra.mxu0 %v2174
  %2286 = vmatprep.subr.bf16.mxu0 0
  %2287 = vmatpush1.bf16.msra.mxu0 %v2173
  %2288 = vmatprep.subr.bf16.mxu0 0
  %2289 = vmatpush2.bf16.msra.mxu0 %v2188
  %2290 = vmatprep.subr.bf16.mxu0 0
  %2291 = vmatpush2.bf16.msra.mxu0 %v2187
  %2292 = vmatprep.subr.bf16.mxu0 0
  %2293 = vmatpush2.bf16.msra.mxu0 %v2186
  %2294 = vmatprep.subr.bf16.mxu0 0
  %2295 = vmatpush2.bf16.msra.mxu0 %v2185
  %2296 = vmatprep.subr.bf16.mxu0 0
  %2297 = vmatpush2.bf16.msra.mxu0 %v2184
  %2298 = vmatprep.subr.bf16.mxu0 0
  %2299 = vmatpush2.bf16.msra.mxu0 %v2183
  %2300 = vmatprep.subr.bf16.mxu0 0
  %2301 = vmatpush2.bf16.msra.mxu0 %v2182
  %2302 = vmatprep.subr.bf16.mxu0 0
  %2303 = vmatpush2.bf16.msra.mxu0 %v2181
  %2304 = vmatprep.mubr.bf16.mxu0 %v2005
  %2305 = vmatmul.mubr.bf16.gmra.mxu0 %v2004
  %v2306 = vpop.f32.mrf.mxu0
  %v2307 = vadd.f32 %v2267, %v2306
  %v2308 = vpop.f32.mrf.mxu0
  %v2309 = vpop.f32.mrf.mxu0
  %v2310 = vpop.f32.mrf.mxu0
  %2311 = vdwg.mxu0
  %2312 = vmatprep.subr.bf16.mxu0 0
  %2313 = vmatpush1.bf16.msra.mxu0 0
  %2314 = vmatprep.subr.bf16.mxu0 0
  %2315 = vmatpush1.bf16.msra.mxu0 0
  %2316 = vmatprep.subr.bf16.mxu0 0
  %2317 = vmatpush1.bf16.msra.mxu0 0
  %2318 = vmatprep.subr.bf16.mxu0 0
  %2319 = vmatpush1.bf16.msra.mxu0 0
  %2320 = vmatprep.subr.bf16.mxu0 0
  %2321 = vmatpush1.bf16.msra.mxu0 %v2192
  %2322 = vmatprep.subr.bf16.mxu0 0
  %2323 = vmatpush1.bf16.msra.mxu0 %v2191
  %2324 = vmatprep.subr.bf16.mxu0 0
  %2325 = vmatpush1.bf16.msra.mxu0 %v2190
  %2326 = vmatprep.subr.bf16.mxu0 0
  %2327 = vmatpush1.bf16.msra.mxu0 %v2189
  %2328 = vmatprep.subr.bf16.mxu0 0
  %2329 = vmatpush2.bf16.msra.mxu0 0
  %2330 = vmatprep.subr.bf16.mxu0 0
  %2331 = vmatpush2.bf16.msra.mxu0 0
  %2332 = vmatprep.subr.bf16.mxu0 0
  %2333 = vmatpush2.bf16.msra.mxu0 0
  %2334 = vmatprep.subr.bf16.mxu0 0
  %2335 = vmatpush2.bf16.msra.mxu0 0
  %2336 = vmatprep.subr.bf16.mxu0 0
  %2337 = vmatpush2.bf16.msra.mxu0 0
  %2338 = vmatprep.subr.bf16.mxu0 0
  %2339 = vmatpush2.bf16.msra.mxu0 0
  %2340 = vmatprep.subr.bf16.mxu0 0
  %2341 = vmatpush2.bf16.msra.mxu0 0
  %2342 = vmatprep.subr.bf16.mxu0 0
  %2343 = vmatpush2.bf16.msra.mxu0 0
  %2344 = vmatprep.mubr.bf16.mxu0 0
  %2345 = vmatmul.mubr.bf16.gmra.mxu0 %v2230
  %v2346 = vpop.f32.mrf.mxu0
  %v2347 = vadd.f32 %v2307, %v2346
  %v2348 = vpop.f32.mrf.mxu0
  %v2349 = vpop.f32.mrf.mxu0
  %v2350 = vpop.f32.mrf.mxu0
  %2351 = vdwg.mxu0
  %v2352 = vmax.f32 %v2347, 0.0
  %v2353 = vld [vmem:[%s7] sm:$0xff]
  %v2354 = vld [vmem:[%s7 + $0x8] sm:$0xff]
  %v2355 = vld [vmem:[%s7 + $0x10] sm:$0xff]
  %v2356 = vld [vmem:[%s7 + $0x18] sm:$0xff]
  %v2357 = vld [vmem:[%s7 + $0x20] sm:$0xff]
  %v2358 = vld [vmem:[%s7 + $0x28] sm:$0xff]
  %v2359 = vld [vmem:[%s7 + $0x30] sm:$0xff]
  %v2360 = vld [vmem:[%s7 + $0x38] sm:$0xff]
  %v2361 = vpack.c.bf16 %v2352, %v2352
  %v2362 = vld [vmem:[%s8] sm:$0xf]
  %v2364 = vlaneseq
  %v2365 = vshrl.u32 %v2364, 7
  %v2366 = vsub.s32 0, %v2365
  %v2367 = vrot.slane %v2362, %v2366
  %v2368 = vlaneseq
  %v2369 = vshrl.u32 %v2368, 7
  %v2370 = vsub.s32 1, %v2369
  %v2371 = vrot.slane %v2362, %v2370
  %v2372 = vlaneseq
  %v2373 = vshrl.u32 %v2372, 7
  %v2374 = vsub.s32 2, %v2373
  %v2375 = vrot.slane %v2362, %v2374
  %v2376 = vlaneseq
  %v2377 = vshrl.u32 %v2376, 7
  %v2378 = vsub.s32 3, %v2377
  %v2379 = vrot.slane %v2362, %v2378
  %v2392 = vunpack.c.l.b16 %v2353
  %v2393 = vunpack.c.h.b16 %v2353
  %v2394 = vunpack.c.l.b16 %v2354
  %v2395 = vunpack.c.h.b16 %v2354
  %v2396 = vunpack.c.l.b16 %v2355
  %v2397 = vunpack.c.h.b16 %v2355
  %v2398 = vunpack.c.l.b16 %v2356
  %v2399 = vunpack.c.h.b16 %v2356
  %v2400 = vunpack.c.l.b16 %v2357
  %v2401 = vunpack.c.h.b16 %v2357
  %v2402 = vunpack.c.l.b16 %v2358
  %v2403 = vunpack.c.h.b16 %v2358
  %v2404 = vunpack.c.l.b16 %v2359
  %v2405 = vunpack.c.h.b16 %v2359
  %v2406 = vunpack.c.l.b16 %v2360
  %v2407 = vunpack.c.h.b16 %v2360
  %v2408 = vpack.c.b16 %v2396, %v2392
  %v2409 = vpack.c.b16 %v2397, %v2393
  %v2410 = vpack.c.b16 %v2398, %v2394
  %v2411 = vpack.c.b16 %v2399, %v2395
  %v2412 = vpack.c.b16 %v2404, %v2400
  %v2413 = vpack.c.b16 %v2405, %v2401
  %v2414 = vpack.c.b16 %v2406, %v2402
  %v2415 = vpack.c.b16 %v2407, %v2403
  %v2425 = vsel %vm521, %v2361, 0
  %2427 = vmatprep.subr.bf16.mxu0 0
  %2428 = vmatpush1.bf16.msra.mxu0 0
  %2429 = vmatprep.subr.bf16.mxu0 0
  %2430 = vmatpush1.bf16.msra.mxu0 0
  %2431 = vmatprep.subr.bf16.mxu0 0
  %2432 = vmatpush1.bf16.msra.mxu0 0
  %2433 = vmatprep.subr.bf16.mxu0 0
  %2434 = vmatpush1.bf16.msra.mxu0 0
  %2435 = vmatprep.subr.bf16.mxu0 0
  %2436 = vmatpush1.bf16.msra.mxu0 0
  %2437 = vmatprep.subr.bf16.mxu0 0
  %2438 = vmatpush1.bf16.msra.mxu0 0
  %2439 = vmatprep.subr.bf16.mxu0 %v2413
  %2440 = vmatpush1.bf16.msra.mxu0 %v2412
  %2441 = vmatprep.subr.bf16.mxu0 %v2409
  %2442 = vmatpush1.bf16.msra.mxu0 %v2408
  %2443 = vmatprep.subr.bf16.mxu0 0
  %2444 = vmatpush2.bf16.msra.mxu0 0
  %2445 = vmatprep.subr.bf16.mxu0 0
  %2446 = vmatpush2.bf16.msra.mxu0 0
  %2447 = vmatprep.subr.bf16.mxu0 0
  %2448 = vmatpush2.bf16.msra.mxu0 0
  %2449 = vmatprep.subr.bf16.mxu0 0
  %2450 = vmatpush2.bf16.msra.mxu0 0
  %2451 = vmatprep.subr.bf16.mxu0 0
  %2452 = vmatpush2.bf16.msra.mxu0 0
  %2453 = vmatprep.subr.bf16.mxu0 0
  %2454 = vmatpush2.bf16.msra.mxu0 0
  %2455 = vmatprep.subr.bf16.mxu0 0
  %2456 = vmatpush2.bf16.msra.mxu0 0
  %2457 = vmatprep.subr.bf16.mxu0 0
  %2458 = vmatpush2.bf16.msra.mxu0 0
  %2459 = vmatprep.mubr.bf16.mxu0 0
  %2460 = vmatmul.mubr.bf16.gmra.mxu0 %v2425
  %v2461 = vpop.f32.mrf.mxu0
  %v2462 = vadd.f32 %v2367, %v2461
  %v2463 = vpop.f32.mrf.mxu0
  %v2464 = vadd.f32 %v2371, %v2463
  %v2465 = vpop.f32.mrf.mxu0
  %v2466 = vpop.f32.mrf.mxu0
  %2467 = vdwg.mxu0
  %2468 = vmatprep.subr.bf16.mxu0 0
  %2469 = vmatpush1.bf16.msra.mxu0 0
  %2470 = vmatprep.subr.bf16.mxu0 0
  %2471 = vmatpush1.bf16.msra.mxu0 0
  %2472 = vmatprep.subr.bf16.mxu0 0
  %2473 = vmatpush1.bf16.msra.mxu0 0
  %2474 = vmatprep.subr.bf16.mxu0 0
  %2475 = vmatpush1.bf16.msra.mxu0 0
  %2476 = vmatprep.subr.bf16.mxu0 0
  %2477 = vmatpush1.bf16.msra.mxu0 0
  %2478 = vmatprep.subr.bf16.mxu0 0
  %2479 = vmatpush1.bf16.msra.mxu0 0
  %2480 = vmatprep.subr.bf16.mxu0 %v2415
  %2481 = vmatpush1.bf16.msra.mxu0 %v2414
  %2482 = vmatprep.subr.bf16.mxu0 %v2411
  %2483 = vmatpush1.bf16.msra.mxu0 %v2410
  %2484 = vmatprep.subr.bf16.mxu0 0
  %2485 = vmatpush2.bf16.msra.mxu0 0
  %2486 = vmatprep.subr.bf16.mxu0 0
  %2487 = vmatpush2.bf16.msra.mxu0 0
  %2488 = vmatprep.subr.bf16.mxu0 0
  %2489 = vmatpush2.bf16.msra.mxu0 0
  %2490 = vmatprep.subr.bf16.mxu0 0
  %2491 = vmatpush2.bf16.msra.mxu0 0
  %2492 = vmatprep.subr.bf16.mxu0 0
  %2493 = vmatpush2.bf16.msra.mxu0 0
  %2494 = vmatprep.subr.bf16.mxu0 0
  %2495 = vmatpush2.bf16.msra.mxu0 0
  %2496 = vmatprep.subr.bf16.mxu0 0
  %2497 = vmatpush2.bf16.msra.mxu0 0
  %2498 = vmatprep.subr.bf16.mxu0 0
  %2499 = vmatpush2.bf16.msra.mxu0 0
  %2500 = vmatprep.mubr.bf16.mxu0 0
  %2501 = vmatmul.mubr.bf16.gmra.mxu0 %v2425
  %v2502 = vpop.f32.mrf.mxu0
  %v2503 = vadd.f32 %v2375, %v2502
  %v2504 = vpop.f32.mrf.mxu0
  %v2505 = vadd.f32 %v2379, %v2504
  %v2506 = vpop.f32.mrf.mxu0
  %v2507 = vpop.f32.mrf.mxu0
  %2508 = vdwg.mxu0
  %v2509 = vmax.f32 %v2462, 0.0
  %v2510 = vmax.f32 %v2464, 0.0
  %v2511 = vmax.f32 %v2503, 0.0
  %v2512 = vmax.f32 %v2505, 0.0
  %v2513 = vld [vmem:[%s9] sm:$0xf]
  %v2514 = vld [vmem:[%s9 + $0x4] sm:$0xf]
  %v2515 = vld [vmem:[%s9 + $0x8] sm:$0xf]
  %v2516 = vld [vmem:[%s9 + $0xc] sm:$0xf]
  %v2517 = vld [vmem:[%s9 + $0x10] sm:$0xf]
  %v2518 = vld [vmem:[%s9 + $0x14] sm:$0xf]
  %v2519 = vld [vmem:[%s9 + $0x18] sm:$0xf]
  %v2520 = vld [vmem:[%s9 + $0x1c] sm:$0xf]
  %v2521 = vld [vmem:[%s9 + $0x20] sm:$0xf]
  %v2522 = vld [vmem:[%s9 + $0x24] sm:$0xf]
  %v2523 = vld [vmem:[%s9 + $0x28] sm:$0xf]
  %v2524 = vld [vmem:[%s9 + $0x2c] sm:$0xf]
  %v2525 = vld [vmem:[%s9 + $0x30] sm:$0xf]
  %v2526 = vld [vmem:[%s9 + $0x34] sm:$0xf]
  %v2527 = vld [vmem:[%s9 + $0x38] sm:$0xf]
  %v2528 = vld [vmem:[%s9 + $0x3c] sm:$0xf]
  %v2529 = vld [vmem:[%s9 + $0x40] sm:$0xf]
  %v2530 = vld [vmem:[%s9 + $0x44] sm:$0xf]
  %v2531 = vld [vmem:[%s9 + $0x48] sm:$0xf]
  %v2532 = vld [vmem:[%s9 + $0x4c] sm:$0xf]
  %v2533 = vld [vmem:[%s9 + $0x50] sm:$0xf]
  %v2534 = vld [vmem:[%s9 + $0x54] sm:$0xf]
  %v2535 = vld [vmem:[%s9 + $0x58] sm:$0xf]
  %v2536 = vld [vmem:[%s9 + $0x5c] sm:$0xf]
  %v2537 = vld [vmem:[%s9 + $0x60] sm:$0xf]
  %v2538 = vld [vmem:[%s9 + $0x64] sm:$0xf]
  %v2539 = vld [vmem:[%s9 + $0x68] sm:$0xf]
  %v2540 = vld [vmem:[%s9 + $0x6c] sm:$0xf]
  %v2541 = vld [vmem:[%s9 + $0x70] sm:$0xf]
  %v2542 = vld [vmem:[%s9 + $0x74] sm:$0xf]
  %v2543 = vld [vmem:[%s9 + $0x78] sm:$0xf]
  %v2544 = vld [vmem:[%s9 + $0x7c] sm:$0xf]
  %v2545 = vld [vmem:[%s9 + $0x80] sm:$0xf]
  %v2546 = vld [vmem:[%s9 + $0x84] sm:$0xf]
  %v2547 = vld [vmem:[%s9 + $0x88] sm:$0xf]
  %v2548 = vld [vmem:[%s9 + $0x8c] sm:$0xf]
  %v2549 = vld [vmem:[%s9 + $0x90] sm:$0xf]
  %v2550 = vld [vmem:[%s9 + $0x94] sm:$0xf]
  %v2551 = vld [vmem:[%s9 + $0x98] sm:$0xf]
  %v2552 = vld [vmem:[%s9 + $0x9c] sm:$0xf]
  %v2553 = vld [vmem:[%s9 + $0xa0] sm:$0xf]
  %v2554 = vld [vmem:[%s9 + $0xa4] sm:$0xf]
  %v2555 = vld [vmem:[%s9 + $0xa8] sm:$0xf]
  %v2556 = vld [vmem:[%s9 + $0xac] sm:$0xf]
  %v2557 = vld [vmem:[%s9 + $0xb0] sm:$0xf]
  %v2558 = vld [vmem:[%s9 + $0xb4] sm:$0xf]
  %v2559 = vld [vmem:[%s9 + $0xb8] sm:$0xf]
  %v2560 = vld [vmem:[%s9 + $0xbc] sm:$0xf]
  %v2561 = vld [vmem:[%s9 + $0xc0] sm:$0xf]
  %v2562 = vld [vmem:[%s9 + $0xc4] sm:$0xf]
  %v2563 = vld [vmem:[%s9 + $0xc8] sm:$0xf]
  %v2564 = vld [vmem:[%s9 + $0xcc] sm:$0xf]
  %v2565 = vld [vmem:[%s9 + $0xd0] sm:$0xf]
  %v2566 = vld [vmem:[%s9 + $0xd4] sm:$0xf]
  %v2567 = vld [vmem:[%s9 + $0xd8] sm:$0xf]
  %v2568 = vld [vmem:[%s9 + $0xdc] sm:$0xf]
  %v2569 = vld [vmem:[%s9 + $0xe0] sm:$0xf]
  %v2570 = vld [vmem:[%s9 + $0xe4] sm:$0xf]
  %v2571 = vld [vmem:[%s9 + $0xe8] sm:$0xf]
  %v2572 = vld [vmem:[%s9 + $0xec] sm:$0xf]
  %v2573 = vld [vmem:[%s9 + $0xf0] sm:$0xf]
  %v2574 = vld [vmem:[%s9 + $0xf4] sm:$0xf]
  %v2575 = vld [vmem:[%s9 + $0xf8] sm:$0xf]
  %v2576 = vld [vmem:[%s9 + $0xfc] sm:$0xf]
  %v2577 = vpack.c.bf16 %v2509, %v2509
  %v2578 = vpack.c.bf16 %v2510, %v2510
  %v2579 = vpack.c.bf16 %v2511, %v2511
  %v2580 = vpack.c.bf16 %v2512, %v2512
  %v2581 = vld [vmem:[%s10] sm:$0x1]
  %v2583 = vlaneseq
  %v2584 = vshrl.u32 %v2583, 7
  %v2585 = vsub.s32 0, %v2584
  %v2586 = vrot.slane %v2581, %v2585
  %v2652 = vunpack.c.l.b16 %v2513
  %v2653 = vunpack.c.l.b16 %v2514
  %v2654 = vunpack.c.l.b16 %v2515
  %v2655 = vunpack.c.l.b16 %v2516
  %v2656 = vunpack.c.l.b16 %v2517
  %v2657 = vunpack.c.l.b16 %v2518
  %v2658 = vunpack.c.l.b16 %v2519
  %v2659 = vunpack.c.l.b16 %v2520
  %v2660 = vunpack.c.l.b16 %v2521
  %v2661 = vunpack.c.l.b16 %v2522
  %v2662 = vunpack.c.l.b16 %v2523
  %v2663 = vunpack.c.l.b16 %v2524
  %v2664 = vunpack.c.l.b16 %v2525
  %v2665 = vunpack.c.l.b16 %v2526
  %v2666 = vunpack.c.l.b16 %v2527
  %v2667 = vunpack.c.l.b16 %v2528
  %v2668 = vunpack.c.l.b16 %v2529
  %v2669 = vunpack.c.l.b16 %v2530
  %v2670 = vunpack.c.l.b16 %v2531
  %v2671 = vunpack.c.l.b16 %v2532
  %v2672 = vunpack.c.l.b16 %v2533
  %v2673 = vunpack.c.l.b16 %v2534
  %v2674 = vunpack.c.l.b16 %v2535
  %v2675 = vunpack.c.l.b16 %v2536
  %v2676 = vunpack.c.l.b16 %v2537
  %v2677 = vunpack.c.l.b16 %v2538
  %v2678 = vunpack.c.l.b16 %v2539
  %v2679 = vunpack.c.l.b16 %v2540
  %v2680 = vunpack.c.l.b16 %v2541
  %v2681 = vunpack.c.l.b16 %v2542
  %v2682 = vunpack.c.l.b16 %v2543
  %v2683 = vunpack.c.l.b16 %v2544
  %v2684 = vunpack.c.l.b16 %v2545
  %v2685 = vunpack.c.l.b16 %v2546
  %v2686 = vunpack.c.l.b16 %v2547
  %v2687 = vunpack.c.l.b16 %v2548
  %v2688 = vunpack.c.l.b16 %v2549
  %v2689 = vunpack.c.l.b16 %v2550
  %v2690 = vunpack.c.l.b16 %v2551
  %v2691 = vunpack.c.l.b16 %v2552
  %v2692 = vunpack.c.l.b16 %v2553
  %v2693 = vunpack.c.l.b16 %v2554
  %v2694 = vunpack.c.l.b16 %v2555
  %v2695 = vunpack.c.l.b16 %v2556
  %v2696 = vunpack.c.l.b16 %v2557
  %v2697 = vunpack.c.l.b16 %v2558
  %v2698 = vunpack.c.l.b16 %v2559
  %v2699 = vunpack.c.l.b16 %v2560
  %v2700 = vunpack.c.l.b16 %v2561
  %v2701 = vunpack.c.l.b16 %v2562
  %v2702 = vunpack.c.l.b16 %v2563
  %v2703 = vunpack.c.l.b16 %v2564
  %v2704 = vunpack.c.l.b16 %v2565
  %v2705 = vunpack.c.l.b16 %v2566
  %v2706 = vunpack.c.l.b16 %v2567
  %v2707 = vunpack.c.l.b16 %v2568
  %v2708 = vunpack.c.l.b16 %v2569
  %v2709 = vunpack.c.l.b16 %v2570
  %v2710 = vunpack.c.l.b16 %v2571
  %v2711 = vunpack.c.l.b16 %v2572
  %v2712 = vunpack.c.l.b16 %v2573
  %v2713 = vunpack.c.l.b16 %v2574
  %v2714 = vunpack.c.l.b16 %v2575
  %v2715 = vunpack.c.l.b16 %v2576
  %v2716 = vpack.c.b16 %v2653, %v2652
  %v2717 = vpack.c.b16 %v2655, %v2654
  %v2718 = vpack.c.b16 %v2657, %v2656
  %v2719 = vpack.c.b16 %v2659, %v2658
  %v2720 = vpack.c.b16 %v2661, %v2660
  %v2721 = vpack.c.b16 %v2663, %v2662
  %v2722 = vpack.c.b16 %v2665, %v2664
  %v2723 = vpack.c.b16 %v2667, %v2666
  %v2724 = vpack.c.b16 %v2669, %v2668
  %v2725 = vpack.c.b16 %v2671, %v2670
  %v2726 = vpack.c.b16 %v2673, %v2672
  %v2727 = vpack.c.b16 %v2675, %v2674
  %v2728 = vpack.c.b16 %v2677, %v2676
  %v2729 = vpack.c.b16 %v2679, %v2678
  %v2730 = vpack.c.b16 %v2681, %v2680
  %v2731 = vpack.c.b16 %v2683, %v2682
  %v2732 = vpack.c.b16 %v2685, %v2684
  %v2733 = vpack.c.b16 %v2687, %v2686
  %v2734 = vpack.c.b16 %v2689, %v2688
  %v2735 = vpack.c.b16 %v2691, %v2690
  %v2736 = vpack.c.b16 %v2693, %v2692
  %v2737 = vpack.c.b16 %v2695, %v2694
  %v2738 = vpack.c.b16 %v2697, %v2696
  %v2739 = vpack.c.b16 %v2699, %v2698
  %v2740 = vpack.c.b16 %v2701, %v2700
  %v2741 = vpack.c.b16 %v2703, %v2702
  %v2742 = vpack.c.b16 %v2705, %v2704
  %v2743 = vpack.c.b16 %v2707, %v2706
  %v2744 = vpack.c.b16 %v2709, %v2708
  %v2745 = vpack.c.b16 %v2711, %v2710
  %v2746 = vpack.c.b16 %v2713, %v2712
  %v2747 = vpack.c.b16 %v2715, %v2714
  %2780 = vmatprep.subr.bf16.mxu0 0
  %2781 = vmatpush1.bf16.msra.mxu0 %v2723
  %2782 = vmatprep.subr.bf16.mxu0 0
  %2783 = vmatpush1.bf16.msra.mxu0 %v2722
  %2784 = vmatprep.subr.bf16.mxu0 0
  %2785 = vmatpush1.bf16.msra.mxu0 %v2721
  %2786 = vmatprep.subr.bf16.mxu0 0
  %2787 = vmatpush1.bf16.msra.mxu0 %v2720
  %2788 = vmatprep.subr.bf16.mxu0 0
  %2789 = vmatpush1.bf16.msra.mxu0 %v2719
  %2790 = vmatprep.subr.bf16.mxu0 0
  %2791 = vmatpush1.bf16.msra.mxu0 %v2718
  %2792 = vmatprep.subr.bf16.mxu0 0
  %2793 = vmatpush1.bf16.msra.mxu0 %v2717
  %2794 = vmatprep.subr.bf16.mxu0 0
  %2795 = vmatpush1.bf16.msra.mxu0 %v2716
  %2796 = vmatprep.subr.bf16.mxu0 0
  %2797 = vmatpush2.bf16.msra.mxu0 %v2731
  %2798 = vmatprep.subr.bf16.mxu0 0
  %2799 = vmatpush2.bf16.msra.mxu0 %v2730
  %2800 = vmatprep.subr.bf16.mxu0 0
  %2801 = vmatpush2.bf16.msra.mxu0 %v2729
  %2802 = vmatprep.subr.bf16.mxu0 0
  %2803 = vmatpush2.bf16.msra.mxu0 %v2728
  %2804 = vmatprep.subr.bf16.mxu0 0
  %2805 = vmatpush2.bf16.msra.mxu0 %v2727
  %2806 = vmatprep.subr.bf16.mxu0 0
  %2807 = vmatpush2.bf16.msra.mxu0 %v2726
  %2808 = vmatprep.subr.bf16.mxu0 0
  %2809 = vmatpush2.bf16.msra.mxu0 %v2725
  %2810 = vmatprep.subr.bf16.mxu0 0
  %2811 = vmatpush2.bf16.msra.mxu0 %v2724
  %2812 = vmatprep.mubr.bf16.mxu0 %v2578
  %2813 = vmatmul.mubr.bf16.gmra.mxu0 %v2577
  %v2814 = vpop.f32.mrf.mxu0
  %v2815 = vadd.f32 %v2586, %v2814
  %v2816 = vpop.f32.mrf.mxu0
  %v2817 = vpop.f32.mrf.mxu0
  %v2818 = vpop.f32.mrf.mxu0
  %2819 = vdwg.mxu0
  %2820 = vmatprep.subr.bf16.mxu0 0
  %2821 = vmatpush1.bf16.msra.mxu0 %v2739
  %2822 = vmatprep.subr.bf16.mxu0 0
  %2823 = vmatpush1.bf16.msra.mxu0 %v2738
  %2824 = vmatprep.subr.bf16.mxu0 0
  %2825 = vmatpush1.bf16.msra.mxu0 %v2737
  %2826 = vmatprep.subr.bf16.mxu0 0
  %2827 = vmatpush1.bf16.msra.mxu0 %v2736
  %2828 = vmatprep.subr.bf16.mxu0 0
  %2829 = vmatpush1.bf16.msra.mxu0 %v2735
  %2830 = vmatprep.subr.bf16.mxu0 0
  %2831 = vmatpush1.bf16.msra.mxu0 %v2734
  %2832 = vmatprep.subr.bf16.mxu0 0
  %2833 = vmatpush1.bf16.msra.mxu0 %v2733
  %2834 = vmatprep.subr.bf16.mxu0 0
  %2835 = vmatpush1.bf16.msra.mxu0 %v2732
  %2836 = vmatprep.subr.bf16.mxu0 0
  %2837 = vmatpush2.bf16.msra.mxu0 %v2747
  %2838 = vmatprep.subr.bf16.mxu0 0
  %2839 = vmatpush2.bf16.msra.mxu0 %v2746
  %2840 = vmatprep.subr.bf16.mxu0 0
  %2841 = vmatpush2.bf16.msra.mxu0 %v2745
  %2842 = vmatprep.subr.bf16.mxu0 0
  %2843 = vmatpush2.bf16.msra.mxu0 %v2744
  %2844 = vmatprep.subr.bf16.mxu0 0
  %2845 = vmatpush2.bf16.msra.mxu0 %v2743
  %2846 = vmatprep.subr.bf16.mxu0 0
  %2847 = vmatpush2.bf16.msra.mxu0 %v2742
  %2848 = vmatprep.subr.bf16.mxu0 0
  %2849 = vmatpush2.bf16.msra.mxu0 %v2741
  %2850 = vmatprep.subr.bf16.mxu0 0
  %2851 = vmatpush2.bf16.msra.mxu0 %v2740
  %2852 = vmatprep.mubr.bf16.mxu0 %v2580
  %2853 = vmatmul.mubr.bf16.gmra.mxu0 %v2579
  %v2854 = vpop.f32.mrf.mxu0
  %v2855 = vadd.f32 %v2815, %v2854
  %v2856 = vpop.f32.mrf.mxu0
  %v2857 = vpop.f32.mrf.mxu0
  %v2858 = vpop.f32.mrf.mxu0
  %2859 = vdwg.mxu0
  %2860 = vst [vmem:[%s11] sm:$0x3] %v2855
  // Predicated region
  $region46: #{atari_ppo_forward.1} parent=0 // pred_check
    _
  $region47: #{atari_ppo_forward.1} parent=0 // pred_check_branch
    %2862 = sbr.rel (0) target = $region49
  $region48: #{atari_ppo_forward.1} parent=0 // pred_region
    _
  $region49: #{atari_ppo_forward.1} parent=0 // pred_fallthru
    _
  // Predicated region
  $region50: #{atari_ppo_forward.1} parent=0 // pred_check
    _
  $region51: #{atari_ppo_forward.1} parent=0 // pred_check_branch
    %2864 = sbr.rel (0) target = $region53
  $region52: #{atari_ppo_forward.1} parent=0 // pred_region
    _
  $region53: #{atari_ppo_forward.1} parent=0 // pred_fallthru
    _

</llo_original>
